<compile_context>
chip_gen: v7x
topology: tpu7x:2x2x1
jax: 0.10.0
libtpu: 0.0.40
codegen_flags: <defaults>
</compile_context>

<pallas_src>
import functools

import numpy as np

import jax
import jax.numpy as jnp
from jax.experimental import pallas as pl
from jax.experimental.pallas import tpu as pltpu


# ----------------------------- fused kernel --------------------------------

def _lenet_kernel(x_ref, t1_ref, tb1_ref, t2_ref, tb2_ref,
                  f1_ref, fb1_ref, f2_ref, fb2_ref, f3_ref, fb3_ref,
                  out_ref,
                  p1_s, y1_s, a1_s, p2_s, y2_s, a2_s, p3_s, *, n):
    # x_ref: (n*3*32, 32)  rows = (img, cin, h), lanes = w
    # conv1 patches: rows = (img, oh) [56], cols = (kh, cin, w) [480]
    for b in range(n):
        for c in range(3):
            for i in range(5):
                src = (b * 3 + c) * 32 + i
                p1_s[b * 28:(b + 1) * 28,
                     (i * 3 + c) * 32:(i * 3 + c + 1) * 32] = x_ref[src:src + 28, :]
    y1 = jnp.dot(p1_s[...], t1_ref[...], preferred_element_type=jnp.float32)
    # y1 cols ordered (w_parity, pw, oc) -> 2*84 = 168
    y1_s[...] = jnp.maximum(y1 + tb1_ref[...], 0.0)

    # pool1 (2x2): width via the two 84-lane halves, height via row pairs.
    for b in range(n):
        for ph in range(14):
            r = b * 28 + 2 * ph
            top = jnp.maximum(y1_s[r:r + 1, 0:84], y1_s[r:r + 1, 84:168])
            bot = jnp.maximum(y1_s[r + 1:r + 2, 0:84], y1_s[r + 1:r + 2, 84:168])
            a1_s[b * 14 + ph:b * 14 + ph + 1, :] = jnp.maximum(top, bot)
    # a1_s: rows = (img, h1) [28], cols = (w1, c) [84]

    # conv2 patches: rows = (img, oh2) [20], cols = (kh, w1, c) [420]
    for b in range(n):
        for i in range(5):
            p2_s[b * 10:(b + 1) * 10,
                 i * 84:(i + 1) * 84] = a1_s[b * 14 + i:b * 14 + i + 10, :]
    y2 = jnp.dot(p2_s[...], t2_ref[...], preferred_element_type=jnp.float32)
    # y2 cols ordered (w_parity, pw2, oc2) -> 2*80 = 160
    y2_s[...] = jnp.maximum(y2 + tb2_ref[...], 0.0)

    # pool2 (2x2)
    for b in range(n):
        for ph in range(5):
            r = b * 10 + 2 * ph
            top = jnp.maximum(y2_s[r:r + 1, 0:80], y2_s[r:r + 1, 80:160])
            bot = jnp.maximum(y2_s[r + 1:r + 2, 0:80], y2_s[r + 1:r + 2, 80:160])
            a2_s[b * 5 + ph:b * 5 + ph + 1, :] = jnp.maximum(top, bot)
    # a2_s: rows = (img, h2) [2*5], cols = (w2, oc2) [80]

    # flatten to fc1 layout: p3[n, h2*80 + w2*16 + oc2]
    for b in range(n):
        for h in range(5):
            p3_s[b:b + 1, h * 80:(h + 1) * 80] = a2_s[b * 5 + h:b * 5 + h + 1, :]

    # fc stack (weights pre-transposed + zero-padded to 128 lanes)
    z = p3_s[...]
    z = jnp.maximum(
        jnp.dot(z, f1_ref[...], preferred_element_type=jnp.float32) + fb1_ref[...], 0.0)
    z = jnp.maximum(
        jnp.dot(z, f2_ref[...], preferred_element_type=jnp.float32) + fb2_ref[...], 0.0)
    out_ref[...] = (
        jnp.dot(z, f3_ref[...], preferred_element_type=jnp.float32) + fb3_ref[...])


def lenet_forward(packed, x):
    n = x.shape[0]
    x2 = x.reshape(n * 3 * 32, 32)  # pure reshape, no data movement
    kernel = functools.partial(_lenet_kernel, n=n)
    out = pl.pallas_call(
        kernel,
        out_shape=jax.ShapeDtypeStruct((n, 128), jnp.float32),
        in_specs=[pl.BlockSpec(memory_space=pltpu.MemorySpace.VMEM)] * 11,
        out_specs=pl.BlockSpec(memory_space=pltpu.MemorySpace.VMEM),
        scratch_shapes=[
            pltpu.VMEM((n * 28, 480), jnp.float32),   # conv1 patches
            pltpu.VMEM((n * 28, 168), jnp.float32),   # conv1 act (post relu)
            pltpu.VMEM((n * 14, 84), jnp.float32),    # pool1 out
            pltpu.VMEM((n * 10, 420), jnp.float32),   # conv2 patches
            pltpu.VMEM((n * 10, 160), jnp.float32),   # conv2 act (post relu)
            pltpu.VMEM((n * 5, 80), jnp.float32),     # pool2 out
            pltpu.VMEM((n, 400), jnp.float32),        # fc1 input
        ],
    )(x2, packed["t1"], packed["tb1"], packed["t2"], packed["tb2"],
      packed["f1"], packed["fb1"], packed["f2"], packed["fb2"],
      packed["f3"], packed["fb3"])
    return out[:, :10]


forward = jax.jit(lenet_forward)


# ----------------------- one-time weight packing ----------------------------

def _conv_toeplitz(w, width, row_order):
    """Pack conv weights (OC, C, 5, 5) into a (5*C*width, OW*OC) GEMM matrix.

    Rows are ordered (kh, c, w) for row_order=="icw" or (kh, w, c) for "iwc".
    Columns are ordered (width-parity, pooled-width, oc) with ow = 2*pw + par,
    so a 2x2 width-pool is a max of the two contiguous column halves.
    """
    oc_, c_, kh, kw = w.shape
    ow = width - kw + 1
    t = np.zeros((kh, c_, width, ow, oc_), np.float32)
    for i in range(kh):
        for k in range(kw):
            for o in range(ow):
                t[i, :, o + k, o, :] = w[:, :, i, k].T
    t = t.reshape(kh, c_, width, ow // 2, 2, oc_)       # (i, c, w, pw, par, oc)
    if row_order == "icw":
        t = t.transpose(0, 1, 2, 4, 3, 5)               # (i, c, w, par, pw, oc)
    else:
        t = t.transpose(0, 2, 1, 4, 3, 5)               # (i, w, c, par, pw, oc)
    return t.reshape(kh * c_ * width, ow * oc_)


def prepare_params(params):
    p = {k: np.asarray(v, np.float32) for k, v in params.items()}
    packed = {}
    packed["t1"] = jnp.asarray(_conv_toeplitz(p["conv1_w"], 32, "icw"))    # (480,168)
    packed["tb1"] = jnp.asarray(np.tile(p["conv1_b"], 28)[None, :])        # (1,168)
    packed["t2"] = jnp.asarray(_conv_toeplitz(p["conv2_w"], 14, "iwc"))    # (420,160)
    packed["tb2"] = jnp.asarray(np.tile(p["conv2_b"], 10)[None, :])        # (1,160)
    f1 = p["fc1_w"].reshape(120, 16, 5, 5).transpose(2, 3, 1, 0).reshape(400, 120)
    packed["f1"] = jnp.asarray(np.pad(f1, ((0, 0), (0, 8))))               # (400,128)
    packed["fb1"] = jnp.asarray(np.pad(p["fc1_b"], (0, 8))[None, :])       # (1,128)
    packed["f2"] = jnp.asarray(np.pad(p["fc2_w"].T, ((0, 8), (0, 44))))    # (128,128)
    packed["fb2"] = jnp.asarray(np.pad(p["fc2_b"], (0, 44))[None, :])
    packed["f3"] = jnp.asarray(np.pad(p["fc3_w"].T, ((0, 44), (0, 118))))  # (128,128)
    packed["fb3"] = jnp.asarray(np.pad(p["fc3_b"], (0, 118))[None, :])
    return packed


# ------------------------- parameters + reference ---------------------------

def init_params(key):
    """Deterministic synthetic parameters matching the module's shapes."""
    ks = jax.random.split(key, 10)

    def u(k, shape, fan_in):
        bound = 1.0 / jnp.sqrt(fan_in)
        return jax.random.uniform(k, shape, jnp.float32, -bound, bound)

    return {
        "conv1_w": u(ks[0], (6, 3, 5, 5), 3 * 5 * 5),
        "conv1_b": u(ks[1], (6,), 3 * 5 * 5),
        "conv2_w": u(ks[2], (16, 6, 5, 5), 6 * 5 * 5),
        "conv2_b": u(ks[3], (16,), 6 * 5 * 5),
        "fc1_w": u(ks[4], (120, 16 * 5 * 5), 16 * 5 * 5),
        "fc1_b": u(ks[5], (120,), 16 * 5 * 5),
        "fc2_w": u(ks[6], (84, 120), 120),
        "fc2_b": u(ks[7], (84,), 120),
        "fc3_w": u(ks[8], (10, 84), 84),
        "fc3_b": u(ks[9], (10,), 84),
    }


def reference_forward(params, x):
    hi = jax.lax.Precision.HIGHEST

    def conv(h, w, b):
        y = jax.lax.conv_general_dilated(
            h, w, window_strides=(1, 1), padding="VALID",
            dimension_numbers=("NCHW", "OIHW", "NCHW"), precision=hi)
        return y + b[None, :, None, None]

    def pool(h):
        return jax.lax.reduce_window(h, -jnp.inf, jax.lax.max,
                                     (1, 1, 2, 2), (1, 1, 2, 2), "VALID")

    h = pool(jax.nn.relu(conv(x, params["conv1_w"], params["conv1_b"])))
    h = pool(jax.nn.relu(conv(h, params["conv2_w"], params["conv2_b"])))
    h = h.reshape(h.shape[0], -1)
    h = jax.nn.relu(jnp.dot(h, params["fc1_w"].T, precision=hi) + params["fc1_b"])
    h = jax.nn.relu(jnp.dot(h, params["fc2_w"].T, precision=hi) + params["fc2_b"])
    return jnp.dot(h, params["fc3_w"].T, precision=hi) + params["fc3_b"]


if __name__ == "__main__":
    key = jax.random.PRNGKey(0)
    pkey, xkey = jax.random.split(key)
    params = init_params(pkey)
    packed = prepare_params(params)

    # view(-1, 16*5*5) in the original forward implies 32x32 spatial input.
    x = jax.random.normal(xkey, (2, 3, 32, 32), dtype=jnp.float32)

    out = forward(packed, x)
    out = jax.block_until_ready(out)
    assert out.shape == (2, 10) and out.dtype == jnp.float32

    ref = reference_forward(params, x)
    err = float(jnp.max(jnp.abs(out - ref)))
    assert err < 2e-2, f"mismatch vs reference: max abs err {err}"

    print("KERNEL_OK")
</pallas_src>

<mosaic_0001>
module attributes {stable_mosaic.version = 11 : i64} {
  func.func @_lenet_kernel(%arg0: memref<192x32xf32, #tpu.memory_space<vmem>>, %arg1: memref<480x168xf32, #tpu.memory_space<vmem>>, %arg2: memref<1x168xf32, #tpu.memory_space<vmem>>, %arg3: memref<420x160xf32, #tpu.memory_space<vmem>>, %arg4: memref<1x160xf32, #tpu.memory_space<vmem>>, %arg5: memref<400x128xf32, #tpu.memory_space<vmem>>, %arg6: memref<1x128xf32, #tpu.memory_space<vmem>>, %arg7: memref<128x128xf32, #tpu.memory_space<vmem>>, %arg8: memref<1x128xf32, #tpu.memory_space<vmem>>, %arg9: memref<128x128xf32, #tpu.memory_space<vmem>>, %arg10: memref<1x128xf32, #tpu.memory_space<vmem>>, %arg11: memref<2x128xf32, #tpu.memory_space<vmem>>, %arg12: memref<56x480xf32, #tpu.memory_space<vmem>>, %arg13: memref<56x168xf32, #tpu.memory_space<vmem>>, %arg14: memref<28x84xf32, #tpu.memory_space<vmem>>, %arg15: memref<20x420xf32, #tpu.memory_space<vmem>>, %arg16: memref<20x160xf32, #tpu.memory_space<vmem>>, %arg17: memref<10x80xf32, #tpu.memory_space<vmem>>, %arg18: memref<2x400xf32, #tpu.memory_space<vmem>>) attributes {dimension_semantics = [], scalar_prefetch = 0 : i64, scratch_operands = 7 : i64, tpu.core_type = #tpu.core_type<tc>} {
    %c0 = arith.constant 0 : index
    %c0_0 = arith.constant 0 : index
    %0 = vector.load %arg0[%c0, %c0_0] : memref<192x32xf32, #tpu.memory_space<vmem>>, vector<28x32xf32>
    %c0_1 = arith.constant 0 : index
    %c0_2 = arith.constant 0 : index
    %1 = vector.load %arg12[%c0_1, %c0_2] : memref<56x480xf32, #tpu.memory_space<vmem>>, vector<28x32xf32>
    tpu.vector_store %arg12[%c0_1, %c0_2], %0 {strides = array<i32>} : memref<56x480xf32, #tpu.memory_space<vmem>>, vector<28x32xf32>,
    %c1 = arith.constant 1 : index
    %c0_3 = arith.constant 0 : index
    %2 = vector.load %arg0[%c1, %c0_3] : memref<192x32xf32, #tpu.memory_space<vmem>>, vector<28x32xf32>
    %c0_4 = arith.constant 0 : index
    %c96 = arith.constant 96 : index
    %3 = vector.load %arg12[%c0_4, %c96] : memref<56x480xf32, #tpu.memory_space<vmem>>, vector<28x32xf32>
    tpu.vector_store %arg12[%c0_4, %c96], %2 {strides = array<i32>} : memref<56x480xf32, #tpu.memory_space<vmem>>, vector<28x32xf32>,
    %c2 = arith.constant 2 : index
    %c0_5 = arith.constant 0 : index
    %4 = vector.load %arg0[%c2, %c0_5] : memref<192x32xf32, #tpu.memory_space<vmem>>, vector<28x32xf32>
    %c0_6 = arith.constant 0 : index
    %c192 = arith.constant 192 : index
    %5 = vector.load %arg12[%c0_6, %c192] : memref<56x480xf32, #tpu.memory_space<vmem>>, vector<28x32xf32>
    tpu.vector_store %arg12[%c0_6, %c192], %4 {strides = array<i32>} : memref<56x480xf32, #tpu.memory_space<vmem>>, vector<28x32xf32>,
    %c3 = arith.constant 3 : index
    %c0_7 = arith.constant 0 : index
    %6 = vector.load %arg0[%c3, %c0_7] : memref<192x32xf32, #tpu.memory_space<vmem>>, vector<28x32xf32>
    %c0_8 = arith.constant 0 : index
    %c288 = arith.constant 288 : index
    %7 = vector.load %arg12[%c0_8, %c288] : memref<56x480xf32, #tpu.memory_space<vmem>>, vector<28x32xf32>
    tpu.vector_store %arg12[%c0_8, %c288], %6 {strides = array<i32>} : memref<56x480xf32, #tpu.memory_space<vmem>>, vector<28x32xf32>,
    %c4 = arith.constant 4 : index
    %c0_9 = arith.constant 0 : index
    %8 = vector.load %arg0[%c4, %c0_9] : memref<192x32xf32, #tpu.memory_space<vmem>>, vector<28x32xf32>
    %c0_10 = arith.constant 0 : index
    %c384 = arith.constant 384 : index
    %9 = vector.load %arg12[%c0_10, %c384] : memref<56x480xf32, #tpu.memory_space<vmem>>, vector<28x32xf32>
    tpu.vector_store %arg12[%c0_10, %c384], %8 {strides = array<i32>} : memref<56x480xf32, #tpu.memory_space<vmem>>, vector<28x32xf32>,
    %c32 = arith.constant 32 : index
    %c0_11 = arith.constant 0 : index
    %10 = vector.load %arg0[%c32, %c0_11] : memref<192x32xf32, #tpu.memory_space<vmem>>, vector<28x32xf32>
    %c0_12 = arith.constant 0 : index
    %c32_13 = arith.constant 32 : index
    %11 = vector.load %arg12[%c0_12, %c32_13] : memref<56x480xf32, #tpu.memory_space<vmem>>, vector<28x32xf32>
    tpu.vector_store %arg12[%c0_12, %c32_13], %10 {strides = array<i32>} : memref<56x480xf32, #tpu.memory_space<vmem>>, vector<28x32xf32>,
    %c33 = arith.constant 33 : index
    %c0_14 = arith.constant 0 : index
    %12 = vector.load %arg0[%c33, %c0_14] : memref<192x32xf32, #tpu.memory_space<vmem>>, vector<28x32xf32>
    %c0_15 = arith.constant 0 : index
    %c128 = arith.constant 128 : index
    %13 = vector.load %arg12[%c0_15, %c128] : memref<56x480xf32, #tpu.memory_space<vmem>>, vector<28x32xf32>
    tpu.vector_store %arg12[%c0_15, %c128], %12 {strides = array<i32>} : memref<56x480xf32, #tpu.memory_space<vmem>>, vector<28x32xf32>,
    %c34 = arith.constant 34 : index
    %c0_16 = arith.constant 0 : index
    %14 = vector.load %arg0[%c34, %c0_16] : memref<192x32xf32, #tpu.memory_space<vmem>>, vector<28x32xf32>
    %c0_17 = arith.constant 0 : index
    %c224 = arith.constant 224 : index
    %15 = vector.load %arg12[%c0_17, %c224] : memref<56x480xf32, #tpu.memory_space<vmem>>, vector<28x32xf32>
    tpu.vector_store %arg12[%c0_17, %c224], %14 {strides = array<i32>} : memref<56x480xf32, #tpu.memory_space<vmem>>, vector<28x32xf32>,
    %c35 = arith.constant 35 : index
    %c0_18 = arith.constant 0 : index
    %16 = vector.load %arg0[%c35, %c0_18] : memref<192x32xf32, #tpu.memory_space<vmem>>, vector<28x32xf32>
    %c0_19 = arith.constant 0 : index
    %c320 = arith.constant 320 : index
    %17 = vector.load %arg12[%c0_19, %c320] : memref<56x480xf32, #tpu.memory_space<vmem>>, vector<28x32xf32>
    tpu.vector_store %arg12[%c0_19, %c320], %16 {strides = array<i32>} : memref<56x480xf32, #tpu.memory_space<vmem>>, vector<28x32xf32>,
    %c36 = arith.constant 36 : index
    %c0_20 = arith.constant 0 : index
    %18 = vector.load %arg0[%c36, %c0_20] : memref<192x32xf32, #tpu.memory_space<vmem>>, vector<28x32xf32>
    %c0_21 = arith.constant 0 : index
    %c416 = arith.constant 416 : index
    %19 = vector.load %arg12[%c0_21, %c416] : memref<56x480xf32, #tpu.memory_space<vmem>>, vector<28x32xf32>
    tpu.vector_store %arg12[%c0_21, %c416], %18 {strides = array<i32>} : memref<56x480xf32, #tpu.memory_space<vmem>>, vector<28x32xf32>,
    %c64 = arith.constant 64 : index
    %c0_22 = arith.constant 0 : index
    %20 = vector.load %arg0[%c64, %c0_22] : memref<192x32xf32, #tpu.memory_space<vmem>>, vector<28x32xf32>
    %c0_23 = arith.constant 0 : index
    %c64_24 = arith.constant 64 : index
    %21 = vector.load %arg12[%c0_23, %c64_24] : memref<56x480xf32, #tpu.memory_space<vmem>>, vector<28x32xf32>
    tpu.vector_store %arg12[%c0_23, %c64_24], %20 {strides = array<i32>} : memref<56x480xf32, #tpu.memory_space<vmem>>, vector<28x32xf32>,
    %c65 = arith.constant 65 : index
    %c0_25 = arith.constant 0 : index
    %22 = vector.load %arg0[%c65, %c0_25] : memref<192x32xf32, #tpu.memory_space<vmem>>, vector<28x32xf32>
    %c0_26 = arith.constant 0 : index
    %c160 = arith.constant 160 : index
    %23 = vector.load %arg12[%c0_26, %c160] : memref<56x480xf32, #tpu.memory_space<vmem>>, vector<28x32xf32>
    tpu.vector_store %arg12[%c0_26, %c160], %22 {strides = array<i32>} : memref<56x480xf32, #tpu.memory_space<vmem>>, vector<28x32xf32>,
    %c66 = arith.constant 66 : index
    %c0_27 = arith.constant 0 : index
    %24 = vector.load %arg0[%c66, %c0_27] : memref<192x32xf32, #tpu.memory_space<vmem>>, vector<28x32xf32>
    %c0_28 = arith.constant 0 : index
    %c256 = arith.constant 256 : index
    %25 = vector.load %arg12[%c0_28, %c256] : memref<56x480xf32, #tpu.memory_space<vmem>>, vector<28x32xf32>
    tpu.vector_store %arg12[%c0_28, %c256], %24 {strides = array<i32>} : memref<56x480xf32, #tpu.memory_space<vmem>>, vector<28x32xf32>,
    %c67 = arith.constant 67 : index
    %c0_29 = arith.constant 0 : index
    %26 = vector.load %arg0[%c67, %c0_29] : memref<192x32xf32, #tpu.memory_space<vmem>>, vector<28x32xf32>
    %c0_30 = arith.constant 0 : index
    %c352 = arith.constant 352 : index
    %27 = vector.load %arg12[%c0_30, %c352] : memref<56x480xf32, #tpu.memory_space<vmem>>, vector<28x32xf32>
    tpu.vector_store %arg12[%c0_30, %c352], %26 {strides = array<i32>} : memref<56x480xf32, #tpu.memory_space<vmem>>, vector<28x32xf32>,
    %c68 = arith.constant 68 : index
    %c0_31 = arith.constant 0 : index
    %28 = vector.load %arg0[%c68, %c0_31] : memref<192x32xf32, #tpu.memory_space<vmem>>, vector<28x32xf32>
    %c0_32 = arith.constant 0 : index
    %c448 = arith.constant 448 : index
    %29 = vector.load %arg12[%c0_32, %c448] : memref<56x480xf32, #tpu.memory_space<vmem>>, vector<28x32xf32>
    tpu.vector_store %arg12[%c0_32, %c448], %28 {strides = array<i32>} : memref<56x480xf32, #tpu.memory_space<vmem>>, vector<28x32xf32>,
    %c96_33 = arith.constant 96 : index
    %c0_34 = arith.constant 0 : index
    %30 = vector.load %arg0[%c96_33, %c0_34] : memref<192x32xf32, #tpu.memory_space<vmem>>, vector<28x32xf32>
    %c28 = arith.constant 28 : index
    %c0_35 = arith.constant 0 : index
    %31 = vector.load %arg12[%c28, %c0_35] : memref<56x480xf32, #tpu.memory_space<vmem>>, vector<28x32xf32>
    tpu.vector_store %arg12[%c28, %c0_35], %30 {strides = array<i32>} : memref<56x480xf32, #tpu.memory_space<vmem>>, vector<28x32xf32>,
    %c97 = arith.constant 97 : index
    %c0_36 = arith.constant 0 : index
    %32 = vector.load %arg0[%c97, %c0_36] : memref<192x32xf32, #tpu.memory_space<vmem>>, vector<28x32xf32>
    %c28_37 = arith.constant 28 : index
    %c96_38 = arith.constant 96 : index
    %33 = vector.load %arg12[%c28_37, %c96_38] : memref<56x480xf32, #tpu.memory_space<vmem>>, vector<28x32xf32>
    tpu.vector_store %arg12[%c28_37, %c96_38], %32 {strides = array<i32>} : memref<56x480xf32, #tpu.memory_space<vmem>>, vector<28x32xf32>,
    %c98 = arith.constant 98 : index
    %c0_39 = arith.constant 0 : index
    %34 = vector.load %arg0[%c98, %c0_39] : memref<192x32xf32, #tpu.memory_space<vmem>>, vector<28x32xf32>
    %c28_40 = arith.constant 28 : index
    %c192_41 = arith.constant 192 : index
    %35 = vector.load %arg12[%c28_40, %c192_41] : memref<56x480xf32, #tpu.memory_space<vmem>>, vector<28x32xf32>
    tpu.vector_store %arg12[%c28_40, %c192_41], %34 {strides = array<i32>} : memref<56x480xf32, #tpu.memory_space<vmem>>, vector<28x32xf32>,
    %c99 = arith.constant 99 : index
    %c0_42 = arith.constant 0 : index
    %36 = vector.load %arg0[%c99, %c0_42] : memref<192x32xf32, #tpu.memory_space<vmem>>, vector<28x32xf32>
    %c28_43 = arith.constant 28 : index
    %c288_44 = arith.constant 288 : index
    %37 = vector.load %arg12[%c28_43, %c288_44] : memref<56x480xf32, #tpu.memory_space<vmem>>, vector<28x32xf32>
    tpu.vector_store %arg12[%c28_43, %c288_44], %36 {strides = array<i32>} : memref<56x480xf32, #tpu.memory_space<vmem>>, vector<28x32xf32>,
    %c100 = arith.constant 100 : index
    %c0_45 = arith.constant 0 : index
    %38 = vector.load %arg0[%c100, %c0_45] : memref<192x32xf32, #tpu.memory_space<vmem>>, vector<28x32xf32>
    %c28_46 = arith.constant 28 : index
    %c384_47 = arith.constant 384 : index
    %39 = vector.load %arg12[%c28_46, %c384_47] : memref<56x480xf32, #tpu.memory_space<vmem>>, vector<28x32xf32>
    tpu.vector_store %arg12[%c28_46, %c384_47], %38 {strides = array<i32>} : memref<56x480xf32, #tpu.memory_space<vmem>>, vector<28x32xf32>,
    %c128_48 = arith.constant 128 : index
    %c0_49 = arith.constant 0 : index
    %40 = vector.load %arg0[%c128_48, %c0_49] : memref<192x32xf32, #tpu.memory_space<vmem>>, vector<28x32xf32>
    %c28_50 = arith.constant 28 : index
    %c32_51 = arith.constant 32 : index
    %41 = vector.load %arg12[%c28_50, %c32_51] : memref<56x480xf32, #tpu.memory_space<vmem>>, vector<28x32xf32>
    tpu.vector_store %arg12[%c28_50, %c32_51], %40 {strides = array<i32>} : memref<56x480xf32, #tpu.memory_space<vmem>>, vector<28x32xf32>,
    %c129 = arith.constant 129 : index
    %c0_52 = arith.constant 0 : index
    %42 = vector.load %arg0[%c129, %c0_52] : memref<192x32xf32, #tpu.memory_space<vmem>>, vector<28x32xf32>
    %c28_53 = arith.constant 28 : index
    %c128_54 = arith.constant 128 : index
    %43 = vector.load %arg12[%c28_53, %c128_54] : memref<56x480xf32, #tpu.memory_space<vmem>>, vector<28x32xf32>
    tpu.vector_store %arg12[%c28_53, %c128_54], %42 {strides = array<i32>} : memref<56x480xf32, #tpu.memory_space<vmem>>, vector<28x32xf32>,
    %c130 = arith.constant 130 : index
    %c0_55 = arith.constant 0 : index
    %44 = vector.load %arg0[%c130, %c0_55] : memref<192x32xf32, #tpu.memory_space<vmem>>, vector<28x32xf32>
    %c28_56 = arith.constant 28 : index
    %c224_57 = arith.constant 224 : index
    %45 = vector.load %arg12[%c28_56, %c224_57] : memref<56x480xf32, #tpu.memory_space<vmem>>, vector<28x32xf32>
    tpu.vector_store %arg12[%c28_56, %c224_57], %44 {strides = array<i32>} : memref<56x480xf32, #tpu.memory_space<vmem>>, vector<28x32xf32>,
    %c131 = arith.constant 131 : index
    %c0_58 = arith.constant 0 : index
    %46 = vector.load %arg0[%c131, %c0_58] : memref<192x32xf32, #tpu.memory_space<vmem>>, vector<28x32xf32>
    %c28_59 = arith.constant 28 : index
    %c320_60 = arith.constant 320 : index
    %47 = vector.load %arg12[%c28_59, %c320_60] : memref<56x480xf32, #tpu.memory_space<vmem>>, vector<28x32xf32>
    tpu.vector_store %arg12[%c28_59, %c320_60], %46 {strides = array<i32>} : memref<56x480xf32, #tpu.memory_space<vmem>>, vector<28x32xf32>,
    %c132 = arith.constant 132 : index
    %c0_61 = arith.constant 0 : index
    %48 = vector.load %arg0[%c132, %c0_61] : memref<192x32xf32, #tpu.memory_space<vmem>>, vector<28x32xf32>
    %c28_62 = arith.constant 28 : index
    %c416_63 = arith.constant 416 : index
    %49 = vector.load %arg12[%c28_62, %c416_63] : memref<56x480xf32, #tpu.memory_space<vmem>>, vector<28x32xf32>
    tpu.vector_store %arg12[%c28_62, %c416_63], %48 {strides = array<i32>} : memref<56x480xf32, #tpu.memory_space<vmem>>, vector<28x32xf32>,
    %c160_64 = arith.constant 160 : index
    %c0_65 = arith.constant 0 : index
    %50 = vector.load %arg0[%c160_64, %c0_65] : memref<192x32xf32, #tpu.memory_space<vmem>>, vector<28x32xf32>
    %c28_66 = arith.constant 28 : index
    %c64_67 = arith.constant 64 : index
    %51 = vector.load %arg12[%c28_66, %c64_67] : memref<56x480xf32, #tpu.memory_space<vmem>>, vector<28x32xf32>
    tpu.vector_store %arg12[%c28_66, %c64_67], %50 {strides = array<i32>} : memref<56x480xf32, #tpu.memory_space<vmem>>, vector<28x32xf32>,
    %c161 = arith.constant 161 : index
    %c0_68 = arith.constant 0 : index
    %52 = vector.load %arg0[%c161, %c0_68] : memref<192x32xf32, #tpu.memory_space<vmem>>, vector<28x32xf32>
    %c28_69 = arith.constant 28 : index
    %c160_70 = arith.constant 160 : index
    %53 = vector.load %arg12[%c28_69, %c160_70] : memref<56x480xf32, #tpu.memory_space<vmem>>, vector<28x32xf32>
    tpu.vector_store %arg12[%c28_69, %c160_70], %52 {strides = array<i32>} : memref<56x480xf32, #tpu.memory_space<vmem>>, vector<28x32xf32>,
    %c162 = arith.constant 162 : index
    %c0_71 = arith.constant 0 : index
    %54 = vector.load %arg0[%c162, %c0_71] : memref<192x32xf32, #tpu.memory_space<vmem>>, vector<28x32xf32>
    %c28_72 = arith.constant 28 : index
    %c256_73 = arith.constant 256 : index
    %55 = vector.load %arg12[%c28_72, %c256_73] : memref<56x480xf32, #tpu.memory_space<vmem>>, vector<28x32xf32>
    tpu.vector_store %arg12[%c28_72, %c256_73], %54 {strides = array<i32>} : memref<56x480xf32, #tpu.memory_space<vmem>>, vector<28x32xf32>,
    %c163 = arith.constant 163 : index
    %c0_74 = arith.constant 0 : index
    %56 = vector.load %arg0[%c163, %c0_74] : memref<192x32xf32, #tpu.memory_space<vmem>>, vector<28x32xf32>
    %c28_75 = arith.constant 28 : index
    %c352_76 = arith.constant 352 : index
    %57 = vector.load %arg12[%c28_75, %c352_76] : memref<56x480xf32, #tpu.memory_space<vmem>>, vector<28x32xf32>
    tpu.vector_store %arg12[%c28_75, %c352_76], %56 {strides = array<i32>} : memref<56x480xf32, #tpu.memory_space<vmem>>, vector<28x32xf32>,
    %c164 = arith.constant 164 : index
    %c0_77 = arith.constant 0 : index
    %58 = vector.load %arg0[%c164, %c0_77] : memref<192x32xf32, #tpu.memory_space<vmem>>, vector<28x32xf32>
    %c28_78 = arith.constant 28 : index
    %c448_79 = arith.constant 448 : index
    %59 = vector.load %arg12[%c28_78, %c448_79] : memref<56x480xf32, #tpu.memory_space<vmem>>, vector<28x32xf32>
    tpu.vector_store %arg12[%c28_78, %c448_79], %58 {strides = array<i32>} : memref<56x480xf32, #tpu.memory_space<vmem>>, vector<28x32xf32>,
    %c0_80 = arith.constant 0 : index
    %c0_81 = arith.constant 0 : index
    %60 = vector.load %arg12[%c0_80, %c0_81] : memref<56x480xf32, #tpu.memory_space<vmem>>, vector<56x480xf32>
    %c0_82 = arith.constant 0 : index
    %c0_83 = arith.constant 0 : index
    %61 = vector.load %arg1[%c0_82, %c0_83] : memref<480x168xf32, #tpu.memory_space<vmem>>, vector<480x168xf32>
    %cst = arith.constant dense<0.000000e+00> : vector<56x168xf32>
    %62 = tpu.matmul %60, %61, %cst {dimension_numbers = #tpu.dot_dimension_numbers<[1], [0], [0], [1], [0, 0, 1, 1], [], []>} : vector<56x480xf32>, vector<480x168xf32>, vector<56x168xf32> -> vector<56x168xf32>
    %c0_84 = arith.constant 0 : index
    %c0_85 = arith.constant 0 : index
    %63 = vector.load %arg2[%c0_84, %c0_85] : memref<1x168xf32, #tpu.memory_space<vmem>>, vector<1x168xf32>
    %64 = vector.broadcast %63 : vector<1x168xf32> to vector<56x168xf32>
    %65 = arith.addf %62, %64 : vector<56x168xf32>
    %cst_86 = arith.constant 0.000000e+00 : f32
    %66 = vector.broadcast %cst_86 : f32 to vector<56x168xf32>
    %67 = arith.maximumf %65, %66 : vector<56x168xf32>
    %c0_87 = arith.constant 0 : index
    %c0_88 = arith.constant 0 : index
    %68 = vector.load %arg13[%c0_87, %c0_88] : memref<56x168xf32, #tpu.memory_space<vmem>>, vector<56x168xf32>
    tpu.vector_store %arg13[%c0_87, %c0_88], %67 {strides = array<i32>} : memref<56x168xf32, #tpu.memory_space<vmem>>, vector<56x168xf32>,
    %c0_89 = arith.constant 0 : index
    %c0_90 = arith.constant 0 : index
    %69 = vector.load %arg13[%c0_89, %c0_90] : memref<56x168xf32, #tpu.memory_space<vmem>>, vector<1x84xf32>
    %c0_91 = arith.constant 0 : index
    %c84 = arith.constant 84 : index
    %70 = vector.load %arg13[%c0_91, %c84] : memref<56x168xf32, #tpu.memory_space<vmem>>, vector<1x84xf32>
    %71 = arith.maximumf %69, %70 : vector<1x84xf32>
    %c1_92 = arith.constant 1 : index
    %c0_93 = arith.constant 0 : index
    %72 = vector.load %arg13[%c1_92, %c0_93] : memref<56x168xf32, #tpu.memory_space<vmem>>, vector<1x84xf32>
    %c1_94 = arith.constant 1 : index
    %c84_95 = arith.constant 84 : index
    %73 = vector.load %arg13[%c1_94, %c84_95] : memref<56x168xf32, #tpu.memory_space<vmem>>, vector<1x84xf32>
    %74 = arith.maximumf %72, %73 : vector<1x84xf32>
    %75 = arith.maximumf %71, %74 : vector<1x84xf32>
    %c0_96 = arith.constant 0 : index
    %c0_97 = arith.constant 0 : index
    %76 = vector.load %arg14[%c0_96, %c0_97] : memref<28x84xf32, #tpu.memory_space<vmem>>, vector<1x84xf32>
    tpu.vector_store %arg14[%c0_96, %c0_97], %75 {strides = array<i32>} : memref<28x84xf32, #tpu.memory_space<vmem>>, vector<1x84xf32>,
    %c2_98 = arith.constant 2 : index
    %c0_99 = arith.constant 0 : index
    %77 = vector.load %arg13[%c2_98, %c0_99] : memref<56x168xf32, #tpu.memory_space<vmem>>, vector<1x84xf32>
    %c2_100 = arith.constant 2 : index
    %c84_101 = arith.constant 84 : index
    %78 = vector.load %arg13[%c2_100, %c84_101] : memref<56x168xf32, #tpu.memory_space<vmem>>, vector<1x84xf32>
    %79 = arith.maximumf %77, %78 : vector<1x84xf32>
    %c3_102 = arith.constant 3 : index
    %c0_103 = arith.constant 0 : index
    %80 = vector.load %arg13[%c3_102, %c0_103] : memref<56x168xf32, #tpu.memory_space<vmem>>, vector<1x84xf32>
    %c3_104 = arith.constant 3 : index
    %c84_105 = arith.constant 84 : index
    %81 = vector.load %arg13[%c3_104, %c84_105] : memref<56x168xf32, #tpu.memory_space<vmem>>, vector<1x84xf32>
    %82 = arith.maximumf %80, %81 : vector<1x84xf32>
    %83 = arith.maximumf %79, %82 : vector<1x84xf32>
    %c1_106 = arith.constant 1 : index
    %c0_107 = arith.constant 0 : index
    %84 = vector.load %arg14[%c1_106, %c0_107] : memref<28x84xf32, #tpu.memory_space<vmem>>, vector<1x84xf32>
    tpu.vector_store %arg14[%c1_106, %c0_107], %83 {strides = array<i32>} : memref<28x84xf32, #tpu.memory_space<vmem>>, vector<1x84xf32>,
    %c4_108 = arith.constant 4 : index
    %c0_109 = arith.constant 0 : index
    %85 = vector.load %arg13[%c4_108, %c0_109] : memref<56x168xf32, #tpu.memory_space<vmem>>, vector<1x84xf32>
    %c4_110 = arith.constant 4 : index
    %c84_111 = arith.constant 84 : index
    %86 = vector.load %arg13[%c4_110, %c84_111] : memref<56x168xf32, #tpu.memory_space<vmem>>, vector<1x84xf32>
    %87 = arith.maximumf %85, %86 : vector<1x84xf32>
    %c5 = arith.constant 5 : index
    %c0_112 = arith.constant 0 : index
    %88 = vector.load %arg13[%c5, %c0_112] : memref<56x168xf32, #tpu.memory_space<vmem>>, vector<1x84xf32>
    %c5_113 = arith.constant 5 : index
    %c84_114 = arith.constant 84 : index
    %89 = vector.load %arg13[%c5_113, %c84_114] : memref<56x168xf32, #tpu.memory_space<vmem>>, vector<1x84xf32>
    %90 = arith.maximumf %88, %89 : vector<1x84xf32>
    %91 = arith.maximumf %87, %90 : vector<1x84xf32>
    %c2_115 = arith.constant 2 : index
    %c0_116 = arith.constant 0 : index
    %92 = vector.load %arg14[%c2_115, %c0_116] : memref<28x84xf32, #tpu.memory_space<vmem>>, vector<1x84xf32>
    tpu.vector_store %arg14[%c2_115, %c0_116], %91 {strides = array<i32>} : memref<28x84xf32, #tpu.memory_space<vmem>>, vector<1x84xf32>,
    %c6 = arith.constant 6 : index
    %c0_117 = arith.constant 0 : index
    %93 = vector.load %arg13[%c6, %c0_117] : memref<56x168xf32, #tpu.memory_space<vmem>>, vector<1x84xf32>
    %c6_118 = arith.constant 6 : index
    %c84_119 = arith.constant 84 : index
    %94 = vector.load %arg13[%c6_118, %c84_119] : memref<56x168xf32, #tpu.memory_space<vmem>>, vector<1x84xf32>
    %95 = arith.maximumf %93, %94 : vector<1x84xf32>
    %c7 = arith.constant 7 : index
    %c0_120 = arith.constant 0 : index
    %96 = vector.load %arg13[%c7, %c0_120] : memref<56x168xf32, #tpu.memory_space<vmem>>, vector<1x84xf32>
    %c7_121 = arith.constant 7 : index
    %c84_122 = arith.constant 84 : index
    %97 = vector.load %arg13[%c7_121, %c84_122] : memref<56x168xf32, #tpu.memory_space<vmem>>, vector<1x84xf32>
    %98 = arith.maximumf %96, %97 : vector<1x84xf32>
    %99 = arith.maximumf %95, %98 : vector<1x84xf32>
    %c3_123 = arith.constant 3 : index
    %c0_124 = arith.constant 0 : index
    %100 = vector.load %arg14[%c3_123, %c0_124] : memref<28x84xf32, #tpu.memory_space<vmem>>, vector<1x84xf32>
    tpu.vector_store %arg14[%c3_123, %c0_124], %99 {strides = array<i32>} : memref<28x84xf32, #tpu.memory_space<vmem>>, vector<1x84xf32>,
    %c8 = arith.constant 8 : index
    %c0_125 = arith.constant 0 : index
    %101 = vector.load %arg13[%c8, %c0_125] : memref<56x168xf32, #tpu.memory_space<vmem>>, vector<1x84xf32>
    %c8_126 = arith.constant 8 : index
    %c84_127 = arith.constant 84 : index
    %102 = vector.load %arg13[%c8_126, %c84_127] : memref<56x168xf32, #tpu.memory_space<vmem>>, vector<1x84xf32>
    %103 = arith.maximumf %101, %102 : vector<1x84xf32>
    %c9 = arith.constant 9 : index
    %c0_128 = arith.constant 0 : index
    %104 = vector.load %arg13[%c9, %c0_128] : memref<56x168xf32, #tpu.memory_space<vmem>>, vector<1x84xf32>
    %c9_129 = arith.constant 9 : index
    %c84_130 = arith.constant 84 : index
    %105 = vector.load %arg13[%c9_129, %c84_130] : memref<56x168xf32, #tpu.memory_space<vmem>>, vector<1x84xf32>
    %106 = arith.maximumf %104, %105 : vector<1x84xf32>
    %107 = arith.maximumf %103, %106 : vector<1x84xf32>
    %c4_131 = arith.constant 4 : index
    %c0_132 = arith.constant 0 : index
    %108 = vector.load %arg14[%c4_131, %c0_132] : memref<28x84xf32, #tpu.memory_space<vmem>>, vector<1x84xf32>
    tpu.vector_store %arg14[%c4_131, %c0_132], %107 {strides = array<i32>} : memref<28x84xf32, #tpu.memory_space<vmem>>, vector<1x84xf32>,
    %c10 = arith.constant 10 : index
    %c0_133 = arith.constant 0 : index
    %109 = vector.load %arg13[%c10, %c0_133] : memref<56x168xf32, #tpu.memory_space<vmem>>, vector<1x84xf32>
    %c10_134 = arith.constant 10 : index
    %c84_135 = arith.constant 84 : index
    %110 = vector.load %arg13[%c10_134, %c84_135] : memref<56x168xf32, #tpu.memory_space<vmem>>, vector<1x84xf32>
    %111 = arith.maximumf %109, %110 : vector<1x84xf32>
    %c11 = arith.constant 11 : index
    %c0_136 = arith.constant 0 : index
    %112 = vector.load %arg13[%c11, %c0_136] : memref<56x168xf32, #tpu.memory_space<vmem>>, vector<1x84xf32>
    %c11_137 = arith.constant 11 : index
    %c84_138 = arith.constant 84 : index
    %113 = vector.load %arg13[%c11_137, %c84_138] : memref<56x168xf32, #tpu.memory_space<vmem>>, vector<1x84xf32>
    %114 = arith.maximumf %112, %113 : vector<1x84xf32>
    %115 = arith.maximumf %111, %114 : vector<1x84xf32>
    %c5_139 = arith.constant 5 : index
    %c0_140 = arith.constant 0 : index
    %116 = vector.load %arg14[%c5_139, %c0_140] : memref<28x84xf32, #tpu.memory_space<vmem>>, vector<1x84xf32>
    tpu.vector_store %arg14[%c5_139, %c0_140], %115 {strides = array<i32>} : memref<28x84xf32, #tpu.memory_space<vmem>>, vector<1x84xf32>,
    %c12 = arith.constant 12 : index
    %c0_141 = arith.constant 0 : index
    %117 = vector.load %arg13[%c12, %c0_141] : memref<56x168xf32, #tpu.memory_space<vmem>>, vector<1x84xf32>
    %c12_142 = arith.constant 12 : index
    %c84_143 = arith.constant 84 : index
    %118 = vector.load %arg13[%c12_142, %c84_143] : memref<56x168xf32, #tpu.memory_space<vmem>>, vector<1x84xf32>
    %119 = arith.maximumf %117, %118 : vector<1x84xf32>
    %c13 = arith.constant 13 : index
    %c0_144 = arith.constant 0 : index
    %120 = vector.load %arg13[%c13, %c0_144] : memref<56x168xf32, #tpu.memory_space<vmem>>, vector<1x84xf32>
    %c13_145 = arith.constant 13 : index
    %c84_146 = arith.constant 84 : index
    %121 = vector.load %arg13[%c13_145, %c84_146] : memref<56x168xf32, #tpu.memory_space<vmem>>, vector<1x84xf32>
    %122 = arith.maximumf %120, %121 : vector<1x84xf32>
    %123 = arith.maximumf %119, %122 : vector<1x84xf32>
    %c6_147 = arith.constant 6 : index
    %c0_148 = arith.constant 0 : index
    %124 = vector.load %arg14[%c6_147, %c0_148] : memref<28x84xf32, #tpu.memory_space<vmem>>, vector<1x84xf32>
    tpu.vector_store %arg14[%c6_147, %c0_148], %123 {strides = array<i32>} : memref<28x84xf32, #tpu.memory_space<vmem>>, vector<1x84xf32>,
    %c14 = arith.constant 14 : index
    %c0_149 = arith.constant 0 : index
    %125 = vector.load %arg13[%c14, %c0_149] : memref<56x168xf32, #tpu.memory_space<vmem>>, vector<1x84xf32>
    %c14_150 = arith.constant 14 : index
    %c84_151 = arith.constant 84 : index
    %126 = vector.load %arg13[%c14_150, %c84_151] : memref<56x168xf32, #tpu.memory_space<vmem>>, vector<1x84xf32>
    %127 = arith.maximumf %125, %126 : vector<1x84xf32>
    %c15 = arith.constant 15 : index
    %c0_152 = arith.constant 0 : index
    %128 = vector.load %arg13[%c15, %c0_152] : memref<56x168xf32, #tpu.memory_space<vmem>>, vector<1x84xf32>
    %c15_153 = arith.constant 15 : index
    %c84_154 = arith.constant 84 : index
    %129 = vector.load %arg13[%c15_153, %c84_154] : memref<56x168xf32, #tpu.memory_space<vmem>>, vector<1x84xf32>
    %130 = arith.maximumf %128, %129 : vector<1x84xf32>
    %131 = arith.maximumf %127, %130 : vector<1x84xf32>
    %c7_155 = arith.constant 7 : index
    %c0_156 = arith.constant 0 : index
    %132 = vector.load %arg14[%c7_155, %c0_156] : memref<28x84xf32, #tpu.memory_space<vmem>>, vector<1x84xf32>
    tpu.vector_store %arg14[%c7_155, %c0_156], %131 {strides = array<i32>} : memref<28x84xf32, #tpu.memory_space<vmem>>, vector<1x84xf32>,
    %c16 = arith.constant 16 : index
    %c0_157 = arith.constant 0 : index
    %133 = vector.load %arg13[%c16, %c0_157] : memref<56x168xf32, #tpu.memory_space<vmem>>, vector<1x84xf32>
    %c16_158 = arith.constant 16 : index
    %c84_159 = arith.constant 84 : index
    %134 = vector.load %arg13[%c16_158, %c84_159] : memref<56x168xf32, #tpu.memory_space<vmem>>, vector<1x84xf32>
    %135 = arith.maximumf %133, %134 : vector<1x84xf32>
    %c17 = arith.constant 17 : index
    %c0_160 = arith.constant 0 : index
    %136 = vector.load %arg13[%c17, %c0_160] : memref<56x168xf32, #tpu.memory_space<vmem>>, vector<1x84xf32>
    %c17_161 = arith.constant 17 : index
    %c84_162 = arith.constant 84 : index
    %137 = vector.load %arg13[%c17_161, %c84_162] : memref<56x168xf32, #tpu.memory_space<vmem>>, vector<1x84xf32>
    %138 = arith.maximumf %136, %137 : vector<1x84xf32>
    %139 = arith.maximumf %135, %138 : vector<1x84xf32>
    %c8_163 = arith.constant 8 : index
    %c0_164 = arith.constant 0 : index
    %140 = vector.load %arg14[%c8_163, %c0_164] : memref<28x84xf32, #tpu.memory_space<vmem>>, vector<1x84xf32>
    tpu.vector_store %arg14[%c8_163, %c0_164], %139 {strides = array<i32>} : memref<28x84xf32, #tpu.memory_space<vmem>>, vector<1x84xf32>,
    %c18 = arith.constant 18 : index
    %c0_165 = arith.constant 0 : index
    %141 = vector.load %arg13[%c18, %c0_165] : memref<56x168xf32, #tpu.memory_space<vmem>>, vector<1x84xf32>
    %c18_166 = arith.constant 18 : index
    %c84_167 = arith.constant 84 : index
    %142 = vector.load %arg13[%c18_166, %c84_167] : memref<56x168xf32, #tpu.memory_space<vmem>>, vector<1x84xf32>
    %143 = arith.maximumf %141, %142 : vector<1x84xf32>
    %c19 = arith.constant 19 : index
    %c0_168 = arith.constant 0 : index
    %144 = vector.load %arg13[%c19, %c0_168] : memref<56x168xf32, #tpu.memory_space<vmem>>, vector<1x84xf32>
    %c19_169 = arith.constant 19 : index
    %c84_170 = arith.constant 84 : index
    %145 = vector.load %arg13[%c19_169, %c84_170] : memref<56x168xf32, #tpu.memory_space<vmem>>, vector<1x84xf32>
    %146 = arith.maximumf %144, %145 : vector<1x84xf32>
    %147 = arith.maximumf %143, %146 : vector<1x84xf32>
    %c9_171 = arith.constant 9 : index
    %c0_172 = arith.constant 0 : index
    %148 = vector.load %arg14[%c9_171, %c0_172] : memref<28x84xf32, #tpu.memory_space<vmem>>, vector<1x84xf32>
    tpu.vector_store %arg14[%c9_171, %c0_172], %147 {strides = array<i32>} : memref<28x84xf32, #tpu.memory_space<vmem>>, vector<1x84xf32>,
    %c20 = arith.constant 20 : index
    %c0_173 = arith.constant 0 : index
    %149 = vector.load %arg13[%c20, %c0_173] : memref<56x168xf32, #tpu.memory_space<vmem>>, vector<1x84xf32>
    %c20_174 = arith.constant 20 : index
    %c84_175 = arith.constant 84 : index
    %150 = vector.load %arg13[%c20_174, %c84_175] : memref<56x168xf32, #tpu.memory_space<vmem>>, vector<1x84xf32>
    %151 = arith.maximumf %149, %150 : vector<1x84xf32>
    %c21 = arith.constant 21 : index
    %c0_176 = arith.constant 0 : index
    %152 = vector.load %arg13[%c21, %c0_176] : memref<56x168xf32, #tpu.memory_space<vmem>>, vector<1x84xf32>
    %c21_177 = arith.constant 21 : index
    %c84_178 = arith.constant 84 : index
    %153 = vector.load %arg13[%c21_177, %c84_178] : memref<56x168xf32, #tpu.memory_space<vmem>>, vector<1x84xf32>
    %154 = arith.maximumf %152, %153 : vector<1x84xf32>
    %155 = arith.maximumf %151, %154 : vector<1x84xf32>
    %c10_179 = arith.constant 10 : index
    %c0_180 = arith.constant 0 : index
    %156 = vector.load %arg14[%c10_179, %c0_180] : memref<28x84xf32, #tpu.memory_space<vmem>>, vector<1x84xf32>
    tpu.vector_store %arg14[%c10_179, %c0_180], %155 {strides = array<i32>} : memref<28x84xf32, #tpu.memory_space<vmem>>, vector<1x84xf32>,
    %c22 = arith.constant 22 : index
    %c0_181 = arith.constant 0 : index
    %157 = vector.load %arg13[%c22, %c0_181] : memref<56x168xf32, #tpu.memory_space<vmem>>, vector<1x84xf32>
    %c22_182 = arith.constant 22 : index
    %c84_183 = arith.constant 84 : index
    %158 = vector.load %arg13[%c22_182, %c84_183] : memref<56x168xf32, #tpu.memory_space<vmem>>, vector<1x84xf32>
    %159 = arith.maximumf %157, %158 : vector<1x84xf32>
    %c23 = arith.constant 23 : index
    %c0_184 = arith.constant 0 : index
    %160 = vector.load %arg13[%c23, %c0_184] : memref<56x168xf32, #tpu.memory_space<vmem>>, vector<1x84xf32>
    %c23_185 = arith.constant 23 : index
    %c84_186 = arith.constant 84 : index
    %161 = vector.load %arg13[%c23_185, %c84_186] : memref<56x168xf32, #tpu.memory_space<vmem>>, vector<1x84xf32>
    %162 = arith.maximumf %160, %161 : vector<1x84xf32>
    %163 = arith.maximumf %159, %162 : vector<1x84xf32>
    %c11_187 = arith.constant 11 : index
    %c0_188 = arith.constant 0 : index
    %164 = vector.load %arg14[%c11_187, %c0_188] : memref<28x84xf32, #tpu.memory_space<vmem>>, vector<1x84xf32>
    tpu.vector_store %arg14[%c11_187, %c0_188], %163 {strides = array<i32>} : memref<28x84xf32, #tpu.memory_space<vmem>>, vector<1x84xf32>,
    %c24 = arith.constant 24 : index
    %c0_189 = arith.constant 0 : index
    %165 = vector.load %arg13[%c24, %c0_189] : memref<56x168xf32, #tpu.memory_space<vmem>>, vector<1x84xf32>
    %c24_190 = arith.constant 24 : index
    %c84_191 = arith.constant 84 : index
    %166 = vector.load %arg13[%c24_190, %c84_191] : memref<56x168xf32, #tpu.memory_space<vmem>>, vector<1x84xf32>
    %167 = arith.maximumf %165, %166 : vector<1x84xf32>
    %c25 = arith.constant 25 : index
    %c0_192 = arith.constant 0 : index
    %168 = vector.load %arg13[%c25, %c0_192] : memref<56x168xf32, #tpu.memory_space<vmem>>, vector<1x84xf32>
    %c25_193 = arith.constant 25 : index
    %c84_194 = arith.constant 84 : index
    %169 = vector.load %arg13[%c25_193, %c84_194] : memref<56x168xf32, #tpu.memory_space<vmem>>, vector<1x84xf32>
    %170 = arith.maximumf %168, %169 : vector<1x84xf32>
    %171 = arith.maximumf %167, %170 : vector<1x84xf32>
    %c12_195 = arith.constant 12 : index
    %c0_196 = arith.constant 0 : index
    %172 = vector.load %arg14[%c12_195, %c0_196] : memref<28x84xf32, #tpu.memory_space<vmem>>, vector<1x84xf32>
    tpu.vector_store %arg14[%c12_195, %c0_196], %171 {strides = array<i32>} : memref<28x84xf32, #tpu.memory_space<vmem>>, vector<1x84xf32>,
    %c26 = arith.constant 26 : index
    %c0_197 = arith.constant 0 : index
    %173 = vector.load %arg13[%c26, %c0_197] : memref<56x168xf32, #tpu.memory_space<vmem>>, vector<1x84xf32>
    %c26_198 = arith.constant 26 : index
    %c84_199 = arith.constant 84 : index
    %174 = vector.load %arg13[%c26_198, %c84_199] : memref<56x168xf32, #tpu.memory_space<vmem>>, vector<1x84xf32>
    %175 = arith.maximumf %173, %174 : vector<1x84xf32>
    %c27 = arith.constant 27 : index
    %c0_200 = arith.constant 0 : index
    %176 = vector.load %arg13[%c27, %c0_200] : memref<56x168xf32, #tpu.memory_space<vmem>>, vector<1x84xf32>
    %c27_201 = arith.constant 27 : index
    %c84_202 = arith.constant 84 : index
    %177 = vector.load %arg13[%c27_201, %c84_202] : memref<56x168xf32, #tpu.memory_space<vmem>>, vector<1x84xf32>
    %178 = arith.maximumf %176, %177 : vector<1x84xf32>
    %179 = arith.maximumf %175, %178 : vector<1x84xf32>
    %c13_203 = arith.constant 13 : index
    %c0_204 = arith.constant 0 : index
    %180 = vector.load %arg14[%c13_203, %c0_204] : memref<28x84xf32, #tpu.memory_space<vmem>>, vector<1x84xf32>
    tpu.vector_store %arg14[%c13_203, %c0_204], %179 {strides = array<i32>} : memref<28x84xf32, #tpu.memory_space<vmem>>, vector<1x84xf32>,
    %c28_205 = arith.constant 28 : index
    %c0_206 = arith.constant 0 : index
    %181 = vector.load %arg13[%c28_205, %c0_206] : memref<56x168xf32, #tpu.memory_space<vmem>>, vector<1x84xf32>
    %c28_207 = arith.constant 28 : index
    %c84_208 = arith.constant 84 : index
    %182 = vector.load %arg13[%c28_207, %c84_208] : memref<56x168xf32, #tpu.memory_space<vmem>>, vector<1x84xf32>
    %183 = arith.maximumf %181, %182 : vector<1x84xf32>
    %c29 = arith.constant 29 : index
    %c0_209 = arith.constant 0 : index
    %184 = vector.load %arg13[%c29, %c0_209] : memref<56x168xf32, #tpu.memory_space<vmem>>, vector<1x84xf32>
    %c29_210 = arith.constant 29 : index
    %c84_211 = arith.constant 84 : index
    %185 = vector.load %arg13[%c29_210, %c84_211] : memref<56x168xf32, #tpu.memory_space<vmem>>, vector<1x84xf32>
    %186 = arith.maximumf %184, %185 : vector<1x84xf32>
    %187 = arith.maximumf %183, %186 : vector<1x84xf32>
    %c14_212 = arith.constant 14 : index
    %c0_213 = arith.constant 0 : index
    %188 = vector.load %arg14[%c14_212, %c0_213] : memref<28x84xf32, #tpu.memory_space<vmem>>, vector<1x84xf32>
    tpu.vector_store %arg14[%c14_212, %c0_213], %187 {strides = array<i32>} : memref<28x84xf32, #tpu.memory_space<vmem>>, vector<1x84xf32>,
    %c30 = arith.constant 30 : index
    %c0_214 = arith.constant 0 : index
    %189 = vector.load %arg13[%c30, %c0_214] : memref<56x168xf32, #tpu.memory_space<vmem>>, vector<1x84xf32>
    %c30_215 = arith.constant 30 : index
    %c84_216 = arith.constant 84 : index
    %190 = vector.load %arg13[%c30_215, %c84_216] : memref<56x168xf32, #tpu.memory_space<vmem>>, vector<1x84xf32>
    %191 = arith.maximumf %189, %190 : vector<1x84xf32>
    %c31 = arith.constant 31 : index
    %c0_217 = arith.constant 0 : index
    %192 = vector.load %arg13[%c31, %c0_217] : memref<56x168xf32, #tpu.memory_space<vmem>>, vector<1x84xf32>
    %c31_218 = arith.constant 31 : index
    %c84_219 = arith.constant 84 : index
    %193 = vector.load %arg13[%c31_218, %c84_219] : memref<56x168xf32, #tpu.memory_space<vmem>>, vector<1x84xf32>
    %194 = arith.maximumf %192, %193 : vector<1x84xf32>
    %195 = arith.maximumf %191, %194 : vector<1x84xf32>
    %c15_220 = arith.constant 15 : index
    %c0_221 = arith.constant 0 : index
    %196 = vector.load %arg14[%c15_220, %c0_221] : memref<28x84xf32, #tpu.memory_space<vmem>>, vector<1x84xf32>
    tpu.vector_store %arg14[%c15_220, %c0_221], %195 {strides = array<i32>} : memref<28x84xf32, #tpu.memory_space<vmem>>, vector<1x84xf32>,
    %c32_222 = arith.constant 32 : index
    %c0_223 = arith.constant 0 : index
    %197 = vector.load %arg13[%c32_222, %c0_223] : memref<56x168xf32, #tpu.memory_space<vmem>>, vector<1x84xf32>
    %c32_224 = arith.constant 32 : index
    %c84_225 = arith.constant 84 : index
    %198 = vector.load %arg13[%c32_224, %c84_225] : memref<56x168xf32, #tpu.memory_space<vmem>>, vector<1x84xf32>
    %199 = arith.maximumf %197, %198 : vector<1x84xf32>
    %c33_226 = arith.constant 33 : index
    %c0_227 = arith.constant 0 : index
    %200 = vector.load %arg13[%c33_226, %c0_227] : memref<56x168xf32, #tpu.memory_space<vmem>>, vector<1x84xf32>
    %c33_228 = arith.constant 33 : index
    %c84_229 = arith.constant 84 : index
    %201 = vector.load %arg13[%c33_228, %c84_229] : memref<56x168xf32, #tpu.memory_space<vmem>>, vector<1x84xf32>
    %202 = arith.maximumf %200, %201 : vector<1x84xf32>
    %203 = arith.maximumf %199, %202 : vector<1x84xf32>
    %c16_230 = arith.constant 16 : index
    %c0_231 = arith.constant 0 : index
    %204 = vector.load %arg14[%c16_230, %c0_231] : memref<28x84xf32, #tpu.memory_space<vmem>>, vector<1x84xf32>
    tpu.vector_store %arg14[%c16_230, %c0_231], %203 {strides = array<i32>} : memref<28x84xf32, #tpu.memory_space<vmem>>, vector<1x84xf32>,
    %c34_232 = arith.constant 34 : index
    %c0_233 = arith.constant 0 : index
    %205 = vector.load %arg13[%c34_232, %c0_233] : memref<56x168xf32, #tpu.memory_space<vmem>>, vector<1x84xf32>
    %c34_234 = arith.constant 34 : index
    %c84_235 = arith.constant 84 : index
    %206 = vector.load %arg13[%c34_234, %c84_235] : memref<56x168xf32, #tpu.memory_space<vmem>>, vector<1x84xf32>
    %207 = arith.maximumf %205, %206 : vector<1x84xf32>
    %c35_236 = arith.constant 35 : index
    %c0_237 = arith.constant 0 : index
    %208 = vector.load %arg13[%c35_236, %c0_237] : memref<56x168xf32, #tpu.memory_space<vmem>>, vector<1x84xf32>
    %c35_238 = arith.constant 35 : index
    %c84_239 = arith.constant 84 : index
    %209 = vector.load %arg13[%c35_238, %c84_239] : memref<56x168xf32, #tpu.memory_space<vmem>>, vector<1x84xf32>
    %210 = arith.maximumf %208, %209 : vector<1x84xf32>
    %211 = arith.maximumf %207, %210 : vector<1x84xf32>
    %c17_240 = arith.constant 17 : index
    %c0_241 = arith.constant 0 : index
    %212 = vector.load %arg14[%c17_240, %c0_241] : memref<28x84xf32, #tpu.memory_space<vmem>>, vector<1x84xf32>
    tpu.vector_store %arg14[%c17_240, %c0_241], %211 {strides = array<i32>} : memref<28x84xf32, #tpu.memory_space<vmem>>, vector<1x84xf32>,
    %c36_242 = arith.constant 36 : index
    %c0_243 = arith.constant 0 : index
    %213 = vector.load %arg13[%c36_242, %c0_243] : memref<56x168xf32, #tpu.memory_space<vmem>>, vector<1x84xf32>
    %c36_244 = arith.constant 36 : index
    %c84_245 = arith.constant 84 : index
    %214 = vector.load %arg13[%c36_244, %c84_245] : memref<56x168xf32, #tpu.memory_space<vmem>>, vector<1x84xf32>
    %215 = arith.maximumf %213, %214 : vector<1x84xf32>
    %c37 = arith.constant 37 : index
    %c0_246 = arith.constant 0 : index
    %216 = vector.load %arg13[%c37, %c0_246] : memref<56x168xf32, #tpu.memory_space<vmem>>, vector<1x84xf32>
    %c37_247 = arith.constant 37 : index
    %c84_248 = arith.constant 84 : index
    %217 = vector.load %arg13[%c37_247, %c84_248] : memref<56x168xf32, #tpu.memory_space<vmem>>, vector<1x84xf32>
    %218 = arith.maximumf %216, %217 : vector<1x84xf32>
    %219 = arith.maximumf %215, %218 : vector<1x84xf32>
    %c18_249 = arith.constant 18 : index
    %c0_250 = arith.constant 0 : index
    %220 = vector.load %arg14[%c18_249, %c0_250] : memref<28x84xf32, #tpu.memory_space<vmem>>, vector<1x84xf32>
    tpu.vector_store %arg14[%c18_249, %c0_250], %219 {strides = array<i32>} : memref<28x84xf32, #tpu.memory_space<vmem>>, vector<1x84xf32>,
    %c38 = arith.constant 38 : index
    %c0_251 = arith.constant 0 : index
    %221 = vector.load %arg13[%c38, %c0_251] : memref<56x168xf32, #tpu.memory_space<vmem>>, vector<1x84xf32>
    %c38_252 = arith.constant 38 : index
    %c84_253 = arith.constant 84 : index
    %222 = vector.load %arg13[%c38_252, %c84_253] : memref<56x168xf32, #tpu.memory_space<vmem>>, vector<1x84xf32>
    %223 = arith.maximumf %221, %222 : vector<1x84xf32>
    %c39 = arith.constant 39 : index
    %c0_254 = arith.constant 0 : index
    %224 = vector.load %arg13[%c39, %c0_254] : memref<56x168xf32, #tpu.memory_space<vmem>>, vector<1x84xf32>
    %c39_255 = arith.constant 39 : index
    %c84_256 = arith.constant 84 : index
    %225 = vector.load %arg13[%c39_255, %c84_256] : memref<56x168xf32, #tpu.memory_space<vmem>>, vector<1x84xf32>
    %226 = arith.maximumf %224, %225 : vector<1x84xf32>
    %227 = arith.maximumf %223, %226 : vector<1x84xf32>
    %c19_257 = arith.constant 19 : index
    %c0_258 = arith.constant 0 : index
    %228 = vector.load %arg14[%c19_257, %c0_258] : memref<28x84xf32, #tpu.memory_space<vmem>>, vector<1x84xf32>
    tpu.vector_store %arg14[%c19_257, %c0_258], %227 {strides = array<i32>} : memref<28x84xf32, #tpu.memory_space<vmem>>, vector<1x84xf32>,
    %c40 = arith.constant 40 : index
    %c0_259 = arith.constant 0 : index
    %229 = vector.load %arg13[%c40, %c0_259] : memref<56x168xf32, #tpu.memory_space<vmem>>, vector<1x84xf32>
    %c40_260 = arith.constant 40 : index
    %c84_261 = arith.constant 84 : index
    %230 = vector.load %arg13[%c40_260, %c84_261] : memref<56x168xf32, #tpu.memory_space<vmem>>, vector<1x84xf32>
    %231 = arith.maximumf %229, %230 : vector<1x84xf32>
    %c41 = arith.constant 41 : index
    %c0_262 = arith.constant 0 : index
    %232 = vector.load %arg13[%c41, %c0_262] : memref<56x168xf32, #tpu.memory_space<vmem>>, vector<1x84xf32>
    %c41_263 = arith.constant 41 : index
    %c84_264 = arith.constant 84 : index
    %233 = vector.load %arg13[%c41_263, %c84_264] : memref<56x168xf32, #tpu.memory_space<vmem>>, vector<1x84xf32>
    %234 = arith.maximumf %232, %233 : vector<1x84xf32>
    %235 = arith.maximumf %231, %234 : vector<1x84xf32>
    %c20_265 = arith.constant 20 : index
    %c0_266 = arith.constant 0 : index
    %236 = vector.load %arg14[%c20_265, %c0_266] : memref<28x84xf32, #tpu.memory_space<vmem>>, vector<1x84xf32>
    tpu.vector_store %arg14[%c20_265, %c0_266], %235 {strides = array<i32>} : memref<28x84xf32, #tpu.memory_space<vmem>>, vector<1x84xf32>,
    %c42 = arith.constant 42 : index
    %c0_267 = arith.constant 0 : index
    %237 = vector.load %arg13[%c42, %c0_267] : memref<56x168xf32, #tpu.memory_space<vmem>>, vector<1x84xf32>
    %c42_268 = arith.constant 42 : index
    %c84_269 = arith.constant 84 : index
    %238 = vector.load %arg13[%c42_268, %c84_269] : memref<56x168xf32, #tpu.memory_space<vmem>>, vector<1x84xf32>
    %239 = arith.maximumf %237, %238 : vector<1x84xf32>
    %c43 = arith.constant 43 : index
    %c0_270 = arith.constant 0 : index
    %240 = vector.load %arg13[%c43, %c0_270] : memref<56x168xf32, #tpu.memory_space<vmem>>, vector<1x84xf32>
    %c43_271 = arith.constant 43 : index
    %c84_272 = arith.constant 84 : index
    %241 = vector.load %arg13[%c43_271, %c84_272] : memref<56x168xf32, #tpu.memory_space<vmem>>, vector<1x84xf32>
    %242 = arith.maximumf %240, %241 : vector<1x84xf32>
    %243 = arith.maximumf %239, %242 : vector<1x84xf32>
    %c21_273 = arith.constant 21 : index
    %c0_274 = arith.constant 0 : index
    %244 = vector.load %arg14[%c21_273, %c0_274] : memref<28x84xf32, #tpu.memory_space<vmem>>, vector<1x84xf32>
    tpu.vector_store %arg14[%c21_273, %c0_274], %243 {strides = array<i32>} : memref<28x84xf32, #tpu.memory_space<vmem>>, vector<1x84xf32>,
    %c44 = arith.constant 44 : index
    %c0_275 = arith.constant 0 : index
    %245 = vector.load %arg13[%c44, %c0_275] : memref<56x168xf32, #tpu.memory_space<vmem>>, vector<1x84xf32>
    %c44_276 = arith.constant 44 : index
    %c84_277 = arith.constant 84 : index
    %246 = vector.load %arg13[%c44_276, %c84_277] : memref<56x168xf32, #tpu.memory_space<vmem>>, vector<1x84xf32>
    %247 = arith.maximumf %245, %246 : vector<1x84xf32>
    %c45 = arith.constant 45 : index
    %c0_278 = arith.constant 0 : index
    %248 = vector.load %arg13[%c45, %c0_278] : memref<56x168xf32, #tpu.memory_space<vmem>>, vector<1x84xf32>
    %c45_279 = arith.constant 45 : index
    %c84_280 = arith.constant 84 : index
    %249 = vector.load %arg13[%c45_279, %c84_280] : memref<56x168xf32, #tpu.memory_space<vmem>>, vector<1x84xf32>
    %250 = arith.maximumf %248, %249 : vector<1x84xf32>
    %251 = arith.maximumf %247, %250 : vector<1x84xf32>
    %c22_281 = arith.constant 22 : index
    %c0_282 = arith.constant 0 : index
    %252 = vector.load %arg14[%c22_281, %c0_282] : memref<28x84xf32, #tpu.memory_space<vmem>>, vector<1x84xf32>
    tpu.vector_store %arg14[%c22_281, %c0_282], %251 {strides = array<i32>} : memref<28x84xf32, #tpu.memory_space<vmem>>, vector<1x84xf32>,
    %c46 = arith.constant 46 : index
    %c0_283 = arith.constant 0 : index
    %253 = vector.load %arg13[%c46, %c0_283] : memref<56x168xf32, #tpu.memory_space<vmem>>, vector<1x84xf32>
    %c46_284 = arith.constant 46 : index
    %c84_285 = arith.constant 84 : index
    %254 = vector.load %arg13[%c46_284, %c84_285] : memref<56x168xf32, #tpu.memory_space<vmem>>, vector<1x84xf32>
    %255 = arith.maximumf %253, %254 : vector<1x84xf32>
    %c47 = arith.constant 47 : index
    %c0_286 = arith.constant 0 : index
    %256 = vector.load %arg13[%c47, %c0_286] : memref<56x168xf32, #tpu.memory_space<vmem>>, vector<1x84xf32>
    %c47_287 = arith.constant 47 : index
    %c84_288 = arith.constant 84 : index
    %257 = vector.load %arg13[%c47_287, %c84_288] : memref<56x168xf32, #tpu.memory_space<vmem>>, vector<1x84xf32>
    %258 = arith.maximumf %256, %257 : vector<1x84xf32>
    %259 = arith.maximumf %255, %258 : vector<1x84xf32>
    %c23_289 = arith.constant 23 : index
    %c0_290 = arith.constant 0 : index
    %260 = vector.load %arg14[%c23_289, %c0_290] : memref<28x84xf32, #tpu.memory_space<vmem>>, vector<1x84xf32>
    tpu.vector_store %arg14[%c23_289, %c0_290], %259 {strides = array<i32>} : memref<28x84xf32, #tpu.memory_space<vmem>>, vector<1x84xf32>,
    %c48 = arith.constant 48 : index
    %c0_291 = arith.constant 0 : index
    %261 = vector.load %arg13[%c48, %c0_291] : memref<56x168xf32, #tpu.memory_space<vmem>>, vector<1x84xf32>
    %c48_292 = arith.constant 48 : index
    %c84_293 = arith.constant 84 : index
    %262 = vector.load %arg13[%c48_292, %c84_293] : memref<56x168xf32, #tpu.memory_space<vmem>>, vector<1x84xf32>
    %263 = arith.maximumf %261, %262 : vector<1x84xf32>
    %c49 = arith.constant 49 : index
    %c0_294 = arith.constant 0 : index
    %264 = vector.load %arg13[%c49, %c0_294] : memref<56x168xf32, #tpu.memory_space<vmem>>, vector<1x84xf32>
    %c49_295 = arith.constant 49 : index
    %c84_296 = arith.constant 84 : index
    %265 = vector.load %arg13[%c49_295, %c84_296] : memref<56x168xf32, #tpu.memory_space<vmem>>, vector<1x84xf32>
    %266 = arith.maximumf %264, %265 : vector<1x84xf32>
    %267 = arith.maximumf %263, %266 : vector<1x84xf32>
    %c24_297 = arith.constant 24 : index
    %c0_298 = arith.constant 0 : index
    %268 = vector.load %arg14[%c24_297, %c0_298] : memref<28x84xf32, #tpu.memory_space<vmem>>, vector<1x84xf32>
    tpu.vector_store %arg14[%c24_297, %c0_298], %267 {strides = array<i32>} : memref<28x84xf32, #tpu.memory_space<vmem>>, vector<1x84xf32>,
    %c50 = arith.constant 50 : index
    %c0_299 = arith.constant 0 : index
    %269 = vector.load %arg13[%c50, %c0_299] : memref<56x168xf32, #tpu.memory_space<vmem>>, vector<1x84xf32>
    %c50_300 = arith.constant 50 : index
    %c84_301 = arith.constant 84 : index
    %270 = vector.load %arg13[%c50_300, %c84_301] : memref<56x168xf32, #tpu.memory_space<vmem>>, vector<1x84xf32>
    %271 = arith.maximumf %269, %270 : vector<1x84xf32>
    %c51 = arith.constant 51 : index
    %c0_302 = arith.constant 0 : index
    %272 = vector.load %arg13[%c51, %c0_302] : memref<56x168xf32, #tpu.memory_space<vmem>>, vector<1x84xf32>
    %c51_303 = arith.constant 51 : index
    %c84_304 = arith.constant 84 : index
    %273 = vector.load %arg13[%c51_303, %c84_304] : memref<56x168xf32, #tpu.memory_space<vmem>>, vector<1x84xf32>
    %274 = arith.maximumf %272, %273 : vector<1x84xf32>
    %275 = arith.maximumf %271, %274 : vector<1x84xf32>
    %c25_305 = arith.constant 25 : index
    %c0_306 = arith.constant 0 : index
    %276 = vector.load %arg14[%c25_305, %c0_306] : memref<28x84xf32, #tpu.memory_space<vmem>>, vector<1x84xf32>
    tpu.vector_store %arg14[%c25_305, %c0_306], %275 {strides = array<i32>} : memref<28x84xf32, #tpu.memory_space<vmem>>, vector<1x84xf32>,
    %c52 = arith.constant 52 : index
    %c0_307 = arith.constant 0 : index
    %277 = vector.load %arg13[%c52, %c0_307] : memref<56x168xf32, #tpu.memory_space<vmem>>, vector<1x84xf32>
    %c52_308 = arith.constant 52 : index
    %c84_309 = arith.constant 84 : index
    %278 = vector.load %arg13[%c52_308, %c84_309] : memref<56x168xf32, #tpu.memory_space<vmem>>, vector<1x84xf32>
    %279 = arith.maximumf %277, %278 : vector<1x84xf32>
    %c53 = arith.constant 53 : index
    %c0_310 = arith.constant 0 : index
    %280 = vector.load %arg13[%c53, %c0_310] : memref<56x168xf32, #tpu.memory_space<vmem>>, vector<1x84xf32>
    %c53_311 = arith.constant 53 : index
    %c84_312 = arith.constant 84 : index
    %281 = vector.load %arg13[%c53_311, %c84_312] : memref<56x168xf32, #tpu.memory_space<vmem>>, vector<1x84xf32>
    %282 = arith.maximumf %280, %281 : vector<1x84xf32>
    %283 = arith.maximumf %279, %282 : vector<1x84xf32>
    %c26_313 = arith.constant 26 : index
    %c0_314 = arith.constant 0 : index
    %284 = vector.load %arg14[%c26_313, %c0_314] : memref<28x84xf32, #tpu.memory_space<vmem>>, vector<1x84xf32>
    tpu.vector_store %arg14[%c26_313, %c0_314], %283 {strides = array<i32>} : memref<28x84xf32, #tpu.memory_space<vmem>>, vector<1x84xf32>,
    %c54 = arith.constant 54 : index
    %c0_315 = arith.constant 0 : index
    %285 = vector.load %arg13[%c54, %c0_315] : memref<56x168xf32, #tpu.memory_space<vmem>>, vector<1x84xf32>
    %c54_316 = arith.constant 54 : index
    %c84_317 = arith.constant 84 : index
    %286 = vector.load %arg13[%c54_316, %c84_317] : memref<56x168xf32, #tpu.memory_space<vmem>>, vector<1x84xf32>
    %287 = arith.maximumf %285, %286 : vector<1x84xf32>
    %c55 = arith.constant 55 : index
    %c0_318 = arith.constant 0 : index
    %288 = vector.load %arg13[%c55, %c0_318] : memref<56x168xf32, #tpu.memory_space<vmem>>, vector<1x84xf32>
    %c55_319 = arith.constant 55 : index
    %c84_320 = arith.constant 84 : index
    %289 = vector.load %arg13[%c55_319, %c84_320] : memref<56x168xf32, #tpu.memory_space<vmem>>, vector<1x84xf32>
    %290 = arith.maximumf %288, %289 : vector<1x84xf32>
    %291 = arith.maximumf %287, %290 : vector<1x84xf32>
    %c27_321 = arith.constant 27 : index
    %c0_322 = arith.constant 0 : index
    %292 = vector.load %arg14[%c27_321, %c0_322] : memref<28x84xf32, #tpu.memory_space<vmem>>, vector<1x84xf32>
    tpu.vector_store %arg14[%c27_321, %c0_322], %291 {strides = array<i32>} : memref<28x84xf32, #tpu.memory_space<vmem>>, vector<1x84xf32>,
    %c0_323 = arith.constant 0 : index
    %c0_324 = arith.constant 0 : index
    %293 = vector.load %arg14[%c0_323, %c0_324] : memref<28x84xf32, #tpu.memory_space<vmem>>, vector<10x84xf32>
    %c0_325 = arith.constant 0 : index
    %c0_326 = arith.constant 0 : index
    %294 = vector.load %arg15[%c0_325, %c0_326] : memref<20x420xf32, #tpu.memory_space<vmem>>, vector<10x84xf32>
    tpu.vector_store %arg15[%c0_325, %c0_326], %293 {strides = array<i32>} : memref<20x420xf32, #tpu.memory_space<vmem>>, vector<10x84xf32>,
    %c1_327 = arith.constant 1 : index
    %c0_328 = arith.constant 0 : index
    %295 = vector.load %arg14[%c1_327, %c0_328] : memref<28x84xf32, #tpu.memory_space<vmem>>, vector<10x84xf32>
    %c0_329 = arith.constant 0 : index
    %c84_330 = arith.constant 84 : index
    %296 = vector.load %arg15[%c0_329, %c84_330] : memref<20x420xf32, #tpu.memory_space<vmem>>, vector<10x84xf32>
    tpu.vector_store %arg15[%c0_329, %c84_330], %295 {strides = array<i32>} : memref<20x420xf32, #tpu.memory_space<vmem>>, vector<10x84xf32>,
    %c2_331 = arith.constant 2 : index
    %c0_332 = arith.constant 0 : index
    %297 = vector.load %arg14[%c2_331, %c0_332] : memref<28x84xf32, #tpu.memory_space<vmem>>, vector<10x84xf32>
    %c0_333 = arith.constant 0 : index
    %c168 = arith.constant 168 : index
    %298 = vector.load %arg15[%c0_333, %c168] : memref<20x420xf32, #tpu.memory_space<vmem>>, vector<10x84xf32>
    tpu.vector_store %arg15[%c0_333, %c168], %297 {strides = array<i32>} : memref<20x420xf32, #tpu.memory_space<vmem>>, vector<10x84xf32>,
    %c3_334 = arith.constant 3 : index
    %c0_335 = arith.constant 0 : index
    %299 = vector.load %arg14[%c3_334, %c0_335] : memref<28x84xf32, #tpu.memory_space<vmem>>, vector<10x84xf32>
    %c0_336 = arith.constant 0 : index
    %c252 = arith.constant 252 : index
    %300 = vector.load %arg15[%c0_336, %c252] : memref<20x420xf32, #tpu.memory_space<vmem>>, vector<10x84xf32>
    tpu.vector_store %arg15[%c0_336, %c252], %299 {strides = array<i32>} : memref<20x420xf32, #tpu.memory_space<vmem>>, vector<10x84xf32>,
    %c4_337 = arith.constant 4 : index
    %c0_338 = arith.constant 0 : index
    %301 = vector.load %arg14[%c4_337, %c0_338] : memref<28x84xf32, #tpu.memory_space<vmem>>, vector<10x84xf32>
    %c0_339 = arith.constant 0 : index
    %c336 = arith.constant 336 : index
    %302 = vector.load %arg15[%c0_339, %c336] : memref<20x420xf32, #tpu.memory_space<vmem>>, vector<10x84xf32>
    tpu.vector_store %arg15[%c0_339, %c336], %301 {strides = array<i32>} : memref<20x420xf32, #tpu.memory_space<vmem>>, vector<10x84xf32>,
    %c14_340 = arith.constant 14 : index
    %c0_341 = arith.constant 0 : index
    %303 = vector.load %arg14[%c14_340, %c0_341] : memref<28x84xf32, #tpu.memory_space<vmem>>, vector<10x84xf32>
    %c10_342 = arith.constant 10 : index
    %c0_343 = arith.constant 0 : index
    %304 = vector.load %arg15[%c10_342, %c0_343] : memref<20x420xf32, #tpu.memory_space<vmem>>, vector<10x84xf32>
    tpu.vector_store %arg15[%c10_342, %c0_343], %303 {strides = array<i32>} : memref<20x420xf32, #tpu.memory_space<vmem>>, vector<10x84xf32>,
    %c15_344 = arith.constant 15 : index
    %c0_345 = arith.constant 0 : index
    %305 = vector.load %arg14[%c15_344, %c0_345] : memref<28x84xf32, #tpu.memory_space<vmem>>, vector<10x84xf32>
    %c10_346 = arith.constant 10 : index
    %c84_347 = arith.constant 84 : index
    %306 = vector.load %arg15[%c10_346, %c84_347] : memref<20x420xf32, #tpu.memory_space<vmem>>, vector<10x84xf32>
    tpu.vector_store %arg15[%c10_346, %c84_347], %305 {strides = array<i32>} : memref<20x420xf32, #tpu.memory_space<vmem>>, vector<10x84xf32>,
    %c16_348 = arith.constant 16 : index
    %c0_349 = arith.constant 0 : index
    %307 = vector.load %arg14[%c16_348, %c0_349] : memref<28x84xf32, #tpu.memory_space<vmem>>, vector<10x84xf32>
    %c10_350 = arith.constant 10 : index
    %c168_351 = arith.constant 168 : index
    %308 = vector.load %arg15[%c10_350, %c168_351] : memref<20x420xf32, #tpu.memory_space<vmem>>, vector<10x84xf32>
    tpu.vector_store %arg15[%c10_350, %c168_351], %307 {strides = array<i32>} : memref<20x420xf32, #tpu.memory_space<vmem>>, vector<10x84xf32>,
    %c17_352 = arith.constant 17 : index
    %c0_353 = arith.constant 0 : index
    %309 = vector.load %arg14[%c17_352, %c0_353] : memref<28x84xf32, #tpu.memory_space<vmem>>, vector<10x84xf32>
    %c10_354 = arith.constant 10 : index
    %c252_355 = arith.constant 252 : index
    %310 = vector.load %arg15[%c10_354, %c252_355] : memref<20x420xf32, #tpu.memory_space<vmem>>, vector<10x84xf32>
    tpu.vector_store %arg15[%c10_354, %c252_355], %309 {strides = array<i32>} : memref<20x420xf32, #tpu.memory_space<vmem>>, vector<10x84xf32>,
    %c18_356 = arith.constant 18 : index
    %c0_357 = arith.constant 0 : index
    %311 = vector.load %arg14[%c18_356, %c0_357] : memref<28x84xf32, #tpu.memory_space<vmem>>, vector<10x84xf32>
    %c10_358 = arith.constant 10 : index
    %c336_359 = arith.constant 336 : index
    %312 = vector.load %arg15[%c10_358, %c336_359] : memref<20x420xf32, #tpu.memory_space<vmem>>, vector<10x84xf32>
    tpu.vector_store %arg15[%c10_358, %c336_359], %311 {strides = array<i32>} : memref<20x420xf32, #tpu.memory_space<vmem>>, vector<10x84xf32>,
    %c0_360 = arith.constant 0 : index
    %c0_361 = arith.constant 0 : index
    %313 = vector.load %arg15[%c0_360, %c0_361] : memref<20x420xf32, #tpu.memory_space<vmem>>, vector<20x420xf32>
    %c0_362 = arith.constant 0 : index
    %c0_363 = arith.constant 0 : index
    %314 = vector.load %arg3[%c0_362, %c0_363] : memref<420x160xf32, #tpu.memory_space<vmem>>, vector<420x160xf32>
    %cst_364 = arith.constant dense<0.000000e+00> : vector<20x160xf32>
    %315 = tpu.matmul %313, %314, %cst_364 {dimension_numbers = #tpu.dot_dimension_numbers<[1], [0], [0], [1], [0, 0, 1, 1], [], []>} : vector<20x420xf32>, vector<420x160xf32>, vector<20x160xf32> -> vector<20x160xf32>
    %c0_365 = arith.constant 0 : index
    %c0_366 = arith.constant 0 : index
    %316 = vector.load %arg4[%c0_365, %c0_366] : memref<1x160xf32, #tpu.memory_space<vmem>>, vector<1x160xf32>
    %317 = vector.broadcast %316 : vector<1x160xf32> to vector<20x160xf32>
    %318 = arith.addf %315, %317 : vector<20x160xf32>
    %cst_367 = arith.constant 0.000000e+00 : f32
    %319 = vector.broadcast %cst_367 : f32 to vector<20x160xf32>
    %320 = arith.maximumf %318, %319 : vector<20x160xf32>
    %c0_368 = arith.constant 0 : index
    %c0_369 = arith.constant 0 : index
    %321 = vector.load %arg16[%c0_368, %c0_369] : memref<20x160xf32, #tpu.memory_space<vmem>>, vector<20x160xf32>
    tpu.vector_store %arg16[%c0_368, %c0_369], %320 {strides = array<i32>} : memref<20x160xf32, #tpu.memory_space<vmem>>, vector<20x160xf32>,
    %c0_370 = arith.constant 0 : index
    %c0_371 = arith.constant 0 : index
    %322 = vector.load %arg16[%c0_370, %c0_371] : memref<20x160xf32, #tpu.memory_space<vmem>>, vector<1x80xf32>
    %c0_372 = arith.constant 0 : index
    %c80 = arith.constant 80 : index
    %323 = vector.load %arg16[%c0_372, %c80] : memref<20x160xf32, #tpu.memory_space<vmem>>, vector<1x80xf32>
    %324 = arith.maximumf %322, %323 : vector<1x80xf32>
    %c1_373 = arith.constant 1 : index
    %c0_374 = arith.constant 0 : index
    %325 = vector.load %arg16[%c1_373, %c0_374] : memref<20x160xf32, #tpu.memory_space<vmem>>, vector<1x80xf32>
    %c1_375 = arith.constant 1 : index
    %c80_376 = arith.constant 80 : index
    %326 = vector.load %arg16[%c1_375, %c80_376] : memref<20x160xf32, #tpu.memory_space<vmem>>, vector<1x80xf32>
    %327 = arith.maximumf %325, %326 : vector<1x80xf32>
    %328 = arith.maximumf %324, %327 : vector<1x80xf32>
    %c0_377 = arith.constant 0 : index
    %c0_378 = arith.constant 0 : index
    %329 = vector.load %arg17[%c0_377, %c0_378] : memref<10x80xf32, #tpu.memory_space<vmem>>, vector<1x80xf32>
    tpu.vector_store %arg17[%c0_377, %c0_378], %328 {strides = array<i32>} : memref<10x80xf32, #tpu.memory_space<vmem>>, vector<1x80xf32>,
    %c2_379 = arith.constant 2 : index
    %c0_380 = arith.constant 0 : index
    %330 = vector.load %arg16[%c2_379, %c0_380] : memref<20x160xf32, #tpu.memory_space<vmem>>, vector<1x80xf32>
    %c2_381 = arith.constant 2 : index
    %c80_382 = arith.constant 80 : index
    %331 = vector.load %arg16[%c2_381, %c80_382] : memref<20x160xf32, #tpu.memory_space<vmem>>, vector<1x80xf32>
    %332 = arith.maximumf %330, %331 : vector<1x80xf32>
    %c3_383 = arith.constant 3 : index
    %c0_384 = arith.constant 0 : index
    %333 = vector.load %arg16[%c3_383, %c0_384] : memref<20x160xf32, #tpu.memory_space<vmem>>, vector<1x80xf32>
    %c3_385 = arith.constant 3 : index
    %c80_386 = arith.constant 80 : index
    %334 = vector.load %arg16[%c3_385, %c80_386] : memref<20x160xf32, #tpu.memory_space<vmem>>, vector<1x80xf32>
    %335 = arith.maximumf %333, %334 : vector<1x80xf32>
    %336 = arith.maximumf %332, %335 : vector<1x80xf32>
    %c1_387 = arith.constant 1 : index
    %c0_388 = arith.constant 0 : index
    %337 = vector.load %arg17[%c1_387, %c0_388] : memref<10x80xf32, #tpu.memory_space<vmem>>, vector<1x80xf32>
    tpu.vector_store %arg17[%c1_387, %c0_388], %336 {strides = array<i32>} : memref<10x80xf32, #tpu.memory_space<vmem>>, vector<1x80xf32>,
    %c4_389 = arith.constant 4 : index
    %c0_390 = arith.constant 0 : index
    %338 = vector.load %arg16[%c4_389, %c0_390] : memref<20x160xf32, #tpu.memory_space<vmem>>, vector<1x80xf32>
    %c4_391 = arith.constant 4 : index
    %c80_392 = arith.constant 80 : index
    %339 = vector.load %arg16[%c4_391, %c80_392] : memref<20x160xf32, #tpu.memory_space<vmem>>, vector<1x80xf32>
    %340 = arith.maximumf %338, %339 : vector<1x80xf32>
    %c5_393 = arith.constant 5 : index
    %c0_394 = arith.constant 0 : index
    %341 = vector.load %arg16[%c5_393, %c0_394] : memref<20x160xf32, #tpu.memory_space<vmem>>, vector<1x80xf32>
    %c5_395 = arith.constant 5 : index
    %c80_396 = arith.constant 80 : index
    %342 = vector.load %arg16[%c5_395, %c80_396] : memref<20x160xf32, #tpu.memory_space<vmem>>, vector<1x80xf32>
    %343 = arith.maximumf %341, %342 : vector<1x80xf32>
    %344 = arith.maximumf %340, %343 : vector<1x80xf32>
    %c2_397 = arith.constant 2 : index
    %c0_398 = arith.constant 0 : index
    %345 = vector.load %arg17[%c2_397, %c0_398] : memref<10x80xf32, #tpu.memory_space<vmem>>, vector<1x80xf32>
    tpu.vector_store %arg17[%c2_397, %c0_398], %344 {strides = array<i32>} : memref<10x80xf32, #tpu.memory_space<vmem>>, vector<1x80xf32>,
    %c6_399 = arith.constant 6 : index
    %c0_400 = arith.constant 0 : index
    %346 = vector.load %arg16[%c6_399, %c0_400] : memref<20x160xf32, #tpu.memory_space<vmem>>, vector<1x80xf32>
    %c6_401 = arith.constant 6 : index
    %c80_402 = arith.constant 80 : index
    %347 = vector.load %arg16[%c6_401, %c80_402] : memref<20x160xf32, #tpu.memory_space<vmem>>, vector<1x80xf32>
    %348 = arith.maximumf %346, %347 : vector<1x80xf32>
    %c7_403 = arith.constant 7 : index
    %c0_404 = arith.constant 0 : index
    %349 = vector.load %arg16[%c7_403, %c0_404] : memref<20x160xf32, #tpu.memory_space<vmem>>, vector<1x80xf32>
    %c7_405 = arith.constant 7 : index
    %c80_406 = arith.constant 80 : index
    %350 = vector.load %arg16[%c7_405, %c80_406] : memref<20x160xf32, #tpu.memory_space<vmem>>, vector<1x80xf32>
    %351 = arith.maximumf %349, %350 : vector<1x80xf32>
    %352 = arith.maximumf %348, %351 : vector<1x80xf32>
    %c3_407 = arith.constant 3 : index
    %c0_408 = arith.constant 0 : index
    %353 = vector.load %arg17[%c3_407, %c0_408] : memref<10x80xf32, #tpu.memory_space<vmem>>, vector<1x80xf32>
    tpu.vector_store %arg17[%c3_407, %c0_408], %352 {strides = array<i32>} : memref<10x80xf32, #tpu.memory_space<vmem>>, vector<1x80xf32>,
    %c8_409 = arith.constant 8 : index
    %c0_410 = arith.constant 0 : index
    %354 = vector.load %arg16[%c8_409, %c0_410] : memref<20x160xf32, #tpu.memory_space<vmem>>, vector<1x80xf32>
    %c8_411 = arith.constant 8 : index
    %c80_412 = arith.constant 80 : index
    %355 = vector.load %arg16[%c8_411, %c80_412] : memref<20x160xf32, #tpu.memory_space<vmem>>, vector<1x80xf32>
    %356 = arith.maximumf %354, %355 : vector<1x80xf32>
    %c9_413 = arith.constant 9 : index
    %c0_414 = arith.constant 0 : index
    %357 = vector.load %arg16[%c9_413, %c0_414] : memref<20x160xf32, #tpu.memory_space<vmem>>, vector<1x80xf32>
    %c9_415 = arith.constant 9 : index
    %c80_416 = arith.constant 80 : index
    %358 = vector.load %arg16[%c9_415, %c80_416] : memref<20x160xf32, #tpu.memory_space<vmem>>, vector<1x80xf32>
    %359 = arith.maximumf %357, %358 : vector<1x80xf32>
    %360 = arith.maximumf %356, %359 : vector<1x80xf32>
    %c4_417 = arith.constant 4 : index
    %c0_418 = arith.constant 0 : index
    %361 = vector.load %arg17[%c4_417, %c0_418] : memref<10x80xf32, #tpu.memory_space<vmem>>, vector<1x80xf32>
    tpu.vector_store %arg17[%c4_417, %c0_418], %360 {strides = array<i32>} : memref<10x80xf32, #tpu.memory_space<vmem>>, vector<1x80xf32>,
    %c10_419 = arith.constant 10 : index
    %c0_420 = arith.constant 0 : index
    %362 = vector.load %arg16[%c10_419, %c0_420] : memref<20x160xf32, #tpu.memory_space<vmem>>, vector<1x80xf32>
    %c10_421 = arith.constant 10 : index
    %c80_422 = arith.constant 80 : index
    %363 = vector.load %arg16[%c10_421, %c80_422] : memref<20x160xf32, #tpu.memory_space<vmem>>, vector<1x80xf32>
    %364 = arith.maximumf %362, %363 : vector<1x80xf32>
    %c11_423 = arith.constant 11 : index
    %c0_424 = arith.constant 0 : index
    %365 = vector.load %arg16[%c11_423, %c0_424] : memref<20x160xf32, #tpu.memory_space<vmem>>, vector<1x80xf32>
    %c11_425 = arith.constant 11 : index
    %c80_426 = arith.constant 80 : index
    %366 = vector.load %arg16[%c11_425, %c80_426] : memref<20x160xf32, #tpu.memory_space<vmem>>, vector<1x80xf32>
    %367 = arith.maximumf %365, %366 : vector<1x80xf32>
    %368 = arith.maximumf %364, %367 : vector<1x80xf32>
    %c5_427 = arith.constant 5 : index
    %c0_428 = arith.constant 0 : index
    %369 = vector.load %arg17[%c5_427, %c0_428] : memref<10x80xf32, #tpu.memory_space<vmem>>, vector<1x80xf32>
    tpu.vector_store %arg17[%c5_427, %c0_428], %368 {strides = array<i32>} : memref<10x80xf32, #tpu.memory_space<vmem>>, vector<1x80xf32>,
    %c12_429 = arith.constant 12 : index
    %c0_430 = arith.constant 0 : index
    %370 = vector.load %arg16[%c12_429, %c0_430] : memref<20x160xf32, #tpu.memory_space<vmem>>, vector<1x80xf32>
    %c12_431 = arith.constant 12 : index
    %c80_432 = arith.constant 80 : index
    %371 = vector.load %arg16[%c12_431, %c80_432] : memref<20x160xf32, #tpu.memory_space<vmem>>, vector<1x80xf32>
    %372 = arith.maximumf %370, %371 : vector<1x80xf32>
    %c13_433 = arith.constant 13 : index
    %c0_434 = arith.constant 0 : index
    %373 = vector.load %arg16[%c13_433, %c0_434] : memref<20x160xf32, #tpu.memory_space<vmem>>, vector<1x80xf32>
    %c13_435 = arith.constant 13 : index
    %c80_436 = arith.constant 80 : index
    %374 = vector.load %arg16[%c13_435, %c80_436] : memref<20x160xf32, #tpu.memory_space<vmem>>, vector<1x80xf32>
    %375 = arith.maximumf %373, %374 : vector<1x80xf32>
    %376 = arith.maximumf %372, %375 : vector<1x80xf32>
    %c6_437 = arith.constant 6 : index
    %c0_438 = arith.constant 0 : index
    %377 = vector.load %arg17[%c6_437, %c0_438] : memref<10x80xf32, #tpu.memory_space<vmem>>, vector<1x80xf32>
    tpu.vector_store %arg17[%c6_437, %c0_438], %376 {strides = array<i32>} : memref<10x80xf32, #tpu.memory_space<vmem>>, vector<1x80xf32>,
    %c14_439 = arith.constant 14 : index
    %c0_440 = arith.constant 0 : index
    %378 = vector.load %arg16[%c14_439, %c0_440] : memref<20x160xf32, #tpu.memory_space<vmem>>, vector<1x80xf32>
    %c14_441 = arith.constant 14 : index
    %c80_442 = arith.constant 80 : index
    %379 = vector.load %arg16[%c14_441, %c80_442] : memref<20x160xf32, #tpu.memory_space<vmem>>, vector<1x80xf32>
    %380 = arith.maximumf %378, %379 : vector<1x80xf32>
    %c15_443 = arith.constant 15 : index
    %c0_444 = arith.constant 0 : index
    %381 = vector.load %arg16[%c15_443, %c0_444] : memref<20x160xf32, #tpu.memory_space<vmem>>, vector<1x80xf32>
    %c15_445 = arith.constant 15 : index
    %c80_446 = arith.constant 80 : index
    %382 = vector.load %arg16[%c15_445, %c80_446] : memref<20x160xf32, #tpu.memory_space<vmem>>, vector<1x80xf32>
    %383 = arith.maximumf %381, %382 : vector<1x80xf32>
    %384 = arith.maximumf %380, %383 : vector<1x80xf32>
    %c7_447 = arith.constant 7 : index
    %c0_448 = arith.constant 0 : index
    %385 = vector.load %arg17[%c7_447, %c0_448] : memref<10x80xf32, #tpu.memory_space<vmem>>, vector<1x80xf32>
    tpu.vector_store %arg17[%c7_447, %c0_448], %384 {strides = array<i32>} : memref<10x80xf32, #tpu.memory_space<vmem>>, vector<1x80xf32>,
    %c16_449 = arith.constant 16 : index
    %c0_450 = arith.constant 0 : index
    %386 = vector.load %arg16[%c16_449, %c0_450] : memref<20x160xf32, #tpu.memory_space<vmem>>, vector<1x80xf32>
    %c16_451 = arith.constant 16 : index
    %c80_452 = arith.constant 80 : index
    %387 = vector.load %arg16[%c16_451, %c80_452] : memref<20x160xf32, #tpu.memory_space<vmem>>, vector<1x80xf32>
    %388 = arith.maximumf %386, %387 : vector<1x80xf32>
    %c17_453 = arith.constant 17 : index
    %c0_454 = arith.constant 0 : index
    %389 = vector.load %arg16[%c17_453, %c0_454] : memref<20x160xf32, #tpu.memory_space<vmem>>, vector<1x80xf32>
    %c17_455 = arith.constant 17 : index
    %c80_456 = arith.constant 80 : index
    %390 = vector.load %arg16[%c17_455, %c80_456] : memref<20x160xf32, #tpu.memory_space<vmem>>, vector<1x80xf32>
    %391 = arith.maximumf %389, %390 : vector<1x80xf32>
    %392 = arith.maximumf %388, %391 : vector<1x80xf32>
    %c8_457 = arith.constant 8 : index
    %c0_458 = arith.constant 0 : index
    %393 = vector.load %arg17[%c8_457, %c0_458] : memref<10x80xf32, #tpu.memory_space<vmem>>, vector<1x80xf32>
    tpu.vector_store %arg17[%c8_457, %c0_458], %392 {strides = array<i32>} : memref<10x80xf32, #tpu.memory_space<vmem>>, vector<1x80xf32>,
    %c18_459 = arith.constant 18 : index
    %c0_460 = arith.constant 0 : index
    %394 = vector.load %arg16[%c18_459, %c0_460] : memref<20x160xf32, #tpu.memory_space<vmem>>, vector<1x80xf32>
    %c18_461 = arith.constant 18 : index
    %c80_462 = arith.constant 80 : index
    %395 = vector.load %arg16[%c18_461, %c80_462] : memref<20x160xf32, #tpu.memory_space<vmem>>, vector<1x80xf32>
    %396 = arith.maximumf %394, %395 : vector<1x80xf32>
    %c19_463 = arith.constant 19 : index
    %c0_464 = arith.constant 0 : index
    %397 = vector.load %arg16[%c19_463, %c0_464] : memref<20x160xf32, #tpu.memory_space<vmem>>, vector<1x80xf32>
    %c19_465 = arith.constant 19 : index
    %c80_466 = arith.constant 80 : index
    %398 = vector.load %arg16[%c19_465, %c80_466] : memref<20x160xf32, #tpu.memory_space<vmem>>, vector<1x80xf32>
    %399 = arith.maximumf %397, %398 : vector<1x80xf32>
    %400 = arith.maximumf %396, %399 : vector<1x80xf32>
    %c9_467 = arith.constant 9 : index
    %c0_468 = arith.constant 0 : index
    %401 = vector.load %arg17[%c9_467, %c0_468] : memref<10x80xf32, #tpu.memory_space<vmem>>, vector<1x80xf32>
    tpu.vector_store %arg17[%c9_467, %c0_468], %400 {strides = array<i32>} : memref<10x80xf32, #tpu.memory_space<vmem>>, vector<1x80xf32>,
    %c0_469 = arith.constant 0 : index
    %c0_470 = arith.constant 0 : index
    %402 = vector.load %arg17[%c0_469, %c0_470] : memref<10x80xf32, #tpu.memory_space<vmem>>, vector<1x80xf32>
    %c0_471 = arith.constant 0 : index
    %c0_472 = arith.constant 0 : index
    %403 = vector.load %arg18[%c0_471, %c0_472] : memref<2x400xf32, #tpu.memory_space<vmem>>, vector<1x80xf32>
    tpu.vector_store %arg18[%c0_471, %c0_472], %402 {strides = array<i32>} : memref<2x400xf32, #tpu.memory_space<vmem>>, vector<1x80xf32>,
    %c1_473 = arith.constant 1 : index
    %c0_474 = arith.constant 0 : index
    %404 = vector.load %arg17[%c1_473, %c0_474] : memref<10x80xf32, #tpu.memory_space<vmem>>, vector<1x80xf32>
    %c0_475 = arith.constant 0 : index
    %c80_476 = arith.constant 80 : index
    %405 = vector.load %arg18[%c0_475, %c80_476] : memref<2x400xf32, #tpu.memory_space<vmem>>, vector<1x80xf32>
    tpu.vector_store %arg18[%c0_475, %c80_476], %404 {strides = array<i32>} : memref<2x400xf32, #tpu.memory_space<vmem>>, vector<1x80xf32>,
    %c2_477 = arith.constant 2 : index
    %c0_478 = arith.constant 0 : index
    %406 = vector.load %arg17[%c2_477, %c0_478] : memref<10x80xf32, #tpu.memory_space<vmem>>, vector<1x80xf32>
    %c0_479 = arith.constant 0 : index
    %c160_480 = arith.constant 160 : index
    %407 = vector.load %arg18[%c0_479, %c160_480] : memref<2x400xf32, #tpu.memory_space<vmem>>, vector<1x80xf32>
    tpu.vector_store %arg18[%c0_479, %c160_480], %406 {strides = array<i32>} : memref<2x400xf32, #tpu.memory_space<vmem>>, vector<1x80xf32>,
    %c3_481 = arith.constant 3 : index
    %c0_482 = arith.constant 0 : index
    %408 = vector.load %arg17[%c3_481, %c0_482] : memref<10x80xf32, #tpu.memory_space<vmem>>, vector<1x80xf32>
    %c0_483 = arith.constant 0 : index
    %c240 = arith.constant 240 : index
    %409 = vector.load %arg18[%c0_483, %c240] : memref<2x400xf32, #tpu.memory_space<vmem>>, vector<1x80xf32>
    tpu.vector_store %arg18[%c0_483, %c240], %408 {strides = array<i32>} : memref<2x400xf32, #tpu.memory_space<vmem>>, vector<1x80xf32>,
    %c4_484 = arith.constant 4 : index
    %c0_485 = arith.constant 0 : index
    %410 = vector.load %arg17[%c4_484, %c0_485] : memref<10x80xf32, #tpu.memory_space<vmem>>, vector<1x80xf32>
    %c0_486 = arith.constant 0 : index
    %c320_487 = arith.constant 320 : index
    %411 = vector.load %arg18[%c0_486, %c320_487] : memref<2x400xf32, #tpu.memory_space<vmem>>, vector<1x80xf32>
    tpu.vector_store %arg18[%c0_486, %c320_487], %410 {strides = array<i32>} : memref<2x400xf32, #tpu.memory_space<vmem>>, vector<1x80xf32>,
    %c5_488 = arith.constant 5 : index
    %c0_489 = arith.constant 0 : index
    %412 = vector.load %arg17[%c5_488, %c0_489] : memref<10x80xf32, #tpu.memory_space<vmem>>, vector<1x80xf32>
    %c1_490 = arith.constant 1 : index
    %c0_491 = arith.constant 0 : index
    %413 = vector.load %arg18[%c1_490, %c0_491] : memref<2x400xf32, #tpu.memory_space<vmem>>, vector<1x80xf32>
    tpu.vector_store %arg18[%c1_490, %c0_491], %412 {strides = array<i32>} : memref<2x400xf32, #tpu.memory_space<vmem>>, vector<1x80xf32>,
    %c6_492 = arith.constant 6 : index
    %c0_493 = arith.constant 0 : index
    %414 = vector.load %arg17[%c6_492, %c0_493] : memref<10x80xf32, #tpu.memory_space<vmem>>, vector<1x80xf32>
    %c1_494 = arith.constant 1 : index
    %c80_495 = arith.constant 80 : index
    %415 = vector.load %arg18[%c1_494, %c80_495] : memref<2x400xf32, #tpu.memory_space<vmem>>, vector<1x80xf32>
    tpu.vector_store %arg18[%c1_494, %c80_495], %414 {strides = array<i32>} : memref<2x400xf32, #tpu.memory_space<vmem>>, vector<1x80xf32>,
    %c7_496 = arith.constant 7 : index
    %c0_497 = arith.constant 0 : index
    %416 = vector.load %arg17[%c7_496, %c0_497] : memref<10x80xf32, #tpu.memory_space<vmem>>, vector<1x80xf32>
    %c1_498 = arith.constant 1 : index
    %c160_499 = arith.constant 160 : index
    %417 = vector.load %arg18[%c1_498, %c160_499] : memref<2x400xf32, #tpu.memory_space<vmem>>, vector<1x80xf32>
    tpu.vector_store %arg18[%c1_498, %c160_499], %416 {strides = array<i32>} : memref<2x400xf32, #tpu.memory_space<vmem>>, vector<1x80xf32>,
    %c8_500 = arith.constant 8 : index
    %c0_501 = arith.constant 0 : index
    %418 = vector.load %arg17[%c8_500, %c0_501] : memref<10x80xf32, #tpu.memory_space<vmem>>, vector<1x80xf32>
    %c1_502 = arith.constant 1 : index
    %c240_503 = arith.constant 240 : index
    %419 = vector.load %arg18[%c1_502, %c240_503] : memref<2x400xf32, #tpu.memory_space<vmem>>, vector<1x80xf32>
    tpu.vector_store %arg18[%c1_502, %c240_503], %418 {strides = array<i32>} : memref<2x400xf32, #tpu.memory_space<vmem>>, vector<1x80xf32>,
    %c9_504 = arith.constant 9 : index
    %c0_505 = arith.constant 0 : index
    %420 = vector.load %arg17[%c9_504, %c0_505] : memref<10x80xf32, #tpu.memory_space<vmem>>, vector<1x80xf32>
    %c1_506 = arith.constant 1 : index
    %c320_507 = arith.constant 320 : index
    %421 = vector.load %arg18[%c1_506, %c320_507] : memref<2x400xf32, #tpu.memory_space<vmem>>, vector<1x80xf32>
    tpu.vector_store %arg18[%c1_506, %c320_507], %420 {strides = array<i32>} : memref<2x400xf32, #tpu.memory_space<vmem>>, vector<1x80xf32>,
    %c0_508 = arith.constant 0 : index
    %c0_509 = arith.constant 0 : index
    %422 = vector.load %arg18[%c0_508, %c0_509] : memref<2x400xf32, #tpu.memory_space<vmem>>, vector<2x400xf32>
    %c0_510 = arith.constant 0 : index
    %c0_511 = arith.constant 0 : index
    %423 = vector.load %arg5[%c0_510, %c0_511] : memref<400x128xf32, #tpu.memory_space<vmem>>, vector<400x128xf32>
    %cst_512 = arith.constant dense<0.000000e+00> : vector<2x128xf32>
    %424 = tpu.matmul %422, %423, %cst_512 {dimension_numbers = #tpu.dot_dimension_numbers<[1], [0], [0], [1], [0, 0, 1, 1], [], []>} : vector<2x400xf32>, vector<400x128xf32>, vector<2x128xf32> -> vector<2x128xf32>
    %c0_513 = arith.constant 0 : index
    %c0_514 = arith.constant 0 : index
    %425 = vector.load %arg6[%c0_513, %c0_514] : memref<1x128xf32, #tpu.memory_space<vmem>>, vector<1x128xf32>
    %426 = vector.broadcast %425 : vector<1x128xf32> to vector<2x128xf32>
    %427 = arith.addf %424, %426 : vector<2x128xf32>
    %cst_515 = arith.constant 0.000000e+00 : f32
    %428 = vector.broadcast %cst_515 : f32 to vector<2x128xf32>
    %429 = arith.maximumf %427, %428 : vector<2x128xf32>
    %c0_516 = arith.constant 0 : index
    %c0_517 = arith.constant 0 : index
    %430 = vector.load %arg7[%c0_516, %c0_517] : memref<128x128xf32, #tpu.memory_space<vmem>>, vector<128x128xf32>
    %cst_518 = arith.constant dense<0.000000e+00> : vector<2x128xf32>
    %431 = tpu.matmul %429, %430, %cst_518 {dimension_numbers = #tpu.dot_dimension_numbers<[1], [0], [0], [1], [0, 0, 1, 1], [], []>} : vector<2x128xf32>, vector<128x128xf32>, vector<2x128xf32> -> vector<2x128xf32>
    %c0_519 = arith.constant 0 : index
    %c0_520 = arith.constant 0 : index
    %432 = vector.load %arg8[%c0_519, %c0_520] : memref<1x128xf32, #tpu.memory_space<vmem>>, vector<1x128xf32>
    %433 = vector.broadcast %432 : vector<1x128xf32> to vector<2x128xf32>
    %434 = arith.addf %431, %433 : vector<2x128xf32>
    %cst_521 = arith.constant 0.000000e+00 : f32
    %435 = vector.broadcast %cst_521 : f32 to vector<2x128xf32>
    %436 = arith.maximumf %434, %435 : vector<2x128xf32>
    %c0_522 = arith.constant 0 : index
    %c0_523 = arith.constant 0 : index
    %437 = vector.load %arg9[%c0_522, %c0_523] : memref<128x128xf32, #tpu.memory_space<vmem>>, vector<128x128xf32>
    %cst_524 = arith.constant dense<0.000000e+00> : vector<2x128xf32>
    %438 = tpu.matmul %436, %437, %cst_524 {dimension_numbers = #tpu.dot_dimension_numbers<[1], [0], [0], [1], [0, 0, 1, 1], [], []>} : vector<2x128xf32>, vector<128x128xf32>, vector<2x128xf32> -> vector<2x128xf32>
    %c0_525 = arith.constant 0 : index
    %c0_526 = arith.constant 0 : index
    %439 = vector.load %arg10[%c0_525, %c0_526] : memref<1x128xf32, #tpu.memory_space<vmem>>, vector<1x128xf32>
    %440 = vector.broadcast %439 : vector<1x128xf32> to vector<2x128xf32>
    %441 = arith.addf %438, %440 : vector<2x128xf32>
    %c0_527 = arith.constant 0 : index
    %c0_528 = arith.constant 0 : index
    %442 = vector.load %arg11[%c0_527, %c0_528] : memref<2x128xf32, #tpu.memory_space<vmem>>, vector<2x128xf32>
    tpu.vector_store %arg11[%c0_527, %c0_528], %441 {strides = array<i32>} : memref<2x128xf32, #tpu.memory_space<vmem>>, vector<2x128xf32>,
    return
  }
}

</mosaic_0001>

<llo_original>
// kernel: lenet_forward.1
$region0: #{lenet_forward.1}
  #allocation0 [shape = 'u32[]', space=smem, size = 0x4, offset = 0x4, fixed_abs, tag = 'smem constant byte address 0x4 - core index']
  #allocation1 [shape = 'u32[144,128]{1,0:T(1,128)}', space=vmem, size = 0x12000, scoped, tag = 'internal scratch']
  #allocation2 [shape = 'f32[56,480]{1,0:T(8,128)}', space=vmem, size = 0x1c000, scoped, tag = 'scratch operand']
  #allocation3 [shape = 'f32[56,168]{1,0:T(8,128)}', space=vmem, size = 0xe000, scoped, tag = 'scratch operand']
  #allocation4 [shape = 'f32[28,84]{1,0:T(8,128)}', space=vmem, size = 0x4000, scoped, tag = 'scratch operand']
  #allocation5 [shape = 'f32[20,420]{1,0:T(8,128)}', space=vmem, size = 0xc000, scoped, tag = 'scratch operand']
  #allocation6 [shape = 'f32[20,160]{1,0:T(8,128)}', space=vmem, size = 0x6000, scoped, tag = 'scratch operand']
  #allocation7 [shape = 'f32[10,80]{1,0:T(8,128)}', space=vmem, size = 0x2000, scoped, tag = 'scratch operand']
  #allocation8 [shape = 'f32[2,400]{1,0:T(2,128)}', space=vmem, size = 0x1000, scoped, tag = 'scratch operand']
  %s0 = inlined_call_operand.vmem [shape: f32[192,32], index: 0, kind: input, shape index: {}]
  %s1 = inlined_call_operand.vmem [shape: f32[480,168], index: 1, kind: input, shape index: {}]
  %s2 = inlined_call_operand.vmem [shape: f32[1,168], index: 2, kind: input, shape index: {}]
  %s3 = inlined_call_operand.vmem [shape: f32[420,160], index: 3, kind: input, shape index: {}]
  %s4 = inlined_call_operand.vmem [shape: f32[1,160], index: 4, kind: input, shape index: {}]
  %s5 = inlined_call_operand.vmem [shape: f32[400,128], index: 5, kind: input, shape index: {}]
  %s6 = inlined_call_operand.vmem [shape: f32[1,128], index: 6, kind: input, shape index: {}]
  %s7 = inlined_call_operand.vmem [shape: f32[128,128], index: 7, kind: input, shape index: {}]
  %s8 = inlined_call_operand.vmem [shape: f32[1,128], index: 8, kind: input, shape index: {}]
  %s9 = inlined_call_operand.vmem [shape: f32[128,128], index: 9, kind: input, shape index: {}]
  %s10 = inlined_call_operand.vmem [shape: f32[1,128], index: 10, kind: input, shape index: {}]
  %s11 = inlined_call_operand.hbm [shape: f32[2,128], index: 11, kind: output, shape index: {}]
  %s12 = sld [smem:[#allocation0]]
  $region54: #{lenet_forward.1} parent=0
    _
  %s14 = ssub.s32 1, %s12
  %s15 = scalar_select 0, %s14, %s12
  $region1: #{lenet_forward.1} parent=0
    #allocation9 [shape = 'u8[1024]{0}', space=vmem, size = 0x400, scoped, tag = 'output window, operand 0, single buffered']
    #allocation10 [shape = 's32[1]{0}', space=sflag, size = 0x4, scoped, tag = 'scoped memory for lenet_forward.1']
    %16 = vsyncpa [#allocation10], 0
    // Predicated region
    $region2: #{lenet_forward.1} parent=1 // pred_check
      _
    $region3: #{lenet_forward.1} parent=1 // pred_check_branch
      %18 = sbr.rel (0) target = $region5
    $region4: #{lenet_forward.1} parent=1 // pred_region
      _
    $region5: #{lenet_forward.1} parent=1 // pred_fallthru
      _
    // Predicated region
    $region6: #{lenet_forward.1} parent=1 // pred_check
      _
    $region7: #{lenet_forward.1} parent=1 // pred_check_branch
      %20 = sbr.rel (0) target = $region9
    $region8: #{lenet_forward.1} parent=1 // pred_region
      _
    $region9: #{lenet_forward.1} parent=1 // pred_fallthru
      _
    // Predicated region
    $region10: #{lenet_forward.1} parent=1 // pred_check
      _
    $region11: #{lenet_forward.1} parent=1 // pred_check_branch
      %22 = sbr.rel (0) target = $region13
    $region12: #{lenet_forward.1} parent=1 // pred_region
      _
    $region13: #{lenet_forward.1} parent=1 // pred_fallthru
      _
    // Predicated region
    $region14: #{lenet_forward.1} parent=1 // pred_check
      _
    $region15: #{lenet_forward.1} parent=1 // pred_check_branch
      %24 = sbr.rel (0) target = $region17
    $region16: #{lenet_forward.1} parent=1 // pred_region
      _
    $region17: #{lenet_forward.1} parent=1 // pred_fallthru
      _
    // Predicated region
    $region18: #{lenet_forward.1} parent=1 // pred_check
      _
    $region19: #{lenet_forward.1} parent=1 // pred_check_branch
      %26 = sbr.rel (0) target = $region21
    $region20: #{lenet_forward.1} parent=1 // pred_region
      _
    $region21: #{lenet_forward.1} parent=1 // pred_fallthru
      _
    // Predicated region
    $region22: #{lenet_forward.1} parent=1 // pred_check
      _
    $region23: #{lenet_forward.1} parent=1 // pred_check_branch
      %28 = sbr.rel (0) target = $region25
    $region24: #{lenet_forward.1} parent=1 // pred_region
      _
    $region25: #{lenet_forward.1} parent=1 // pred_fallthru
      _
    // Predicated region
    $region26: #{lenet_forward.1} parent=1 // pred_check
      _
    $region27: #{lenet_forward.1} parent=1 // pred_check_branch
      %30 = sbr.rel (0) target = $region29
    $region28: #{lenet_forward.1} parent=1 // pred_region
      _
    $region29: #{lenet_forward.1} parent=1 // pred_fallthru
      _
    // Predicated region
    $region30: #{lenet_forward.1} parent=1 // pred_check
      _
    $region31: #{lenet_forward.1} parent=1 // pred_check_branch
      %32 = sbr.rel (0) target = $region33
    $region32: #{lenet_forward.1} parent=1 // pred_region
      _
    $region33: #{lenet_forward.1} parent=1 // pred_fallthru
      _
    // Predicated region
    $region34: #{lenet_forward.1} parent=1 // pred_check
      _
    $region35: #{lenet_forward.1} parent=1 // pred_check_branch
      %34 = sbr.rel (0) target = $region37
    $region36: #{lenet_forward.1} parent=1 // pred_region
      _
    $region37: #{lenet_forward.1} parent=1 // pred_fallthru
      _
    // Predicated region
    $region38: #{lenet_forward.1} parent=1 // pred_check
      _
    $region39: #{lenet_forward.1} parent=1 // pred_check_branch
      %36 = sbr.rel (0) target = $region41
    $region40: #{lenet_forward.1} parent=1 // pred_region
      _
    $region41: #{lenet_forward.1} parent=1 // pred_fallthru
      _
    // Predicated region
    $region42: #{lenet_forward.1} parent=1 // pred_check
      _
    $region43: #{lenet_forward.1} parent=1 // pred_check_branch
      %38 = sbr.rel (0) target = $region45
    $region44: #{lenet_forward.1} parent=1 // pred_region
      _
    $region45: #{lenet_forward.1} parent=1 // pred_fallthru
      _
    %v39 = vld [vmem:[%s0] sm:$0xff]
    %v40 = vld [vmem:[%s0 + $0x8] sm:$0xff]
    %v41 = vld [vmem:[%s0 + $0x10] sm:$0xff]
    %v42 = vld [vmem:[%s0 + $0x18] sm:$0xf]
    %vm43 = vcmask 261120
    %44 = vst.msk [vmem:[#allocation2] sm:$0xff] %vm43, %v39
    %45 = vst.msk [vmem:[#allocation2 + $0x20] sm:$0xff] %vm43, %v40
    %46 = vst.msk [vmem:[#allocation2 + $0x40] sm:$0xff] %vm43, %v41
    %vm47 = vcmask 257024
    %48 = vst.msk [vmem:[#allocation2 + $0x60] sm:$0xf] %vm47, %v42
    %v49 = vld [vmem:[%s0 + $0x1] sm:$0xff]
    %v50 = vld [vmem:[%s0 + $0x9] sm:$0xff]
    %v51 = vld [vmem:[%s0 + $0x11] sm:$0xff]
    %v52 = vld [vmem:[%s0 + $0x19] sm:$0xf]
    %57 = vrot.lane.b32.xlu0 %v49, 96
    %v58 = vpop.permute.xlu0 %57
    %59 = vrot.lane.b32.xlu0 %v50, 96
    %v60 = vpop.permute.xlu0 %59
    %61 = vrot.lane.b32.xlu0 %v51, 96
    %v62 = vpop.permute.xlu0 %61
    %63 = vrot.lane.b32.xlu0 %v52, 96
    %v64 = vpop.permute.xlu0 %63
    %vm69 = vcmask 1048320
    %70 = vst.msk [vmem:[#allocation2] sm:$0xff] %vm69, %v58
    %71 = vst.msk [vmem:[#allocation2 + $0x20] sm:$0xff] %vm69, %v60
    %72 = vst.msk [vmem:[#allocation2 + $0x40] sm:$0xff] %vm69, %v62
    %vm73 = vcmask 1044224
    %74 = vst.msk [vmem:[#allocation2 + $0x60] sm:$0xf] %vm73, %v64
    %v75 = vld [vmem:[%s0 + $0x2] sm:$0xff]
    %v76 = vld [vmem:[%s0 + $0xa] sm:$0xff]
    %v77 = vld [vmem:[%s0 + $0x12] sm:$0xff]
    %v78 = vld [vmem:[%s0 + $0x1a] sm:$0xf]
    %83 = vrot.lane.b32.xlu0 %v75, 64
    %v84 = vpop.permute.xlu0 %83
    %85 = vrot.lane.b32.xlu0 %v76, 64
    %v86 = vpop.permute.xlu0 %85
    %87 = vrot.lane.b32.xlu0 %v77, 64
    %v88 = vpop.permute.xlu0 %87
    %89 = vrot.lane.b32.xlu0 %v78, 64
    %v90 = vpop.permute.xlu0 %89
    %vm95 = vcmask 785920
    %96 = vst.msk [vmem:[#allocation2 + $0x8] sm:$0xff] %vm95, %v84
    %97 = vst.msk [vmem:[#allocation2 + $0x28] sm:$0xff] %vm95, %v86
    %98 = vst.msk [vmem:[#allocation2 + $0x48] sm:$0xff] %vm95, %v88
    %vm99 = vcmask 781824
    %100 = vst.msk [vmem:[#allocation2 + $0x68] sm:$0xf] %vm99, %v90
    %v101 = vld [vmem:[%s0 + $0x3] sm:$0xff]
    %v102 = vld [vmem:[%s0 + $0xb] sm:$0xff]
    %v103 = vld [vmem:[%s0 + $0x13] sm:$0xff]
    %v104 = vld [vmem:[%s0 + $0x1b] sm:$0xf]
    %109 = vrot.lane.b32.xlu0 %v101, 32
    %v110 = vpop.permute.xlu0 %109
    %111 = vrot.lane.b32.xlu0 %v102, 32
    %v112 = vpop.permute.xlu0 %111
    %113 = vrot.lane.b32.xlu0 %v103, 32
    %v114 = vpop.permute.xlu0 %113
    %115 = vrot.lane.b32.xlu0 %v104, 32
    %v116 = vpop.permute.xlu0 %115
    %vm121 = vcmask 523520
    %122 = vst.msk [vmem:[#allocation2 + $0x10] sm:$0xff] %vm121, %v110
    %123 = vst.msk [vmem:[#allocation2 + $0x30] sm:$0xff] %vm121, %v112
    %124 = vst.msk [vmem:[#allocation2 + $0x50] sm:$0xff] %vm121, %v114
    %vm125 = vcmask 519424
    %126 = vst.msk [vmem:[#allocation2 + $0x70] sm:$0xf] %vm125, %v116
    %v127 = vld [vmem:[%s0 + $0x4] sm:$0xff]
    %v128 = vld [vmem:[%s0 + $0xc] sm:$0xff]
    %v129 = vld [vmem:[%s0 + $0x14] sm:$0xff]
    %v130 = vld [vmem:[%s0 + $0x1c] sm:$0xf]
    %131 = vst.msk [vmem:[#allocation2 + $0x18] sm:$0xff] %vm43, %v127
    %132 = vst.msk [vmem:[#allocation2 + $0x38] sm:$0xff] %vm43, %v128
    %133 = vst.msk [vmem:[#allocation2 + $0x58] sm:$0xff] %vm43, %v129
    %134 = vst.msk [vmem:[#allocation2 + $0x78] sm:$0xf] %vm47, %v130
    %v135 = vld [vmem:[%s0 + $0x20] sm:$0xff]
    %v136 = vld [vmem:[%s0 + $0x28] sm:$0xff]
    %v137 = vld [vmem:[%s0 + $0x30] sm:$0xff]
    %v138 = vld [vmem:[%s0 + $0x38] sm:$0xf]
    %143 = vrot.lane.b32.xlu0 %v135, 32
    %v144 = vpop.permute.xlu0 %143
    %145 = vrot.lane.b32.xlu0 %v136, 32
    %v146 = vpop.permute.xlu0 %145
    %147 = vrot.lane.b32.xlu0 %v137, 32
    %v148 = vpop.permute.xlu0 %147
    %149 = vrot.lane.b32.xlu0 %v138, 32
    %v150 = vpop.permute.xlu0 %149
    %155 = vst.msk [vmem:[#allocation2] sm:$0xff] %vm121, %v144
    %156 = vst.msk [vmem:[#allocation2 + $0x20] sm:$0xff] %vm121, %v146
    %157 = vst.msk [vmem:[#allocation2 + $0x40] sm:$0xff] %vm121, %v148
    %158 = vst.msk [vmem:[#allocation2 + $0x60] sm:$0xf] %vm125, %v150
    %v159 = vld [vmem:[%s0 + $0x21] sm:$0xff]
    %v160 = vld [vmem:[%s0 + $0x29] sm:$0xff]
    %v161 = vld [vmem:[%s0 + $0x31] sm:$0xff]
    %v162 = vld [vmem:[%s0 + $0x39] sm:$0xf]
    %163 = vst.msk [vmem:[#allocation2 + $0x8] sm:$0xff] %vm43, %v159
    %164 = vst.msk [vmem:[#allocation2 + $0x28] sm:$0xff] %vm43, %v160
    %165 = vst.msk [vmem:[#allocation2 + $0x48] sm:$0xff] %vm43, %v161
    %166 = vst.msk [vmem:[#allocation2 + $0x68] sm:$0xf] %vm47, %v162
    %v167 = vld [vmem:[%s0 + $0x22] sm:$0xff]
    %v168 = vld [vmem:[%s0 + $0x2a] sm:$0xff]
    %v169 = vld [vmem:[%s0 + $0x32] sm:$0xff]
    %v170 = vld [vmem:[%s0 + $0x3a] sm:$0xf]
    %175 = vrot.lane.b32.xlu0 %v167, 96
    %v176 = vpop.permute.xlu0 %175
    %177 = vrot.lane.b32.xlu0 %v168, 96
    %v178 = vpop.permute.xlu0 %177
    %179 = vrot.lane.b32.xlu0 %v169, 96
    %v180 = vpop.permute.xlu0 %179
    %181 = vrot.lane.b32.xlu0 %v170, 96
    %v182 = vpop.permute.xlu0 %181
    %187 = vst.msk [vmem:[#allocation2 + $0x8] sm:$0xff] %vm69, %v176
    %188 = vst.msk [vmem:[#allocation2 + $0x28] sm:$0xff] %vm69, %v178
    %189 = vst.msk [vmem:[#allocation2 + $0x48] sm:$0xff] %vm69, %v180
    %190 = vst.msk [vmem:[#allocation2 + $0x68] sm:$0xf] %vm73, %v182
    %v191 = vld [vmem:[%s0 + $0x23] sm:$0xff]
    %v192 = vld [vmem:[%s0 + $0x2b] sm:$0xff]
    %v193 = vld [vmem:[%s0 + $0x33] sm:$0xff]
    %v194 = vld [vmem:[%s0 + $0x3b] sm:$0xf]
    %199 = vrot.lane.b32.xlu0 %v191, 64
    %v200 = vpop.permute.xlu0 %199
    %201 = vrot.lane.b32.xlu0 %v192, 64
    %v202 = vpop.permute.xlu0 %201
    %203 = vrot.lane.b32.xlu0 %v193, 64
    %v204 = vpop.permute.xlu0 %203
    %205 = vrot.lane.b32.xlu0 %v194, 64
    %v206 = vpop.permute.xlu0 %205
    %211 = vst.msk [vmem:[#allocation2 + $0x10] sm:$0xff] %vm95, %v200
    %212 = vst.msk [vmem:[#allocation2 + $0x30] sm:$0xff] %vm95, %v202
    %213 = vst.msk [vmem:[#allocation2 + $0x50] sm:$0xff] %vm95, %v204
    %214 = vst.msk [vmem:[#allocation2 + $0x70] sm:$0xf] %vm99, %v206
    %v215 = vld [vmem:[%s0 + $0x24] sm:$0xff]
    %v216 = vld [vmem:[%s0 + $0x2c] sm:$0xff]
    %v217 = vld [vmem:[%s0 + $0x34] sm:$0xff]
    %v218 = vld [vmem:[%s0 + $0x3c] sm:$0xf]
    %223 = vrot.lane.b32.xlu0 %v215, 32
    %v224 = vpop.permute.xlu0 %223
    %225 = vrot.lane.b32.xlu0 %v216, 32
    %v226 = vpop.permute.xlu0 %225
    %227 = vrot.lane.b32.xlu0 %v217, 32
    %v228 = vpop.permute.xlu0 %227
    %229 = vrot.lane.b32.xlu0 %v218, 32
    %v230 = vpop.permute.xlu0 %229
    %235 = vst.msk [vmem:[#allocation2 + $0x18] sm:$0xff] %vm121, %v224
    %236 = vst.msk [vmem:[#allocation2 + $0x38] sm:$0xff] %vm121, %v226
    %237 = vst.msk [vmem:[#allocation2 + $0x58] sm:$0xff] %vm121, %v228
    %238 = vst.msk [vmem:[#allocation2 + $0x78] sm:$0xf] %vm125, %v230
    %v239 = vld [vmem:[%s0 + $0x40] sm:$0xff]
    %v240 = vld [vmem:[%s0 + $0x48] sm:$0xff]
    %v241 = vld [vmem:[%s0 + $0x50] sm:$0xff]
    %v242 = vld [vmem:[%s0 + $0x58] sm:$0xf]
    %247 = vrot.lane.b32.xlu0 %v239, 64
    %v248 = vpop.permute.xlu0 %247
    %249 = vrot.lane.b32.xlu0 %v240, 64
    %v250 = vpop.permute.xlu0 %249
    %251 = vrot.lane.b32.xlu0 %v241, 64
    %v252 = vpop.permute.xlu0 %251
    %253 = vrot.lane.b32.xlu0 %v242, 64
    %v254 = vpop.permute.xlu0 %253
    %259 = vst.msk [vmem:[#allocation2] sm:$0xff] %vm95, %v248
    %260 = vst.msk [vmem:[#allocation2 + $0x20] sm:$0xff] %vm95, %v250
    %261 = vst.msk [vmem:[#allocation2 + $0x40] sm:$0xff] %vm95, %v252
    %262 = vst.msk [vmem:[#allocation2 + $0x60] sm:$0xf] %vm99, %v254
    %v263 = vld [vmem:[%s0 + $0x41] sm:$0xff]
    %v264 = vld [vmem:[%s0 + $0x49] sm:$0xff]
    %v265 = vld [vmem:[%s0 + $0x51] sm:$0xff]
    %v266 = vld [vmem:[%s0 + $0x59] sm:$0xf]
    %271 = vrot.lane.b32.xlu0 %v263, 32
    %v272 = vpop.permute.xlu0 %271
    %273 = vrot.lane.b32.xlu0 %v264, 32
    %v274 = vpop.permute.xlu0 %273
    %275 = vrot.lane.b32.xlu0 %v265, 32
    %v276 = vpop.permute.xlu0 %275
    %277 = vrot.lane.b32.xlu0 %v266, 32
    %v278 = vpop.permute.xlu0 %277
    %283 = vst.msk [vmem:[#allocation2 + $0x8] sm:$0xff] %vm121, %v272
    %284 = vst.msk [vmem:[#allocation2 + $0x28] sm:$0xff] %vm121, %v274
    %285 = vst.msk [vmem:[#allocation2 + $0x48] sm:$0xff] %vm121, %v276
    %286 = vst.msk [vmem:[#allocation2 + $0x68] sm:$0xf] %vm125, %v278
    %v287 = vld [vmem:[%s0 + $0x42] sm:$0xff]
    %v288 = vld [vmem:[%s0 + $0x4a] sm:$0xff]
    %v289 = vld [vmem:[%s0 + $0x52] sm:$0xff]
    %v290 = vld [vmem:[%s0 + $0x5a] sm:$0xf]
    %291 = vst.msk [vmem:[#allocation2 + $0x10] sm:$0xff] %vm43, %v287
    %292 = vst.msk [vmem:[#allocation2 + $0x30] sm:$0xff] %vm43, %v288
    %293 = vst.msk [vmem:[#allocation2 + $0x50] sm:$0xff] %vm43, %v289
    %294 = vst.msk [vmem:[#allocation2 + $0x70] sm:$0xf] %vm47, %v290
    %v295 = vld [vmem:[%s0 + $0x43] sm:$0xff]
    %v296 = vld [vmem:[%s0 + $0x4b] sm:$0xff]
    %v297 = vld [vmem:[%s0 + $0x53] sm:$0xff]
    %v298 = vld [vmem:[%s0 + $0x5b] sm:$0xf]
    %303 = vrot.lane.b32.xlu0 %v295, 96
    %v304 = vpop.permute.xlu0 %303
    %305 = vrot.lane.b32.xlu0 %v296, 96
    %v306 = vpop.permute.xlu0 %305
    %307 = vrot.lane.b32.xlu0 %v297, 96
    %v308 = vpop.permute.xlu0 %307
    %309 = vrot.lane.b32.xlu0 %v298, 96
    %v310 = vpop.permute.xlu0 %309
    %315 = vst.msk [vmem:[#allocation2 + $0x10] sm:$0xff] %vm69, %v304
    %316 = vst.msk [vmem:[#allocation2 + $0x30] sm:$0xff] %vm69, %v306
    %317 = vst.msk [vmem:[#allocation2 + $0x50] sm:$0xff] %vm69, %v308
    %318 = vst.msk [vmem:[#allocation2 + $0x70] sm:$0xf] %vm73, %v310
    %v319 = vld [vmem:[%s0 + $0x44] sm:$0xff]
    %v320 = vld [vmem:[%s0 + $0x4c] sm:$0xff]
    %v321 = vld [vmem:[%s0 + $0x54] sm:$0xff]
    %v322 = vld [vmem:[%s0 + $0x5c] sm:$0xf]
    %327 = vrot.lane.b32.xlu0 %v319, 64
    %v328 = vpop.permute.xlu0 %327
    %329 = vrot.lane.b32.xlu0 %v320, 64
    %v330 = vpop.permute.xlu0 %329
    %331 = vrot.lane.b32.xlu0 %v321, 64
    %v332 = vpop.permute.xlu0 %331
    %333 = vrot.lane.b32.xlu0 %v322, 64
    %v334 = vpop.permute.xlu0 %333
    %339 = vst.msk [vmem:[#allocation2 + $0x18] sm:$0xff] %vm95, %v328
    %340 = vst.msk [vmem:[#allocation2 + $0x38] sm:$0xff] %vm95, %v330
    %341 = vst.msk [vmem:[#allocation2 + $0x58] sm:$0xff] %vm95, %v332
    %342 = vst.msk [vmem:[#allocation2 + $0x78] sm:$0xf] %vm99, %v334
    %v343 = vld [vmem:[%s0 + $0x60] sm:$0xff]
    %v344 = vld [vmem:[%s0 + $0x68] sm:$0xff]
    %v345 = vld [vmem:[%s0 + $0x70] sm:$0xff]
    %v346 = vld [vmem:[%s0 + $0x78] sm:$0xf]
    %vm351 = vcmask 1043456
    %v352 = vrot.slane %v343, 4
    %v353 = vrot.slane %v344, 4
    %v354 = vsel %vm351, %v352, %v353
    %v355 = vrot.slane %v345, 4
    %v356 = vsel %vm351, %v353, %v355
    %v357 = vrot.slane %v346, 4
    %v358 = vsel %vm351, %v355, %v357
    %vm363 = vcmask 261124
    %364 = vst.msk [vmem:[#allocation2 + $0x60] sm:$0xf0] %vm363, %v352
    %365 = vst.msk [vmem:[#allocation2 + $0x80] sm:$0xff] %vm43, %v354
    %366 = vst.msk [vmem:[#allocation2 + $0xa0] sm:$0xff] %vm43, %v356
    %367 = vst.msk [vmem:[#allocation2 + $0xc0] sm:$0xff] %vm43, %v358
    %v368 = vld [vmem:[%s0 + $0x61] sm:$0xff]
    %v369 = vld [vmem:[%s0 + $0x69] sm:$0xff]
    %v370 = vld [vmem:[%s0 + $0x71] sm:$0xff]
    %v371 = vld [vmem:[%s0 + $0x79] sm:$0xf]
    %v376 = vrot.slane %v368, 4
    %v377 = vrot.slane %v369, 4
    %v378 = vsel %vm351, %v376, %v377
    %v379 = vrot.slane %v370, 4
    %v380 = vsel %vm351, %v377, %v379
    %v381 = vrot.slane %v371, 4
    %v382 = vsel %vm351, %v379, %v381
    %383 = vrot.lane.b32.xlu0 %v376, 96
    %v384 = vpop.permute.xlu0 %383
    %385 = vrot.lane.b32.xlu0 %v378, 96
    %v386 = vpop.permute.xlu0 %385
    %387 = vrot.lane.b32.xlu0 %v380, 96
    %v388 = vpop.permute.xlu0 %387
    %389 = vrot.lane.b32.xlu0 %v382, 96
    %v390 = vpop.permute.xlu0 %389
    %vm395 = vcmask 1048324
    %396 = vst.msk [vmem:[#allocation2 + $0x60] sm:$0xf0] %vm395, %v384
    %397 = vst.msk [vmem:[#allocation2 + $0x80] sm:$0xff] %vm69, %v386
    %398 = vst.msk [vmem:[#allocation2 + $0xa0] sm:$0xff] %vm69, %v388
    %399 = vst.msk [vmem:[#allocation2 + $0xc0] sm:$0xff] %vm69, %v390
    %v400 = vld [vmem:[%s0 + $0x62] sm:$0xff]
    %v401 = vld [vmem:[%s0 + $0x6a] sm:$0xff]
    %v402 = vld [vmem:[%s0 + $0x72] sm:$0xff]
    %v403 = vld [vmem:[%s0 + $0x7a] sm:$0xf]
    %v408 = vrot.slane %v400, 4
    %v409 = vrot.slane %v401, 4
    %v410 = vsel %vm351, %v408, %v409
    %v411 = vrot.slane %v402, 4
    %v412 = vsel %vm351, %v409, %v411
    %v413 = vrot.slane %v403, 4
    %v414 = vsel %vm351, %v411, %v413
    %415 = vrot.lane.b32.xlu0 %v408, 64
    %v416 = vpop.permute.xlu0 %415
    %417 = vrot.lane.b32.xlu0 %v410, 64
    %v418 = vpop.permute.xlu0 %417
    %419 = vrot.lane.b32.xlu0 %v412, 64
    %v420 = vpop.permute.xlu0 %419
    %421 = vrot.lane.b32.xlu0 %v414, 64
    %v422 = vpop.permute.xlu0 %421
    %vm427 = vcmask 785924
    %428 = vst.msk [vmem:[#allocation2 + $0x68] sm:$0xf0] %vm427, %v416
    %429 = vst.msk [vmem:[#allocation2 + $0x88] sm:$0xff] %vm95, %v418
    %430 = vst.msk [vmem:[#allocation2 + $0xa8] sm:$0xff] %vm95, %v420
    %431 = vst.msk [vmem:[#allocation2 + $0xc8] sm:$0xff] %vm95, %v422
    %v432 = vld [vmem:[%s0 + $0x63] sm:$0xff]
    %v433 = vld [vmem:[%s0 + $0x6b] sm:$0xff]
    %v434 = vld [vmem:[%s0 + $0x73] sm:$0xff]
    %v435 = vld [vmem:[%s0 + $0x7b] sm:$0xf]
    %v440 = vrot.slane %v432, 4
    %v441 = vrot.slane %v433, 4
    %v442 = vsel %vm351, %v440, %v441
    %v443 = vrot.slane %v434, 4
    %v444 = vsel %vm351, %v441, %v443
    %v445 = vrot.slane %v435, 4
    %v446 = vsel %vm351, %v443, %v445
    %447 = vrot.lane.b32.xlu0 %v440, 32
    %v448 = vpop.permute.xlu0 %447
    %449 = vrot.lane.b32.xlu0 %v442, 32
    %v450 = vpop.permute.xlu0 %449
    %451 = vrot.lane.b32.xlu0 %v444, 32
    %v452 = vpop.permute.xlu0 %451
    %453 = vrot.lane.b32.xlu0 %v446, 32
    %v454 = vpop.permute.xlu0 %453
    %vm459 = vcmask 523524
    %460 = vst.msk [vmem:[#allocation2 + $0x70] sm:$0xf0] %vm459, %v448
    %461 = vst.msk [vmem:[#allocation2 + $0x90] sm:$0xff] %vm121, %v450
    %462 = vst.msk [vmem:[#allocation2 + $0xb0] sm:$0xff] %vm121, %v452
    %463 = vst.msk [vmem:[#allocation2 + $0xd0] sm:$0xff] %vm121, %v454
    %v464 = vld [vmem:[%s0 + $0x64] sm:$0xff]
    %v465 = vld [vmem:[%s0 + $0x6c] sm:$0xff]
    %v466 = vld [vmem:[%s0 + $0x74] sm:$0xff]
    %v467 = vld [vmem:[%s0 + $0x7c] sm:$0xf]
    %v472 = vrot.slane %v464, 4
    %v473 = vrot.slane %v465, 4
    %v474 = vsel %vm351, %v472, %v473
    %v475 = vrot.slane %v466, 4
    %v476 = vsel %vm351, %v473, %v475
    %v477 = vrot.slane %v467, 4
    %v478 = vsel %vm351, %v475, %v477
    %483 = vst.msk [vmem:[#allocation2 + $0x78] sm:$0xf0] %vm363, %v472
    %484 = vst.msk [vmem:[#allocation2 + $0x98] sm:$0xff] %vm43, %v474
    %485 = vst.msk [vmem:[#allocation2 + $0xb8] sm:$0xff] %vm43, %v476
    %486 = vst.msk [vmem:[#allocation2 + $0xd8] sm:$0xff] %vm43, %v478
    %v487 = vld [vmem:[%s0 + $0x80] sm:$0xff]
    %v488 = vld [vmem:[%s0 + $0x88] sm:$0xff]
    %v489 = vld [vmem:[%s0 + $0x90] sm:$0xff]
    %v490 = vld [vmem:[%s0 + $0x98] sm:$0xf]
    %v495 = vrot.slane %v487, 4
    %v496 = vrot.slane %v488, 4
    %v497 = vsel %vm351, %v495, %v496
    %v498 = vrot.slane %v489, 4
    %v499 = vsel %vm351, %v496, %v498
    %v500 = vrot.slane %v490, 4
    %v501 = vsel %vm351, %v498, %v500
    %502 = vrot.lane.b32.xlu0 %v495, 32
    %v503 = vpop.permute.xlu0 %502
    %504 = vrot.lane.b32.xlu0 %v497, 32
    %v505 = vpop.permute.xlu0 %504
    %506 = vrot.lane.b32.xlu0 %v499, 32
    %v507 = vpop.permute.xlu0 %506
    %508 = vrot.lane.b32.xlu0 %v501, 32
    %v509 = vpop.permute.xlu0 %508
    %514 = vst.msk [vmem:[#allocation2 + $0x60] sm:$0xf0] %vm459, %v503
    %515 = vst.msk [vmem:[#allocation2 + $0x80] sm:$0xff] %vm121, %v505
    %516 = vst.msk [vmem:[#allocation2 + $0xa0] sm:$0xff] %vm121, %v507
    %517 = vst.msk [vmem:[#allocation2 + $0xc0] sm:$0xff] %vm121, %v509
    %v518 = vld [vmem:[%s0 + $0x81] sm:$0xff]
    %v519 = vld [vmem:[%s0 + $0x89] sm:$0xff]
    %v520 = vld [vmem:[%s0 + $0x91] sm:$0xff]
    %v521 = vld [vmem:[%s0 + $0x99] sm:$0xf]
    %v526 = vrot.slane %v518, 4
    %v527 = vrot.slane %v519, 4
    %v528 = vsel %vm351, %v526, %v527
    %v529 = vrot.slane %v520, 4
    %v530 = vsel %vm351, %v527, %v529
    %v531 = vrot.slane %v521, 4
    %v532 = vsel %vm351, %v529, %v531
    %537 = vst.msk [vmem:[#allocation2 + $0x68] sm:$0xf0] %vm363, %v526
    %538 = vst.msk [vmem:[#allocation2 + $0x88] sm:$0xff] %vm43, %v528
    %539 = vst.msk [vmem:[#allocation2 + $0xa8] sm:$0xff] %vm43, %v530
    %540 = vst.msk [vmem:[#allocation2 + $0xc8] sm:$0xff] %vm43, %v532
    %v541 = vld [vmem:[%s0 + $0x82] sm:$0xff]
    %v542 = vld [vmem:[%s0 + $0x8a] sm:$0xff]
    %v543 = vld [vmem:[%s0 + $0x92] sm:$0xff]
    %v544 = vld [vmem:[%s0 + $0x9a] sm:$0xf]
    %v549 = vrot.slane %v541, 4
    %v550 = vrot.slane %v542, 4
    %v551 = vsel %vm351, %v549, %v550
    %v552 = vrot.slane %v543, 4
    %v553 = vsel %vm351, %v550, %v552
    %v554 = vrot.slane %v544, 4
    %v555 = vsel %vm351, %v552, %v554
    %556 = vrot.lane.b32.xlu0 %v549, 96
    %v557 = vpop.permute.xlu0 %556
    %558 = vrot.lane.b32.xlu0 %v551, 96
    %v559 = vpop.permute.xlu0 %558
    %560 = vrot.lane.b32.xlu0 %v553, 96
    %v561 = vpop.permute.xlu0 %560
    %562 = vrot.lane.b32.xlu0 %v555, 96
    %v563 = vpop.permute.xlu0 %562
    %568 = vst.msk [vmem:[#allocation2 + $0x68] sm:$0xf0] %vm395, %v557
    %569 = vst.msk [vmem:[#allocation2 + $0x88] sm:$0xff] %vm69, %v559
    %570 = vst.msk [vmem:[#allocation2 + $0xa8] sm:$0xff] %vm69, %v561
    %571 = vst.msk [vmem:[#allocation2 + $0xc8] sm:$0xff] %vm69, %v563
    %v572 = vld [vmem:[%s0 + $0x83] sm:$0xff]
    %v573 = vld [vmem:[%s0 + $0x8b] sm:$0xff]
    %v574 = vld [vmem:[%s0 + $0x93] sm:$0xff]
    %v575 = vld [vmem:[%s0 + $0x9b] sm:$0xf]
    %v580 = vrot.slane %v572, 4
    %v581 = vrot.slane %v573, 4
    %v582 = vsel %vm351, %v580, %v581
    %v583 = vrot.slane %v574, 4
    %v584 = vsel %vm351, %v581, %v583
    %v585 = vrot.slane %v575, 4
    %v586 = vsel %vm351, %v583, %v585
    %587 = vrot.lane.b32.xlu0 %v580, 64
    %v588 = vpop.permute.xlu0 %587
    %589 = vrot.lane.b32.xlu0 %v582, 64
    %v590 = vpop.permute.xlu0 %589
    %591 = vrot.lane.b32.xlu0 %v584, 64
    %v592 = vpop.permute.xlu0 %591
    %593 = vrot.lane.b32.xlu0 %v586, 64
    %v594 = vpop.permute.xlu0 %593
    %599 = vst.msk [vmem:[#allocation2 + $0x70] sm:$0xf0] %vm427, %v588
    %600 = vst.msk [vmem:[#allocation2 + $0x90] sm:$0xff] %vm95, %v590
    %601 = vst.msk [vmem:[#allocation2 + $0xb0] sm:$0xff] %vm95, %v592
    %602 = vst.msk [vmem:[#allocation2 + $0xd0] sm:$0xff] %vm95, %v594
    %v603 = vld [vmem:[%s0 + $0x84] sm:$0xff]
    %v604 = vld [vmem:[%s0 + $0x8c] sm:$0xff]
    %v605 = vld [vmem:[%s0 + $0x94] sm:$0xff]
    %v606 = vld [vmem:[%s0 + $0x9c] sm:$0xf]
    %v611 = vrot.slane %v603, 4
    %v612 = vrot.slane %v604, 4
    %v613 = vsel %vm351, %v611, %v612
    %v614 = vrot.slane %v605, 4
    %v615 = vsel %vm351, %v612, %v614
    %v616 = vrot.slane %v606, 4
    %v617 = vsel %vm351, %v614, %v616
    %618 = vrot.lane.b32.xlu0 %v611, 32
    %v619 = vpop.permute.xlu0 %618
    %620 = vrot.lane.b32.xlu0 %v613, 32
    %v621 = vpop.permute.xlu0 %620
    %622 = vrot.lane.b32.xlu0 %v615, 32
    %v623 = vpop.permute.xlu0 %622
    %624 = vrot.lane.b32.xlu0 %v617, 32
    %v625 = vpop.permute.xlu0 %624
    %630 = vst.msk [vmem:[#allocation2 + $0x78] sm:$0xf0] %vm459, %v619
    %631 = vst.msk [vmem:[#allocation2 + $0x98] sm:$0xff] %vm121, %v621
    %632 = vst.msk [vmem:[#allocation2 + $0xb8] sm:$0xff] %vm121, %v623
    %633 = vst.msk [vmem:[#allocation2 + $0xd8] sm:$0xff] %vm121, %v625
    %v634 = vld [vmem:[%s0 + $0xa0] sm:$0xff]
    %v635 = vld [vmem:[%s0 + $0xa8] sm:$0xff]
    %v636 = vld [vmem:[%s0 + $0xb0] sm:$0xff]
    %v637 = vld [vmem:[%s0 + $0xb8] sm:$0xf]
    %v642 = vrot.slane %v634, 4
    %v643 = vrot.slane %v635, 4
    %v644 = vsel %vm351, %v642, %v643
    %v645 = vrot.slane %v636, 4
    %v646 = vsel %vm351, %v643, %v645
    %v647 = vrot.slane %v637, 4
    %v648 = vsel %vm351, %v645, %v647
    %649 = vrot.lane.b32.xlu0 %v642, 64
    %v650 = vpop.permute.xlu0 %649
    %651 = vrot.lane.b32.xlu0 %v644, 64
    %v652 = vpop.permute.xlu0 %651
    %653 = vrot.lane.b32.xlu0 %v646, 64
    %v654 = vpop.permute.xlu0 %653
    %655 = vrot.lane.b32.xlu0 %v648, 64
    %v656 = vpop.permute.xlu0 %655
    %661 = vst.msk [vmem:[#allocation2 + $0x60] sm:$0xf0] %vm427, %v650
    %662 = vst.msk [vmem:[#allocation2 + $0x80] sm:$0xff] %vm95, %v652
    %663 = vst.msk [vmem:[#allocation2 + $0xa0] sm:$0xff] %vm95, %v654
    %664 = vst.msk [vmem:[#allocation2 + $0xc0] sm:$0xff] %vm95, %v656
    %v665 = vld [vmem:[%s0 + $0xa1] sm:$0xff]
    %v666 = vld [vmem:[%s0 + $0xa9] sm:$0xff]
    %v667 = vld [vmem:[%s0 + $0xb1] sm:$0xff]
    %v668 = vld [vmem:[%s0 + $0xb9] sm:$0xf]
    %v673 = vrot.slane %v665, 4
    %v674 = vrot.slane %v666, 4
    %v675 = vsel %vm351, %v673, %v674
    %v676 = vrot.slane %v667, 4
    %v677 = vsel %vm351, %v674, %v676
    %v678 = vrot.slane %v668, 4
    %v679 = vsel %vm351, %v676, %v678
    %680 = vrot.lane.b32.xlu0 %v673, 32
    %v681 = vpop.permute.xlu0 %680
    %682 = vrot.lane.b32.xlu0 %v675, 32
    %v683 = vpop.permute.xlu0 %682
    %684 = vrot.lane.b32.xlu0 %v677, 32
    %v685 = vpop.permute.xlu0 %684
    %686 = vrot.lane.b32.xlu0 %v679, 32
    %v687 = vpop.permute.xlu0 %686
    %692 = vst.msk [vmem:[#allocation2 + $0x68] sm:$0xf0] %vm459, %v681
    %693 = vst.msk [vmem:[#allocation2 + $0x88] sm:$0xff] %vm121, %v683
    %694 = vst.msk [vmem:[#allocation2 + $0xa8] sm:$0xff] %vm121, %v685
    %695 = vst.msk [vmem:[#allocation2 + $0xc8] sm:$0xff] %vm121, %v687
    %v696 = vld [vmem:[%s0 + $0xa2] sm:$0xff]
    %v697 = vld [vmem:[%s0 + $0xaa] sm:$0xff]
    %v698 = vld [vmem:[%s0 + $0xb2] sm:$0xff]
    %v699 = vld [vmem:[%s0 + $0xba] sm:$0xf]
    %v704 = vrot.slane %v696, 4
    %v705 = vrot.slane %v697, 4
    %v706 = vsel %vm351, %v704, %v705
    %v707 = vrot.slane %v698, 4
    %v708 = vsel %vm351, %v705, %v707
    %v709 = vrot.slane %v699, 4
    %v710 = vsel %vm351, %v707, %v709
    %715 = vst.msk [vmem:[#allocation2 + $0x70] sm:$0xf0] %vm363, %v704
    %716 = vst.msk [vmem:[#allocation2 + $0x90] sm:$0xff] %vm43, %v706
    %717 = vst.msk [vmem:[#allocation2 + $0xb0] sm:$0xff] %vm43, %v708
    %718 = vst.msk [vmem:[#allocation2 + $0xd0] sm:$0xff] %vm43, %v710
    %v719 = vld [vmem:[%s0 + $0xa3] sm:$0xff]
    %v720 = vld [vmem:[%s0 + $0xab] sm:$0xff]
    %v721 = vld [vmem:[%s0 + $0xb3] sm:$0xff]
    %v722 = vld [vmem:[%s0 + $0xbb] sm:$0xf]
    %v727 = vrot.slane %v719, 4
    %v728 = vrot.slane %v720, 4
    %v729 = vsel %vm351, %v727, %v728
    %v730 = vrot.slane %v721, 4
    %v731 = vsel %vm351, %v728, %v730
    %v732 = vrot.slane %v722, 4
    %v733 = vsel %vm351, %v730, %v732
    %734 = vrot.lane.b32.xlu0 %v727, 96
    %v735 = vpop.permute.xlu0 %734
    %736 = vrot.lane.b32.xlu0 %v729, 96
    %v737 = vpop.permute.xlu0 %736
    %738 = vrot.lane.b32.xlu0 %v731, 96
    %v739 = vpop.permute.xlu0 %738
    %740 = vrot.lane.b32.xlu0 %v733, 96
    %v741 = vpop.permute.xlu0 %740
    %746 = vst.msk [vmem:[#allocation2 + $0x70] sm:$0xf0] %vm395, %v735
    %747 = vst.msk [vmem:[#allocation2 + $0x90] sm:$0xff] %vm69, %v737
    %748 = vst.msk [vmem:[#allocation2 + $0xb0] sm:$0xff] %vm69, %v739
    %749 = vst.msk [vmem:[#allocation2 + $0xd0] sm:$0xff] %vm69, %v741
    %v750 = vld [vmem:[%s0 + $0xa4] sm:$0xff]
    %v751 = vld [vmem:[%s0 + $0xac] sm:$0xff]
    %v752 = vld [vmem:[%s0 + $0xb4] sm:$0xff]
    %v753 = vld [vmem:[%s0 + $0xbc] sm:$0xf]
    %v758 = vrot.slane %v750, 4
    %v759 = vrot.slane %v751, 4
    %v760 = vsel %vm351, %v758, %v759
    %v761 = vrot.slane %v752, 4
    %v762 = vsel %vm351, %v759, %v761
    %v763 = vrot.slane %v753, 4
    %v764 = vsel %vm351, %v761, %v763
    %765 = vrot.lane.b32.xlu0 %v758, 64
    %v766 = vpop.permute.xlu0 %765
    %767 = vrot.lane.b32.xlu0 %v760, 64
    %v768 = vpop.permute.xlu0 %767
    %769 = vrot.lane.b32.xlu0 %v762, 64
    %v770 = vpop.permute.xlu0 %769
    %771 = vrot.lane.b32.xlu0 %v764, 64
    %v772 = vpop.permute.xlu0 %771
    %777 = vst.msk [vmem:[#allocation2 + $0x78] sm:$0xf0] %vm427, %v766
    %778 = vst.msk [vmem:[#allocation2 + $0x98] sm:$0xff] %vm95, %v768
    %779 = vst.msk [vmem:[#allocation2 + $0xb8] sm:$0xff] %vm95, %v770
    %780 = vst.msk [vmem:[#allocation2 + $0xd8] sm:$0xff] %vm95, %v772
    %v781 = vld [vmem:[#allocation2] sm:$0xff]
    %v782 = vld [vmem:[#allocation2 + $0x8] sm:$0xff]
    %v783 = vld [vmem:[#allocation2 + $0x10] sm:$0xff]
    %v784 = vld [vmem:[#allocation2 + $0x18] sm:$0xff]
    %v785 = vld [vmem:[#allocation2 + $0x20] sm:$0xff]
    %v786 = vld [vmem:[#allocation2 + $0x28] sm:$0xff]
    %v787 = vld [vmem:[#allocation2 + $0x30] sm:$0xff]
    %v788 = vld [vmem:[#allocation2 + $0x38] sm:$0xff]
    %v789 = vld [vmem:[#allocation2 + $0x40] sm:$0xff]
    %v790 = vld [vmem:[#allocation2 + $0x48] sm:$0xff]
    %v791 = vld [vmem:[#allocation2 + $0x50] sm:$0xff]
    %v792 = vld [vmem:[#allocation2 + $0x58] sm:$0xff]
    %v793 = vld [vmem:[#allocation2 + $0x60] sm:$0xff]
    %v794 = vld [vmem:[#allocation2 + $0x68] sm:$0xff]
    %v795 = vld [vmem:[#allocation2 + $0x70] sm:$0xff]
    %v796 = vld [vmem:[#allocation2 + $0x78] sm:$0xff]
    %v797 = vld [vmem:[#allocation2 + $0x80] sm:$0xff]
    %v798 = vld [vmem:[#allocation2 + $0x88] sm:$0xff]
    %v799 = vld [vmem:[#allocation2 + $0x90] sm:$0xff]
    %v800 = vld [vmem:[#allocation2 + $0x98] sm:$0xff]
    %v801 = vld [vmem:[#allocation2 + $0xa0] sm:$0xff]
    %v802 = vld [vmem:[#allocation2 + $0xa8] sm:$0xff]
    %v803 = vld [vmem:[#allocation2 + $0xb0] sm:$0xff]
    %v804 = vld [vmem:[#allocation2 + $0xb8] sm:$0xff]
    %v805 = vld [vmem:[#allocation2 + $0xc0] sm:$0xff]
    %v806 = vld [vmem:[#allocation2 + $0xc8] sm:$0xff]
    %v807 = vld [vmem:[#allocation2 + $0xd0] sm:$0xff]
    %v808 = vld [vmem:[#allocation2 + $0xd8] sm:$0xff]
    %v809 = vld [vmem:[%s1] sm:$0xff]
    %v810 = vld [vmem:[%s1 + $0x8] sm:$0xff]
    %v811 = vld [vmem:[%s1 + $0x10] sm:$0xff]
    %v812 = vld [vmem:[%s1 + $0x18] sm:$0xff]
    %v813 = vld [vmem:[%s1 + $0x20] sm:$0xff]
    %v814 = vld [vmem:[%s1 + $0x28] sm:$0xff]
    %v815 = vld [vmem:[%s1 + $0x30] sm:$0xff]
    %v816 = vld [vmem:[%s1 + $0x38] sm:$0xff]
    %v817 = vld [vmem:[%s1 + $0x40] sm:$0xff]
    %v818 = vld [vmem:[%s1 + $0x48] sm:$0xff]
    %v819 = vld [vmem:[%s1 + $0x50] sm:$0xff]
    %v820 = vld [vmem:[%s1 + $0x58] sm:$0xff]
    %v821 = vld [vmem:[%s1 + $0x60] sm:$0xff]
    %v822 = vld [vmem:[%s1 + $0x68] sm:$0xff]
    %v823 = vld [vmem:[%s1 + $0x70] sm:$0xff]
    %v824 = vld [vmem:[%s1 + $0x78] sm:$0xff]
    %v825 = vld [vmem:[%s1 + $0x80] sm:$0xff]
    %v826 = vld [vmem:[%s1 + $0x88] sm:$0xff]
    %v827 = vld [vmem:[%s1 + $0x90] sm:$0xff]
    %v828 = vld [vmem:[%s1 + $0x98] sm:$0xff]
    %v829 = vld [vmem:[%s1 + $0xa0] sm:$0xff]
    %v830 = vld [vmem:[%s1 + $0xa8] sm:$0xff]
    %v831 = vld [vmem:[%s1 + $0xb0] sm:$0xff]
    %v832 = vld [vmem:[%s1 + $0xb8] sm:$0xff]
    %v833 = vld [vmem:[%s1 + $0xc0] sm:$0xff]
    %v834 = vld [vmem:[%s1 + $0xc8] sm:$0xff]
    %v835 = vld [vmem:[%s1 + $0xd0] sm:$0xff]
    %v836 = vld [vmem:[%s1 + $0xd8] sm:$0xff]
    %v837 = vld [vmem:[%s1 + $0xe0] sm:$0xff]
    %v838 = vld [vmem:[%s1 + $0xe8] sm:$0xff]
    %v839 = vld [vmem:[%s1 + $0xf0] sm:$0xff]
    %v840 = vld [vmem:[%s1 + $0xf8] sm:$0xff]
    %v841 = vld [vmem:[%s1 + $0x100] sm:$0xff]
    %v842 = vld [vmem:[%s1 + $0x108] sm:$0xff]
    %v843 = vld [vmem:[%s1 + $0x110] sm:$0xff]
    %v844 = vld [vmem:[%s1 + $0x118] sm:$0xff]
    %v845 = vld [vmem:[%s1 + $0x120] sm:$0xff]
    %v846 = vld [vmem:[%s1 + $0x128] sm:$0xff]
    %v847 = vld [vmem:[%s1 + $0x130] sm:$0xff]
    %v848 = vld [vmem:[%s1 + $0x138] sm:$0xff]
    %v849 = vld [vmem:[%s1 + $0x140] sm:$0xff]
    %v850 = vld [vmem:[%s1 + $0x148] sm:$0xff]
    %v851 = vld [vmem:[%s1 + $0x150] sm:$0xff]
    %v852 = vld [vmem:[%s1 + $0x158] sm:$0xff]
    %v853 = vld [vmem:[%s1 + $0x160] sm:$0xff]
    %v854 = vld [vmem:[%s1 + $0x168] sm:$0xff]
    %v855 = vld [vmem:[%s1 + $0x170] sm:$0xff]
    %v856 = vld [vmem:[%s1 + $0x178] sm:$0xff]
    %v857 = vld [vmem:[%s1 + $0x180] sm:$0xff]
    %v858 = vld [vmem:[%s1 + $0x188] sm:$0xff]
    %v859 = vld [vmem:[%s1 + $0x190] sm:$0xff]
    %v860 = vld [vmem:[%s1 + $0x198] sm:$0xff]
    %v861 = vld [vmem:[%s1 + $0x1a0] sm:$0xff]
    %v862 = vld [vmem:[%s1 + $0x1a8] sm:$0xff]
    %v863 = vld [vmem:[%s1 + $0x1b0] sm:$0xff]
    %v864 = vld [vmem:[%s1 + $0x1b8] sm:$0xff]
    %v865 = vld [vmem:[%s1 + $0x1c0] sm:$0xff]
    %v866 = vld [vmem:[%s1 + $0x1c8] sm:$0xff]
    %v867 = vld [vmem:[%s1 + $0x1d0] sm:$0xff]
    %v868 = vld [vmem:[%s1 + $0x1d8] sm:$0xff]
    %v869 = vld [vmem:[%s1 + $0x1e0] sm:$0xff]
    %v870 = vld [vmem:[%s1 + $0x1e8] sm:$0xff]
    %v871 = vld [vmem:[%s1 + $0x1f0] sm:$0xff]
    %v872 = vld [vmem:[%s1 + $0x1f8] sm:$0xff]
    %v873 = vld [vmem:[%s1 + $0x200] sm:$0xff]
    %v874 = vld [vmem:[%s1 + $0x208] sm:$0xff]
    %v875 = vld [vmem:[%s1 + $0x210] sm:$0xff]
    %v876 = vld [vmem:[%s1 + $0x218] sm:$0xff]
    %v877 = vld [vmem:[%s1 + $0x220] sm:$0xff]
    %v878 = vld [vmem:[%s1 + $0x228] sm:$0xff]
    %v879 = vld [vmem:[%s1 + $0x230] sm:$0xff]
    %v880 = vld [vmem:[%s1 + $0x238] sm:$0xff]
    %v881 = vld [vmem:[%s1 + $0x240] sm:$0xff]
    %v882 = vld [vmem:[%s1 + $0x248] sm:$0xff]
    %v883 = vld [vmem:[%s1 + $0x250] sm:$0xff]
    %v884 = vld [vmem:[%s1 + $0x258] sm:$0xff]
    %v885 = vld [vmem:[%s1 + $0x260] sm:$0xff]
    %v886 = vld [vmem:[%s1 + $0x268] sm:$0xff]
    %v887 = vld [vmem:[%s1 + $0x270] sm:$0xff]
    %v888 = vld [vmem:[%s1 + $0x278] sm:$0xff]
    %v889 = vld [vmem:[%s1 + $0x280] sm:$0xff]
    %v890 = vld [vmem:[%s1 + $0x288] sm:$0xff]
    %v891 = vld [vmem:[%s1 + $0x290] sm:$0xff]
    %v892 = vld [vmem:[%s1 + $0x298] sm:$0xff]
    %v893 = vld [vmem:[%s1 + $0x2a0] sm:$0xff]
    %v894 = vld [vmem:[%s1 + $0x2a8] sm:$0xff]
    %v895 = vld [vmem:[%s1 + $0x2b0] sm:$0xff]
    %v896 = vld [vmem:[%s1 + $0x2b8] sm:$0xff]
    %v897 = vld [vmem:[%s1 + $0x2c0] sm:$0xff]
    %v898 = vld [vmem:[%s1 + $0x2c8] sm:$0xff]
    %v899 = vld [vmem:[%s1 + $0x2d0] sm:$0xff]
    %v900 = vld [vmem:[%s1 + $0x2d8] sm:$0xff]
    %v901 = vld [vmem:[%s1 + $0x2e0] sm:$0xff]
    %v902 = vld [vmem:[%s1 + $0x2e8] sm:$0xff]
    %v903 = vld [vmem:[%s1 + $0x2f0] sm:$0xff]
    %v904 = vld [vmem:[%s1 + $0x2f8] sm:$0xff]
    %v905 = vld [vmem:[%s1 + $0x300] sm:$0xff]
    %v906 = vld [vmem:[%s1 + $0x308] sm:$0xff]
    %v907 = vld [vmem:[%s1 + $0x310] sm:$0xff]
    %v908 = vld [vmem:[%s1 + $0x318] sm:$0xff]
    %v909 = vld [vmem:[%s1 + $0x320] sm:$0xff]
    %v910 = vld [vmem:[%s1 + $0x328] sm:$0xff]
    %v911 = vld [vmem:[%s1 + $0x330] sm:$0xff]
    %v912 = vld [vmem:[%s1 + $0x338] sm:$0xff]
    %v913 = vld [vmem:[%s1 + $0x340] sm:$0xff]
    %v914 = vld [vmem:[%s1 + $0x348] sm:$0xff]
    %v915 = vld [vmem:[%s1 + $0x350] sm:$0xff]
    %v916 = vld [vmem:[%s1 + $0x358] sm:$0xff]
    %v917 = vld [vmem:[%s1 + $0x360] sm:$0xff]
    %v918 = vld [vmem:[%s1 + $0x368] sm:$0xff]
    %v919 = vld [vmem:[%s1 + $0x370] sm:$0xff]
    %v920 = vld [vmem:[%s1 + $0x378] sm:$0xff]
    %v921 = vld [vmem:[%s1 + $0x380] sm:$0xff]
    %v922 = vld [vmem:[%s1 + $0x388] sm:$0xff]
    %v923 = vld [vmem:[%s1 + $0x390] sm:$0xff]
    %v924 = vld [vmem:[%s1 + $0x398] sm:$0xff]
    %v925 = vld [vmem:[%s1 + $0x3a0] sm:$0xff]
    %v926 = vld [vmem:[%s1 + $0x3a8] sm:$0xff]
    %v927 = vld [vmem:[%s1 + $0x3b0] sm:$0xff]
    %v928 = vld [vmem:[%s1 + $0x3b8] sm:$0xff]
    %v929 = vld [vmem:[%s2] sm:$0x3]
    %v931 = vlaneseq
    %v932 = vshrl.u32 %v931, 7
    %v933 = vsub.s32 0, %v932
    %v934 = vrot.slane %v929, %v933
    %v935 = vlaneseq
    %v936 = vshrl.u32 %v935, 7
    %v937 = vsub.s32 1, %v936
    %v938 = vrot.slane %v929, %v937
    %vm941 = vcmask 785408
    %v943 = vsel %vm941, %v784, 0
    %v946 = vsel %vm941, %v788, 0
    %v949 = vsel %vm941, %v792, 0
    %v952 = vsel %vm941, %v796, 0
    %v955 = vsel %vm941, %v800, 0
    %v958 = vsel %vm941, %v804, 0
    %v961 = vsel %vm941, %v808, 0
    %963 = vmatprep.subr.mxu0 %v810
    %964 = vmatpush1.msra.mxu0 %v809
    %965 = vmatprep.subr.mxu0 %v812
    %966 = vmatpush1.msra.mxu0 %v811
    %967 = vmatprep.subr.mxu0 %v814
    %968 = vmatpush1.msra.mxu0 %v813
    %969 = vmatprep.subr.mxu0 %v816
    %970 = vmatpush1.msra.mxu0 %v815
    %971 = vmatprep.subr.mxu0 %v818
    %972 = vmatpush1.msra.mxu0 %v817
    %973 = vmatprep.subr.mxu0 %v820
    %974 = vmatpush1.msra.mxu0 %v819
    %975 = vmatprep.subr.mxu0 %v822
    %976 = vmatpush1.msra.mxu0 %v821
    %977 = vmatprep.subr.mxu0 %v824
    %978 = vmatpush1.msra.mxu0 %v823
    %979 = vmatprep.subr.mxu0 %v826
    %980 = vmatpush1.msra.mxu0 %v825
    %981 = vmatprep.subr.mxu0 %v828
    %982 = vmatpush1.msra.mxu0 %v827
    %983 = vmatprep.subr.mxu0 %v830
    %984 = vmatpush1.msra.mxu0 %v829
    %985 = vmatprep.subr.mxu0 %v832
    %986 = vmatpush1.msra.mxu0 %v831
    %987 = vmatprep.subr.mxu0 %v834
    %988 = vmatpush1.msra.mxu0 %v833
    %989 = vmatprep.subr.mxu0 %v836
    %990 = vmatpush1.msra.mxu0 %v835
    %991 = vmatprep.subr.mxu0 %v838
    %992 = vmatpush1.msra.mxu0 %v837
    %993 = vmatprep.subr.mxu0 %v840
    %994 = vmatpush1.msra.mxu0 %v839
    %995 = vmatprep.subr.mxu0 %v842
    %996 = vmatpush1.msra.mxu0 %v841
    %997 = vmatprep.subr.mxu0 %v844
    %998 = vmatpush1.msra.mxu0 %v843
    %999 = vmatprep.subr.mxu0 %v846
    %1000 = vmatpush1.msra.mxu0 %v845
    %1001 = vmatprep.subr.mxu0 %v848
    %1002 = vmatpush1.msra.mxu0 %v847
    %1003 = vmatprep.subr.mxu0 %v850
    %1004 = vmatpush1.msra.mxu0 %v849
    %1005 = vmatprep.subr.mxu0 %v852
    %1006 = vmatpush1.msra.mxu0 %v851
    %1007 = vmatprep.subr.mxu0 %v854
    %1008 = vmatpush1.msra.mxu0 %v853
    %1009 = vmatprep.subr.mxu0 %v856
    %1010 = vmatpush1.msra.mxu0 %v855
    %1011 = vmatprep.subr.mxu0 %v858
    %1012 = vmatpush1.msra.mxu0 %v857
    %1013 = vmatprep.subr.mxu0 %v860
    %1014 = vmatpush1.msra.mxu0 %v859
    %1015 = vmatprep.subr.mxu0 %v862
    %1016 = vmatpush1.msra.mxu0 %v861
    %1017 = vmatprep.subr.mxu0 %v864
    %1018 = vmatpush1.msra.mxu0 %v863
    %1019 = vmatprep.subr.mxu0 %v866
    %1020 = vmatpush1.msra.mxu0 %v865
    %1021 = vmatprep.subr.mxu0 %v868
    %1022 = vmatpush1.msra.mxu0 %v867
    %1023 = vmatprep.subr.mxu0 %v870
    %1024 = vmatpush1.msra.mxu0 %v869
    %1025 = vmatprep.subr.mxu0 %v872
    %1026 = vmatpush1.msra.mxu0 %v871
    %1027 = vmatprep.mubr.f32.mxu0 %v782
    %1028 = vmatmul.mubr.f32.gmra.mrb[0].mxu0 %v781
    %v1029 = vpop.f32.mrb[0].mxu0
    %v1030 = vadd.f32 %v934, %v1029
    %v1031 = vpop.f32.mrb[0].mxu0
    %v1032 = vadd.f32 %v938, %v1031
    %1033 = vmatprep.mubr.f32.mxu0 %v786
    %1034 = vmatmul.mubr.f32.gmra.mrb[0].mxu0 %v785
    %v1035 = vpop.f32.mrb[0].mxu0
    %v1036 = vadd.f32 %v934, %v1035
    %v1037 = vpop.f32.mrb[0].mxu0
    %v1038 = vadd.f32 %v938, %v1037
    %1039 = vmatprep.mubr.f32.mxu0 %v790
    %1040 = vmatmul.mubr.f32.gmra.mrb[0].mxu0 %v789
    %v1041 = vpop.f32.mrb[0].mxu0
    %v1042 = vadd.f32 %v934, %v1041
    %v1043 = vpop.f32.mrb[0].mxu0
    %v1044 = vadd.f32 %v938, %v1043
    %1045 = vmatprep.mubr.f32.mxu0 %v794
    %1046 = vmatmul.mubr.f32.gmra.mrb[0].mxu0 %v793
    %v1047 = vpop.f32.mrb[0].mxu0
    %v1048 = vadd.f32 %v934, %v1047
    %v1049 = vpop.f32.mrb[0].mxu0
    %v1050 = vadd.f32 %v938, %v1049
    %1051 = vmatprep.mubr.f32.mxu0 %v798
    %1052 = vmatmul.mubr.f32.gmra.mrb[0].mxu0 %v797
    %v1053 = vpop.f32.mrb[0].mxu0
    %v1054 = vadd.f32 %v934, %v1053
    %v1055 = vpop.f32.mrb[0].mxu0
    %v1056 = vadd.f32 %v938, %v1055
    %1057 = vmatprep.mubr.f32.mxu0 %v802
    %1058 = vmatmul.mubr.f32.gmra.mrb[0].mxu0 %v801
    %v1059 = vpop.f32.mrb[0].mxu0
    %v1060 = vadd.f32 %v934, %v1059
    %v1061 = vpop.f32.mrb[0].mxu0
    %v1062 = vadd.f32 %v938, %v1061
    %1063 = vmatprep.mubr.f32.mxu0 %v806
    %1064 = vmatmul.mubr.f32.gmra.mrb[0].mxu0 %v805
    %v1065 = vpop.f32.mrb[0].mxu0
    %v1066 = vadd.f32 %v934, %v1065
    %v1067 = vpop.f32.mrb[0].mxu0
    %v1068 = vadd.f32 %v938, %v1067
    %1069 = vdwg.mxu0
    %1070 = vmatprep.subr.mxu0 %v874
    %1071 = vmatpush1.msra.mxu0 %v873
    %1072 = vmatprep.subr.mxu0 %v876
    %1073 = vmatpush1.msra.mxu0 %v875
    %1074 = vmatprep.subr.mxu0 %v878
    %1075 = vmatpush1.msra.mxu0 %v877
    %1076 = vmatprep.subr.mxu0 %v880
    %1077 = vmatpush1.msra.mxu0 %v879
    %1078 = vmatprep.subr.mxu0 %v882
    %1079 = vmatpush1.msra.mxu0 %v881
    %1080 = vmatprep.subr.mxu0 %v884
    %1081 = vmatpush1.msra.mxu0 %v883
    %1082 = vmatprep.subr.mxu0 %v886
    %1083 = vmatpush1.msra.mxu0 %v885
    %1084 = vmatprep.subr.mxu0 %v888
    %1085 = vmatpush1.msra.mxu0 %v887
    %1086 = vmatprep.subr.mxu0 %v890
    %1087 = vmatpush1.msra.mxu0 %v889
    %1088 = vmatprep.subr.mxu0 %v892
    %1089 = vmatpush1.msra.mxu0 %v891
    %1090 = vmatprep.subr.mxu0 %v894
    %1091 = vmatpush1.msra.mxu0 %v893
    %1092 = vmatprep.subr.mxu0 %v896
    %1093 = vmatpush1.msra.mxu0 %v895
    %1094 = vmatprep.subr.mxu0 %v898
    %1095 = vmatpush1.msra.mxu0 %v897
    %1096 = vmatprep.subr.mxu0 %v900
    %1097 = vmatpush1.msra.mxu0 %v899
    %1098 = vmatprep.subr.mxu0 %v902
    %1099 = vmatpush1.msra.mxu0 %v901
    %1100 = vmatprep.subr.mxu0 %v904
    %1101 = vmatpush1.msra.mxu0 %v903
    %1102 = vmatprep.subr.mxu0 %v906
    %1103 = vmatpush1.msra.mxu0 %v905
    %1104 = vmatprep.subr.mxu0 %v908
    %1105 = vmatpush1.msra.mxu0 %v907
    %1106 = vmatprep.subr.mxu0 %v910
    %1107 = vmatpush1.msra.mxu0 %v909
    %1108 = vmatprep.subr.mxu0 %v912
    %1109 = vmatpush1.msra.mxu0 %v911
    %1110 = vmatprep.subr.mxu0 %v914
    %1111 = vmatpush1.msra.mxu0 %v913
    %1112 = vmatprep.subr.mxu0 %v916
    %1113 = vmatpush1.msra.mxu0 %v915
    %1114 = vmatprep.subr.mxu0 %v918
    %1115 = vmatpush1.msra.mxu0 %v917
    %1116 = vmatprep.subr.mxu0 %v920
    %1117 = vmatpush1.msra.mxu0 %v919
    %1118 = vmatprep.subr.mxu0 %v922
    %1119 = vmatpush1.msra.mxu0 %v921
    %1120 = vmatprep.subr.mxu0 %v924
    %1121 = vmatpush1.msra.mxu0 %v923
    %1122 = vmatprep.subr.mxu0 %v926
    %1123 = vmatpush1.msra.mxu0 %v925
    %1124 = vmatprep.subr.mxu0 %v928
    %1125 = vmatpush1.msra.mxu0 %v927
    %1126 = vmatprep.subr.mxu0 0.0
    %1127 = vmatpush1.msra.mxu0 0.0
    %1128 = vmatprep.subr.mxu0 0.0
    %1129 = vmatpush1.msra.mxu0 0.0
    %1130 = vmatprep.subr.mxu0 0.0
    %1131 = vmatpush1.msra.mxu0 0.0
    %1132 = vmatprep.subr.mxu0 0.0
    %1133 = vmatpush1.msra.mxu0 0.0
    %1134 = vmatprep.mubr.f32.mxu0 %v943
    %1135 = vmatmul.mubr.f32.gmra.mrb[0].mxu0 %v783
    %v1136 = vpop.f32.mrb[0].mxu0
    %v1137 = vadd.f32 %v1030, %v1136
    %v1138 = vpop.f32.mrb[0].mxu0
    %v1139 = vadd.f32 %v1032, %v1138
    %1140 = vmatprep.mubr.f32.mxu0 %v946
    %1141 = vmatmul.mubr.f32.gmra.mrb[0].mxu0 %v787
    %v1142 = vpop.f32.mrb[0].mxu0
    %v1143 = vadd.f32 %v1036, %v1142
    %v1144 = vpop.f32.mrb[0].mxu0
    %v1145 = vadd.f32 %v1038, %v1144
    %1146 = vmatprep.mubr.f32.mxu0 %v949
    %1147 = vmatmul.mubr.f32.gmra.mrb[0].mxu0 %v791
    %v1148 = vpop.f32.mrb[0].mxu0
    %v1149 = vadd.f32 %v1042, %v1148
    %v1150 = vpop.f32.mrb[0].mxu0
    %v1151 = vadd.f32 %v1044, %v1150
    %1152 = vmatprep.mubr.f32.mxu0 %v952
    %1153 = vmatmul.mubr.f32.gmra.mrb[0].mxu0 %v795
    %v1154 = vpop.f32.mrb[0].mxu0
    %v1155 = vadd.f32 %v1048, %v1154
    %v1156 = vpop.f32.mrb[0].mxu0
    %v1157 = vadd.f32 %v1050, %v1156
    %1158 = vmatprep.mubr.f32.mxu0 %v955
    %1159 = vmatmul.mubr.f32.gmra.mrb[0].mxu0 %v799
    %v1160 = vpop.f32.mrb[0].mxu0
    %v1161 = vadd.f32 %v1054, %v1160
    %v1162 = vpop.f32.mrb[0].mxu0
    %v1163 = vadd.f32 %v1056, %v1162
    %1164 = vmatprep.mubr.f32.mxu0 %v958
    %1165 = vmatmul.mubr.f32.gmra.mrb[0].mxu0 %v803
    %v1166 = vpop.f32.mrb[0].mxu0
    %v1167 = vadd.f32 %v1060, %v1166
    %v1168 = vpop.f32.mrb[0].mxu0
    %v1169 = vadd.f32 %v1062, %v1168
    %1170 = vmatprep.mubr.f32.mxu0 %v961
    %1171 = vmatmul.mubr.f32.gmra.mrb[0].mxu0 %v807
    %v1172 = vpop.f32.mrb[0].mxu0
    %v1173 = vadd.f32 %v1066, %v1172
    %v1174 = vpop.f32.mrb[0].mxu0
    %v1175 = vadd.f32 %v1068, %v1174
    %1176 = vdwg.mxu0
    %v1177 = vmax.f32 %v1137, 0.0
    %v1178 = vmax.f32 %v1139, 0.0
    %v1179 = vmax.f32 %v1143, 0.0
    %v1180 = vmax.f32 %v1145, 0.0
    %v1181 = vmax.f32 %v1149, 0.0
    %v1182 = vmax.f32 %v1151, 0.0
    %v1183 = vmax.f32 %v1155, 0.0
    %v1184 = vmax.f32 %v1157, 0.0
    %v1185 = vmax.f32 %v1161, 0.0
    %v1186 = vmax.f32 %v1163, 0.0
    %v1187 = vmax.f32 %v1167, 0.0
    %v1188 = vmax.f32 %v1169, 0.0
    %v1189 = vmax.f32 %v1173, 0.0
    %v1190 = vmax.f32 %v1175, 0.0
    %1191 = vst [vmem:[#allocation3] sm:$0xff] %v1177
    %vm1192 = vcmask 326656
    %1193 = vst.msk [vmem:[#allocation3 + $0x8] sm:$0xff] %vm1192, %v1178
    %1194 = vst [vmem:[#allocation3 + $0x10] sm:$0xff] %v1179
    %1195 = vst.msk [vmem:[#allocation3 + $0x18] sm:$0xff] %vm1192, %v1180
    %1196 = vst [vmem:[#allocation3 + $0x20] sm:$0xff] %v1181
    %1197 = vst.msk [vmem:[#allocation3 + $0x28] sm:$0xff] %vm1192, %v1182
    %1198 = vst [vmem:[#allocation3 + $0x30] sm:$0xff] %v1183
    %1199 = vst.msk [vmem:[#allocation3 + $0x38] sm:$0xff] %vm1192, %v1184
    %1200 = vst [vmem:[#allocation3 + $0x40] sm:$0xff] %v1185
    %1201 = vst.msk [vmem:[#allocation3 + $0x48] sm:$0xff] %vm1192, %v1186
    %1202 = vst [vmem:[#allocation3 + $0x50] sm:$0xff] %v1187
    %1203 = vst.msk [vmem:[#allocation3 + $0x58] sm:$0xff] %vm1192, %v1188
    %1204 = vst [vmem:[#allocation3 + $0x60] sm:$0xff] %v1189
    %1205 = vst.msk [vmem:[#allocation3 + $0x68] sm:$0xff] %vm1192, %v1190
    %v1206 = vld [vmem:[#allocation3] ss:$0 sm:$0xff]
    %v1207 = vld [vmem:[#allocation3 + $0x8] ss:$0 sm:$0xff]
    %1210 = vrot.lane.b32.xlu0 %v1206, 44
    %v1211 = vpop.permute.xlu0 %1210
    %1212 = vrot.lane.b32.xlu0 %v1207, 44
    %v1213 = vpop.permute.xlu0 %1212
    %vm1214 = vcmask 359424
    %v1215 = vsel %vm1214, %v1211, %v1213
    %v1217 = vmax.f32 %v1206, %v1215
    %v1218 = vld [vmem:[#allocation3 + $0x1] ss:$0 sm:$0xff]
    %v1219 = vld [vmem:[#allocation3 + $0x9] ss:$0 sm:$0xff]
    %1222 = vrot.lane.b32.xlu0 %v1218, 44
    %v1223 = vpop.permute.xlu0 %1222
    %1224 = vrot.lane.b32.xlu0 %v1219, 44
    %v1225 = vpop.permute.xlu0 %1224
    %v1226 = vsel %vm1214, %v1223, %v1225
    %v1228 = vmax.f32 %v1218, %v1226
    %v1229 = vmax.f32 %v1217, %v1228
    %vm1230 = vcmask 679936
    %1231 = vst.msk [vmem:[#allocation4] sm:$0x1] %vm1230, %v1229
    %v1232 = vld [vmem:[#allocation3 + $0x2] ss:$0 sm:$0xff]
    %v1233 = vld [vmem:[#allocation3 + $0xa] ss:$0 sm:$0xff]
    %1236 = vrot.lane.b32.xlu0 %v1232, 44
    %v1237 = vpop.permute.xlu0 %1236
    %1238 = vrot.lane.b32.xlu0 %v1233, 44
    %v1239 = vpop.permute.xlu0 %1238
    %v1240 = vsel %vm1214, %v1237, %v1239
    %v1242 = vmax.f32 %v1232, %v1240
    %v1243 = vld [vmem:[#allocation3 + $0x3] ss:$0 sm:$0xff]
    %v1244 = vld [vmem:[#allocation3 + $0xb] ss:$0 sm:$0xff]
    %1247 = vrot.lane.b32.xlu0 %v1243, 44
    %v1248 = vpop.permute.xlu0 %1247
    %1249 = vrot.lane.b32.xlu0 %v1244, 44
    %v1250 = vpop.permute.xlu0 %1249
    %v1251 = vsel %vm1214, %v1248, %v1250
    %v1253 = vmax.f32 %v1243, %v1251
    %v1254 = vmax.f32 %v1242, %v1253
    %1255 = vst.msk [vmem:[#allocation4 + $0x1] sm:$0x1] %vm1230, %v1254
    %v1256 = vld [vmem:[#allocation3 + $0x4] ss:$0 sm:$0xff]
    %v1257 = vld [vmem:[#allocation3 + $0xc] ss:$0 sm:$0xff]
    %1260 = vrot.lane.b32.xlu0 %v1256, 44
    %v1261 = vpop.permute.xlu0 %1260
    %1262 = vrot.lane.b32.xlu0 %v1257, 44
    %v1263 = vpop.permute.xlu0 %1262
    %v1264 = vsel %vm1214, %v1261, %v1263
    %v1266 = vmax.f32 %v1256, %v1264
    %v1267 = vld [vmem:[#allocation3 + $0x5] ss:$0 sm:$0xff]
    %v1268 = vld [vmem:[#allocation3 + $0xd] ss:$0 sm:$0xff]
    %1271 = vrot.lane.b32.xlu0 %v1267, 44
    %v1272 = vpop.permute.xlu0 %1271
    %1273 = vrot.lane.b32.xlu0 %v1268, 44
    %v1274 = vpop.permute.xlu0 %1273
    %v1275 = vsel %vm1214, %v1272, %v1274
    %v1277 = vmax.f32 %v1267, %v1275
    %v1278 = vmax.f32 %v1266, %v1277
    %1279 = vst.msk [vmem:[#allocation4 + $0x2] sm:$0x1] %vm1230, %v1278
    %v1280 = vld [vmem:[#allocation3 + $0x6] ss:$0 sm:$0xff]
    %v1281 = vld [vmem:[#allocation3 + $0xe] ss:$0 sm:$0xff]
    %1284 = vrot.lane.b32.xlu0 %v1280, 44
    %v1285 = vpop.permute.xlu0 %1284
    %1286 = vrot.lane.b32.xlu0 %v1281, 44
    %v1287 = vpop.permute.xlu0 %1286
    %v1288 = vsel %vm1214, %v1285, %v1287
    %v1290 = vmax.f32 %v1280, %v1288
    %v1291 = vld [vmem:[#allocation3 + $0x7] ss:$0 sm:$0xff]
    %v1292 = vld [vmem:[#allocation3 + $0xf] ss:$0 sm:$0xff]
    %1295 = vrot.lane.b32.xlu0 %v1291, 44
    %v1296 = vpop.permute.xlu0 %1295
    %1297 = vrot.lane.b32.xlu0 %v1292, 44
    %v1298 = vpop.permute.xlu0 %1297
    %v1299 = vsel %vm1214, %v1296, %v1298
    %v1301 = vmax.f32 %v1291, %v1299
    %v1302 = vmax.f32 %v1290, %v1301
    %1303 = vst.msk [vmem:[#allocation4 + $0x3] sm:$0x1] %vm1230, %v1302
    %v1304 = vld [vmem:[#allocation3 + $0x10] ss:$0 sm:$0xff]
    %v1305 = vld [vmem:[#allocation3 + $0x18] ss:$0 sm:$0xff]
    %1308 = vrot.lane.b32.xlu0 %v1304, 44
    %v1309 = vpop.permute.xlu0 %1308
    %1310 = vrot.lane.b32.xlu0 %v1305, 44
    %v1311 = vpop.permute.xlu0 %1310
    %v1312 = vsel %vm1214, %v1309, %v1311
    %v1314 = vmax.f32 %v1304, %v1312
    %v1315 = vld [vmem:[#allocation3 + $0x11] ss:$0 sm:$0xff]
    %v1316 = vld [vmem:[#allocation3 + $0x19] ss:$0 sm:$0xff]
    %1319 = vrot.lane.b32.xlu0 %v1315, 44
    %v1320 = vpop.permute.xlu0 %1319
    %1321 = vrot.lane.b32.xlu0 %v1316, 44
    %v1322 = vpop.permute.xlu0 %1321
    %v1323 = vsel %vm1214, %v1320, %v1322
    %v1325 = vmax.f32 %v1315, %v1323
    %v1326 = vmax.f32 %v1314, %v1325
    %1327 = vst.msk [vmem:[#allocation4 + $0x4] sm:$0x1] %vm1230, %v1326
    %v1328 = vld [vmem:[#allocation3 + $0x12] ss:$0 sm:$0xff]
    %v1329 = vld [vmem:[#allocation3 + $0x1a] ss:$0 sm:$0xff]
    %1332 = vrot.lane.b32.xlu0 %v1328, 44
    %v1333 = vpop.permute.xlu0 %1332
    %1334 = vrot.lane.b32.xlu0 %v1329, 44
    %v1335 = vpop.permute.xlu0 %1334
    %v1336 = vsel %vm1214, %v1333, %v1335
    %v1338 = vmax.f32 %v1328, %v1336
    %v1339 = vld [vmem:[#allocation3 + $0x13] ss:$0 sm:$0xff]
    %v1340 = vld [vmem:[#allocation3 + $0x1b] ss:$0 sm:$0xff]
    %1343 = vrot.lane.b32.xlu0 %v1339, 44
    %v1344 = vpop.permute.xlu0 %1343
    %1345 = vrot.lane.b32.xlu0 %v1340, 44
    %v1346 = vpop.permute.xlu0 %1345
    %v1347 = vsel %vm1214, %v1344, %v1346
    %v1349 = vmax.f32 %v1339, %v1347
    %v1350 = vmax.f32 %v1338, %v1349
    %1351 = vst.msk [vmem:[#allocation4 + $0x5] sm:$0x1] %vm1230, %v1350
    %v1352 = vld [vmem:[#allocation3 + $0x14] ss:$0 sm:$0xff]
    %v1353 = vld [vmem:[#allocation3 + $0x1c] ss:$0 sm:$0xff]
    %1356 = vrot.lane.b32.xlu0 %v1352, 44
    %v1357 = vpop.permute.xlu0 %1356
    %1358 = vrot.lane.b32.xlu0 %v1353, 44
    %v1359 = vpop.permute.xlu0 %1358
    %v1360 = vsel %vm1214, %v1357, %v1359
    %v1362 = vmax.f32 %v1352, %v1360
    %v1363 = vld [vmem:[#allocation3 + $0x15] ss:$0 sm:$0xff]
    %v1364 = vld [vmem:[#allocation3 + $0x1d] ss:$0 sm:$0xff]
    %1367 = vrot.lane.b32.xlu0 %v1363, 44
    %v1368 = vpop.permute.xlu0 %1367
    %1369 = vrot.lane.b32.xlu0 %v1364, 44
    %v1370 = vpop.permute.xlu0 %1369
    %v1371 = vsel %vm1214, %v1368, %v1370
    %v1373 = vmax.f32 %v1363, %v1371
    %v1374 = vmax.f32 %v1362, %v1373
    %1375 = vst.msk [vmem:[#allocation4 + $0x6] sm:$0x1] %vm1230, %v1374
    %v1376 = vld [vmem:[#allocation3 + $0x16] ss:$0 sm:$0xff]
    %v1377 = vld [vmem:[#allocation3 + $0x1e] ss:$0 sm:$0xff]
    %1380 = vrot.lane.b32.xlu0 %v1376, 44
    %v1381 = vpop.permute.xlu0 %1380
    %1382 = vrot.lane.b32.xlu0 %v1377, 44
    %v1383 = vpop.permute.xlu0 %1382
    %v1384 = vsel %vm1214, %v1381, %v1383
    %v1386 = vmax.f32 %v1376, %v1384
    %v1387 = vld [vmem:[#allocation3 + $0x17] ss:$0 sm:$0xff]
    %v1388 = vld [vmem:[#allocation3 + $0x1f] ss:$0 sm:$0xff]
    %1391 = vrot.lane.b32.xlu0 %v1387, 44
    %v1392 = vpop.permute.xlu0 %1391
    %1393 = vrot.lane.b32.xlu0 %v1388, 44
    %v1394 = vpop.permute.xlu0 %1393
    %v1395 = vsel %vm1214, %v1392, %v1394
    %v1397 = vmax.f32 %v1387, %v1395
    %v1398 = vmax.f32 %v1386, %v1397
    %1399 = vst.msk [vmem:[#allocation4 + $0x7] sm:$0x1] %vm1230, %v1398
    %v1400 = vld [vmem:[#allocation3 + $0x20] ss:$0 sm:$0xff]
    %v1401 = vld [vmem:[#allocation3 + $0x28] ss:$0 sm:$0xff]
    %1404 = vrot.lane.b32.xlu0 %v1400, 44
    %v1405 = vpop.permute.xlu0 %1404
    %1406 = vrot.lane.b32.xlu0 %v1401, 44
    %v1407 = vpop.permute.xlu0 %1406
    %v1408 = vsel %vm1214, %v1405, %v1407
    %v1410 = vmax.f32 %v1400, %v1408
    %v1411 = vld [vmem:[#allocation3 + $0x21] ss:$0 sm:$0xff]
    %v1412 = vld [vmem:[#allocation3 + $0x29] ss:$0 sm:$0xff]
    %1415 = vrot.lane.b32.xlu0 %v1411, 44
    %v1416 = vpop.permute.xlu0 %1415
    %1417 = vrot.lane.b32.xlu0 %v1412, 44
    %v1418 = vpop.permute.xlu0 %1417
    %v1419 = vsel %vm1214, %v1416, %v1418
    %v1421 = vmax.f32 %v1411, %v1419
    %v1422 = vmax.f32 %v1410, %v1421
    %1423 = vst.msk [vmem:[#allocation4 + $0x8] sm:$0x1] %vm1230, %v1422
    %v1424 = vld [vmem:[#allocation3 + $0x22] ss:$0 sm:$0xff]
    %v1425 = vld [vmem:[#allocation3 + $0x2a] ss:$0 sm:$0xff]
    %1428 = vrot.lane.b32.xlu0 %v1424, 44
    %v1429 = vpop.permute.xlu0 %1428
    %1430 = vrot.lane.b32.xlu0 %v1425, 44
    %v1431 = vpop.permute.xlu0 %1430
    %v1432 = vsel %vm1214, %v1429, %v1431
    %v1434 = vmax.f32 %v1424, %v1432
    %v1435 = vld [vmem:[#allocation3 + $0x23] ss:$0 sm:$0xff]
    %v1436 = vld [vmem:[#allocation3 + $0x2b] ss:$0 sm:$0xff]
    %1439 = vrot.lane.b32.xlu0 %v1435, 44
    %v1440 = vpop.permute.xlu0 %1439
    %1441 = vrot.lane.b32.xlu0 %v1436, 44
    %v1442 = vpop.permute.xlu0 %1441
    %v1443 = vsel %vm1214, %v1440, %v1442
    %v1445 = vmax.f32 %v1435, %v1443
    %v1446 = vmax.f32 %v1434, %v1445
    %1447 = vst.msk [vmem:[#allocation4 + $0x9] sm:$0x1] %vm1230, %v1446
    %v1448 = vld [vmem:[#allocation3 + $0x24] ss:$0 sm:$0xff]
    %v1449 = vld [vmem:[#allocation3 + $0x2c] ss:$0 sm:$0xff]
    %1452 = vrot.lane.b32.xlu0 %v1448, 44
    %v1453 = vpop.permute.xlu0 %1452
    %1454 = vrot.lane.b32.xlu0 %v1449, 44
    %v1455 = vpop.permute.xlu0 %1454
    %v1456 = vsel %vm1214, %v1453, %v1455
    %v1458 = vmax.f32 %v1448, %v1456
    %v1459 = vld [vmem:[#allocation3 + $0x25] ss:$0 sm:$0xff]
    %v1460 = vld [vmem:[#allocation3 + $0x2d] ss:$0 sm:$0xff]
    %1463 = vrot.lane.b32.xlu0 %v1459, 44
    %v1464 = vpop.permute.xlu0 %1463
    %1465 = vrot.lane.b32.xlu0 %v1460, 44
    %v1466 = vpop.permute.xlu0 %1465
    %v1467 = vsel %vm1214, %v1464, %v1466
    %v1469 = vmax.f32 %v1459, %v1467
    %v1470 = vmax.f32 %v1458, %v1469
    %1471 = vst.msk [vmem:[#allocation4 + $0xa] sm:$0x1] %vm1230, %v1470
    %v1472 = vld [vmem:[#allocation3 + $0x26] ss:$0 sm:$0xff]
    %v1473 = vld [vmem:[#allocation3 + $0x2e] ss:$0 sm:$0xff]
    %1476 = vrot.lane.b32.xlu0 %v1472, 44
    %v1477 = vpop.permute.xlu0 %1476
    %1478 = vrot.lane.b32.xlu0 %v1473, 44
    %v1479 = vpop.permute.xlu0 %1478
    %v1480 = vsel %vm1214, %v1477, %v1479
    %v1482 = vmax.f32 %v1472, %v1480
    %v1483 = vld [vmem:[#allocation3 + $0x27] ss:$0 sm:$0xff]
    %v1484 = vld [vmem:[#allocation3 + $0x2f] ss:$0 sm:$0xff]
    %1487 = vrot.lane.b32.xlu0 %v1483, 44
    %v1488 = vpop.permute.xlu0 %1487
    %1489 = vrot.lane.b32.xlu0 %v1484, 44
    %v1490 = vpop.permute.xlu0 %1489
    %v1491 = vsel %vm1214, %v1488, %v1490
    %v1493 = vmax.f32 %v1483, %v1491
    %v1494 = vmax.f32 %v1482, %v1493
    %1495 = vst.msk [vmem:[#allocation4 + $0xb] sm:$0x1] %vm1230, %v1494
    %v1496 = vld [vmem:[#allocation3 + $0x30] ss:$0 sm:$0xff]
    %v1497 = vld [vmem:[#allocation3 + $0x38] ss:$0 sm:$0xff]
    %1500 = vrot.lane.b32.xlu0 %v1496, 44
    %v1501 = vpop.permute.xlu0 %1500
    %1502 = vrot.lane.b32.xlu0 %v1497, 44
    %v1503 = vpop.permute.xlu0 %1502
    %v1504 = vsel %vm1214, %v1501, %v1503
    %v1506 = vmax.f32 %v1496, %v1504
    %v1507 = vld [vmem:[#allocation3 + $0x31] ss:$0 sm:$0xff]
    %v1508 = vld [vmem:[#allocation3 + $0x39] ss:$0 sm:$0xff]
    %1511 = vrot.lane.b32.xlu0 %v1507, 44
    %v1512 = vpop.permute.xlu0 %1511
    %1513 = vrot.lane.b32.xlu0 %v1508, 44
    %v1514 = vpop.permute.xlu0 %1513
    %v1515 = vsel %vm1214, %v1512, %v1514
    %v1517 = vmax.f32 %v1507, %v1515
    %v1518 = vmax.f32 %v1506, %v1517
    %1519 = vst.msk [vmem:[#allocation4 + $0xc] sm:$0x1] %vm1230, %v1518
    %v1520 = vld [vmem:[#allocation3 + $0x32] ss:$0 sm:$0xff]
    %v1521 = vld [vmem:[#allocation3 + $0x3a] ss:$0 sm:$0xff]
    %1524 = vrot.lane.b32.xlu0 %v1520, 44
    %v1525 = vpop.permute.xlu0 %1524
    %1526 = vrot.lane.b32.xlu0 %v1521, 44
    %v1527 = vpop.permute.xlu0 %1526
    %v1528 = vsel %vm1214, %v1525, %v1527
    %v1530 = vmax.f32 %v1520, %v1528
    %v1531 = vld [vmem:[#allocation3 + $0x33] ss:$0 sm:$0xff]
    %v1532 = vld [vmem:[#allocation3 + $0x3b] ss:$0 sm:$0xff]
    %1535 = vrot.lane.b32.xlu0 %v1531, 44
    %v1536 = vpop.permute.xlu0 %1535
    %1537 = vrot.lane.b32.xlu0 %v1532, 44
    %v1538 = vpop.permute.xlu0 %1537
    %v1539 = vsel %vm1214, %v1536, %v1538
    %v1541 = vmax.f32 %v1531, %v1539
    %v1542 = vmax.f32 %v1530, %v1541
    %1543 = vst.msk [vmem:[#allocation4 + $0xd] sm:$0x1] %vm1230, %v1542
    %v1544 = vld [vmem:[#allocation3 + $0x34] ss:$0 sm:$0xff]
    %v1545 = vld [vmem:[#allocation3 + $0x3c] ss:$0 sm:$0xff]
    %1548 = vrot.lane.b32.xlu0 %v1544, 44
    %v1549 = vpop.permute.xlu0 %1548
    %1550 = vrot.lane.b32.xlu0 %v1545, 44
    %v1551 = vpop.permute.xlu0 %1550
    %v1552 = vsel %vm1214, %v1549, %v1551
    %v1554 = vmax.f32 %v1544, %v1552
    %v1555 = vld [vmem:[#allocation3 + $0x35] ss:$0 sm:$0xff]
    %v1556 = vld [vmem:[#allocation3 + $0x3d] ss:$0 sm:$0xff]
    %1559 = vrot.lane.b32.xlu0 %v1555, 44
    %v1560 = vpop.permute.xlu0 %1559
    %1561 = vrot.lane.b32.xlu0 %v1556, 44
    %v1562 = vpop.permute.xlu0 %1561
    %v1563 = vsel %vm1214, %v1560, %v1562
    %v1565 = vmax.f32 %v1555, %v1563
    %v1566 = vmax.f32 %v1554, %v1565
    %1567 = vst.msk [vmem:[#allocation4 + $0xe] sm:$0x1] %vm1230, %v1566
    %v1568 = vld [vmem:[#allocation3 + $0x36] ss:$0 sm:$0xff]
    %v1569 = vld [vmem:[#allocation3 + $0x3e] ss:$0 sm:$0xff]
    %1572 = vrot.lane.b32.xlu0 %v1568, 44
    %v1573 = vpop.permute.xlu0 %1572
    %1574 = vrot.lane.b32.xlu0 %v1569, 44
    %v1575 = vpop.permute.xlu0 %1574
    %v1576 = vsel %vm1214, %v1573, %v1575
    %v1578 = vmax.f32 %v1568, %v1576
    %v1579 = vld [vmem:[#allocation3 + $0x37] ss:$0 sm:$0xff]
    %v1580 = vld [vmem:[#allocation3 + $0x3f] ss:$0 sm:$0xff]
    %1583 = vrot.lane.b32.xlu0 %v1579, 44
    %v1584 = vpop.permute.xlu0 %1583
    %1585 = vrot.lane.b32.xlu0 %v1580, 44
    %v1586 = vpop.permute.xlu0 %1585
    %v1587 = vsel %vm1214, %v1584, %v1586
    %v1589 = vmax.f32 %v1579, %v1587
    %v1590 = vmax.f32 %v1578, %v1589
    %1591 = vst.msk [vmem:[#allocation4 + $0xf] sm:$0x1] %vm1230, %v1590
    %v1592 = vld [vmem:[#allocation3 + $0x40] ss:$0 sm:$0xff]
    %v1593 = vld [vmem:[#allocation3 + $0x48] ss:$0 sm:$0xff]
    %1596 = vrot.lane.b32.xlu0 %v1592, 44
    %v1597 = vpop.permute.xlu0 %1596
    %1598 = vrot.lane.b32.xlu0 %v1593, 44
    %v1599 = vpop.permute.xlu0 %1598
    %v1600 = vsel %vm1214, %v1597, %v1599
    %v1602 = vmax.f32 %v1592, %v1600
    %v1603 = vld [vmem:[#allocation3 + $0x41] ss:$0 sm:$0xff]
    %v1604 = vld [vmem:[#allocation3 + $0x49] ss:$0 sm:$0xff]
    %1607 = vrot.lane.b32.xlu0 %v1603, 44
    %v1608 = vpop.permute.xlu0 %1607
    %1609 = vrot.lane.b32.xlu0 %v1604, 44
    %v1610 = vpop.permute.xlu0 %1609
    %v1611 = vsel %vm1214, %v1608, %v1610
    %v1613 = vmax.f32 %v1603, %v1611
    %v1614 = vmax.f32 %v1602, %v1613
    %1615 = vst.msk [vmem:[#allocation4 + $0x10] sm:$0x1] %vm1230, %v1614
    %v1616 = vld [vmem:[#allocation3 + $0x42] ss:$0 sm:$0xff]
    %v1617 = vld [vmem:[#allocation3 + $0x4a] ss:$0 sm:$0xff]
    %1620 = vrot.lane.b32.xlu0 %v1616, 44
    %v1621 = vpop.permute.xlu0 %1620
    %1622 = vrot.lane.b32.xlu0 %v1617, 44
    %v1623 = vpop.permute.xlu0 %1622
    %v1624 = vsel %vm1214, %v1621, %v1623
    %v1626 = vmax.f32 %v1616, %v1624
    %v1627 = vld [vmem:[#allocation3 + $0x43] ss:$0 sm:$0xff]
    %v1628 = vld [vmem:[#allocation3 + $0x4b] ss:$0 sm:$0xff]
    %1631 = vrot.lane.b32.xlu0 %v1627, 44
    %v1632 = vpop.permute.xlu0 %1631
    %1633 = vrot.lane.b32.xlu0 %v1628, 44
    %v1634 = vpop.permute.xlu0 %1633
    %v1635 = vsel %vm1214, %v1632, %v1634
    %v1637 = vmax.f32 %v1627, %v1635
    %v1638 = vmax.f32 %v1626, %v1637
    %1639 = vst.msk [vmem:[#allocation4 + $0x11] sm:$0x1] %vm1230, %v1638
    %v1640 = vld [vmem:[#allocation3 + $0x44] ss:$0 sm:$0xff]
    %v1641 = vld [vmem:[#allocation3 + $0x4c] ss:$0 sm:$0xff]
    %1644 = vrot.lane.b32.xlu0 %v1640, 44
    %v1645 = vpop.permute.xlu0 %1644
    %1646 = vrot.lane.b32.xlu0 %v1641, 44
    %v1647 = vpop.permute.xlu0 %1646
    %v1648 = vsel %vm1214, %v1645, %v1647
    %v1650 = vmax.f32 %v1640, %v1648
    %v1651 = vld [vmem:[#allocation3 + $0x45] ss:$0 sm:$0xff]
    %v1652 = vld [vmem:[#allocation3 + $0x4d] ss:$0 sm:$0xff]
    %1655 = vrot.lane.b32.xlu0 %v1651, 44
    %v1656 = vpop.permute.xlu0 %1655
    %1657 = vrot.lane.b32.xlu0 %v1652, 44
    %v1658 = vpop.permute.xlu0 %1657
    %v1659 = vsel %vm1214, %v1656, %v1658
    %v1661 = vmax.f32 %v1651, %v1659
    %v1662 = vmax.f32 %v1650, %v1661
    %1663 = vst.msk [vmem:[#allocation4 + $0x12] sm:$0x1] %vm1230, %v1662
    %v1664 = vld [vmem:[#allocation3 + $0x46] ss:$0 sm:$0xff]
    %v1665 = vld [vmem:[#allocation3 + $0x4e] ss:$0 sm:$0xff]
    %1668 = vrot.lane.b32.xlu0 %v1664, 44
    %v1669 = vpop.permute.xlu0 %1668
    %1670 = vrot.lane.b32.xlu0 %v1665, 44
    %v1671 = vpop.permute.xlu0 %1670
    %v1672 = vsel %vm1214, %v1669, %v1671
    %v1674 = vmax.f32 %v1664, %v1672
    %v1675 = vld [vmem:[#allocation3 + $0x47] ss:$0 sm:$0xff]
    %v1676 = vld [vmem:[#allocation3 + $0x4f] ss:$0 sm:$0xff]
    %1679 = vrot.lane.b32.xlu0 %v1675, 44
    %v1680 = vpop.permute.xlu0 %1679
    %1681 = vrot.lane.b32.xlu0 %v1676, 44
    %v1682 = vpop.permute.xlu0 %1681
    %v1683 = vsel %vm1214, %v1680, %v1682
    %v1685 = vmax.f32 %v1675, %v1683
    %v1686 = vmax.f32 %v1674, %v1685
    %1687 = vst.msk [vmem:[#allocation4 + $0x13] sm:$0x1] %vm1230, %v1686
    %v1688 = vld [vmem:[#allocation3 + $0x50] ss:$0 sm:$0xff]
    %v1689 = vld [vmem:[#allocation3 + $0x58] ss:$0 sm:$0xff]
    %1692 = vrot.lane.b32.xlu0 %v1688, 44
    %v1693 = vpop.permute.xlu0 %1692
    %1694 = vrot.lane.b32.xlu0 %v1689, 44
    %v1695 = vpop.permute.xlu0 %1694
    %v1696 = vsel %vm1214, %v1693, %v1695
    %v1698 = vmax.f32 %v1688, %v1696
    %v1699 = vld [vmem:[#allocation3 + $0x51] ss:$0 sm:$0xff]
    %v1700 = vld [vmem:[#allocation3 + $0x59] ss:$0 sm:$0xff]
    %1703 = vrot.lane.b32.xlu0 %v1699, 44
    %v1704 = vpop.permute.xlu0 %1703
    %1705 = vrot.lane.b32.xlu0 %v1700, 44
    %v1706 = vpop.permute.xlu0 %1705
    %v1707 = vsel %vm1214, %v1704, %v1706
    %v1709 = vmax.f32 %v1699, %v1707
    %v1710 = vmax.f32 %v1698, %v1709
    %1711 = vst.msk [vmem:[#allocation4 + $0x14] sm:$0x1] %vm1230, %v1710
    %v1712 = vld [vmem:[#allocation3 + $0x52] ss:$0 sm:$0xff]
    %v1713 = vld [vmem:[#allocation3 + $0x5a] ss:$0 sm:$0xff]
    %1716 = vrot.lane.b32.xlu0 %v1712, 44
    %v1717 = vpop.permute.xlu0 %1716
    %1718 = vrot.lane.b32.xlu0 %v1713, 44
    %v1719 = vpop.permute.xlu0 %1718
    %v1720 = vsel %vm1214, %v1717, %v1719
    %v1722 = vmax.f32 %v1712, %v1720
    %v1723 = vld [vmem:[#allocation3 + $0x53] ss:$0 sm:$0xff]
    %v1724 = vld [vmem:[#allocation3 + $0x5b] ss:$0 sm:$0xff]
    %1727 = vrot.lane.b32.xlu0 %v1723, 44
    %v1728 = vpop.permute.xlu0 %1727
    %1729 = vrot.lane.b32.xlu0 %v1724, 44
    %v1730 = vpop.permute.xlu0 %1729
    %v1731 = vsel %vm1214, %v1728, %v1730
    %v1733 = vmax.f32 %v1723, %v1731
    %v1734 = vmax.f32 %v1722, %v1733
    %1735 = vst.msk [vmem:[#allocation4 + $0x15] sm:$0x1] %vm1230, %v1734
    %v1736 = vld [vmem:[#allocation3 + $0x54] ss:$0 sm:$0xff]
    %v1737 = vld [vmem:[#allocation3 + $0x5c] ss:$0 sm:$0xff]
    %1740 = vrot.lane.b32.xlu0 %v1736, 44
    %v1741 = vpop.permute.xlu0 %1740
    %1742 = vrot.lane.b32.xlu0 %v1737, 44
    %v1743 = vpop.permute.xlu0 %1742
    %v1744 = vsel %vm1214, %v1741, %v1743
    %v1746 = vmax.f32 %v1736, %v1744
    %v1747 = vld [vmem:[#allocation3 + $0x55] ss:$0 sm:$0xff]
    %v1748 = vld [vmem:[#allocation3 + $0x5d] ss:$0 sm:$0xff]
    %1751 = vrot.lane.b32.xlu0 %v1747, 44
    %v1752 = vpop.permute.xlu0 %1751
    %1753 = vrot.lane.b32.xlu0 %v1748, 44
    %v1754 = vpop.permute.xlu0 %1753
    %v1755 = vsel %vm1214, %v1752, %v1754
    %v1757 = vmax.f32 %v1747, %v1755
    %v1758 = vmax.f32 %v1746, %v1757
    %1759 = vst.msk [vmem:[#allocation4 + $0x16] sm:$0x1] %vm1230, %v1758
    %v1760 = vld [vmem:[#allocation3 + $0x56] ss:$0 sm:$0xff]
    %v1761 = vld [vmem:[#allocation3 + $0x5e] ss:$0 sm:$0xff]
    %1764 = vrot.lane.b32.xlu0 %v1760, 44
    %v1765 = vpop.permute.xlu0 %1764
    %1766 = vrot.lane.b32.xlu0 %v1761, 44
    %v1767 = vpop.permute.xlu0 %1766
    %v1768 = vsel %vm1214, %v1765, %v1767
    %v1770 = vmax.f32 %v1760, %v1768
    %v1771 = vld [vmem:[#allocation3 + $0x57] ss:$0 sm:$0xff]
    %v1772 = vld [vmem:[#allocation3 + $0x5f] ss:$0 sm:$0xff]
    %1775 = vrot.lane.b32.xlu0 %v1771, 44
    %v1776 = vpop.permute.xlu0 %1775
    %1777 = vrot.lane.b32.xlu0 %v1772, 44
    %v1778 = vpop.permute.xlu0 %1777
    %v1779 = vsel %vm1214, %v1776, %v1778
    %v1781 = vmax.f32 %v1771, %v1779
    %v1782 = vmax.f32 %v1770, %v1781
    %1783 = vst.msk [vmem:[#allocation4 + $0x17] sm:$0x1] %vm1230, %v1782
    %v1784 = vld [vmem:[#allocation3 + $0x60] ss:$0 sm:$0xff]
    %v1785 = vld [vmem:[#allocation3 + $0x68] ss:$0 sm:$0xff]
    %1788 = vrot.lane.b32.xlu0 %v1784, 44
    %v1789 = vpop.permute.xlu0 %1788
    %1790 = vrot.lane.b32.xlu0 %v1785, 44
    %v1791 = vpop.permute.xlu0 %1790
    %v1792 = vsel %vm1214, %v1789, %v1791
    %v1794 = vmax.f32 %v1784, %v1792
    %v1795 = vld [vmem:[#allocation3 + $0x61] ss:$0 sm:$0xff]
    %v1796 = vld [vmem:[#allocation3 + $0x69] ss:$0 sm:$0xff]
    %1799 = vrot.lane.b32.xlu0 %v1795, 44
    %v1800 = vpop.permute.xlu0 %1799
    %1801 = vrot.lane.b32.xlu0 %v1796, 44
    %v1802 = vpop.permute.xlu0 %1801
    %v1803 = vsel %vm1214, %v1800, %v1802
    %v1805 = vmax.f32 %v1795, %v1803
    %v1806 = vmax.f32 %v1794, %v1805
    %1807 = vst.msk [vmem:[#allocation4 + $0x18] sm:$0x1] %vm1230, %v1806
    %v1808 = vld [vmem:[#allocation3 + $0x62] ss:$0 sm:$0xff]
    %v1809 = vld [vmem:[#allocation3 + $0x6a] ss:$0 sm:$0xff]
    %1812 = vrot.lane.b32.xlu0 %v1808, 44
    %v1813 = vpop.permute.xlu0 %1812
    %1814 = vrot.lane.b32.xlu0 %v1809, 44
    %v1815 = vpop.permute.xlu0 %1814
    %v1816 = vsel %vm1214, %v1813, %v1815
    %v1818 = vmax.f32 %v1808, %v1816
    %v1819 = vld [vmem:[#allocation3 + $0x63] ss:$0 sm:$0xff]
    %v1820 = vld [vmem:[#allocation3 + $0x6b] ss:$0 sm:$0xff]
    %1823 = vrot.lane.b32.xlu0 %v1819, 44
    %v1824 = vpop.permute.xlu0 %1823
    %1825 = vrot.lane.b32.xlu0 %v1820, 44
    %v1826 = vpop.permute.xlu0 %1825
    %v1827 = vsel %vm1214, %v1824, %v1826
    %v1829 = vmax.f32 %v1819, %v1827
    %v1830 = vmax.f32 %v1818, %v1829
    %1831 = vst.msk [vmem:[#allocation4 + $0x19] sm:$0x1] %vm1230, %v1830
    %v1832 = vld [vmem:[#allocation3 + $0x64] ss:$0 sm:$0xff]
    %v1833 = vld [vmem:[#allocation3 + $0x6c] ss:$0 sm:$0xff]
    %1836 = vrot.lane.b32.xlu0 %v1832, 44
    %v1837 = vpop.permute.xlu0 %1836
    %1838 = vrot.lane.b32.xlu0 %v1833, 44
    %v1839 = vpop.permute.xlu0 %1838
    %v1840 = vsel %vm1214, %v1837, %v1839
    %v1842 = vmax.f32 %v1832, %v1840
    %v1843 = vld [vmem:[#allocation3 + $0x65] ss:$0 sm:$0xff]
    %v1844 = vld [vmem:[#allocation3 + $0x6d] ss:$0 sm:$0xff]
    %1847 = vrot.lane.b32.xlu0 %v1843, 44
    %v1848 = vpop.permute.xlu0 %1847
    %1849 = vrot.lane.b32.xlu0 %v1844, 44
    %v1850 = vpop.permute.xlu0 %1849
    %v1851 = vsel %vm1214, %v1848, %v1850
    %v1853 = vmax.f32 %v1843, %v1851
    %v1854 = vmax.f32 %v1842, %v1853
    %1855 = vst.msk [vmem:[#allocation4 + $0x1a] sm:$0x1] %vm1230, %v1854
    %v1856 = vld [vmem:[#allocation3 + $0x66] ss:$0 sm:$0xff]
    %v1857 = vld [vmem:[#allocation3 + $0x6e] ss:$0 sm:$0xff]
    %1860 = vrot.lane.b32.xlu0 %v1856, 44
    %v1861 = vpop.permute.xlu0 %1860
    %1862 = vrot.lane.b32.xlu0 %v1857, 44
    %v1863 = vpop.permute.xlu0 %1862
    %v1864 = vsel %vm1214, %v1861, %v1863
    %v1866 = vmax.f32 %v1856, %v1864
    %v1867 = vld [vmem:[#allocation3 + $0x67] ss:$0 sm:$0xff]
    %v1868 = vld [vmem:[#allocation3 + $0x6f] ss:$0 sm:$0xff]
    %1871 = vrot.lane.b32.xlu0 %v1867, 44
    %v1872 = vpop.permute.xlu0 %1871
    %1873 = vrot.lane.b32.xlu0 %v1868, 44
    %v1874 = vpop.permute.xlu0 %1873
    %v1875 = vsel %vm1214, %v1872, %v1874
    %v1877 = vmax.f32 %v1867, %v1875
    %v1878 = vmax.f32 %v1866, %v1877
    %1879 = vst.msk [vmem:[#allocation4 + $0x1b] sm:$0x1] %vm1230, %v1878
    %v1880 = vld [vmem:[#allocation4] sm:$0xff]
    %v1881 = vld [vmem:[#allocation4 + $0x8] sm:$0x3]
    %vm1882 = vcmask 687104
    %1883 = vst.msk [vmem:[#allocation5] sm:$0xff] %vm1882, %v1880
    %vm1884 = vcmask 680960
    %1885 = vst.msk [vmem:[#allocation5 + $0x20] sm:$0x3] %vm1884, %v1881
    %v1886 = vld [vmem:[#allocation4 + $0x1] sm:$0xff]
    %v1887 = vld [vmem:[#allocation4 + $0x9] sm:$0x3]
    %1890 = vrot.lane.b32.xlu0 %v1886, 84
    %v1891 = vpop.permute.xlu0 %1890
    %1892 = vrot.lane.b32.xlu0 %v1887, 84
    %v1893 = vpop.permute.xlu0 %1892
    %vm1896 = vcmask 1048224
    %1897 = vst.msk [vmem:[#allocation5] sm:$0xff] %vm1896, %v1891
    %1898 = vst.msk [vmem:[#allocation5 + $0x8] sm:$0xff] %vm1192, %v1891
    %vm1899 = vcmask 1042080
    %1900 = vst.msk [vmem:[#allocation5 + $0x20] sm:$0x3] %vm1899, %v1893
    %vm1901 = vcmask 320512
    %1902 = vst.msk [vmem:[#allocation5 + $0x28] sm:$0x3] %vm1901, %v1893
    %v1903 = vld [vmem:[#allocation4 + $0x2] sm:$0xff]
    %v1904 = vld [vmem:[#allocation4 + $0xa] sm:$0x3]
    %1907 = vrot.lane.b32.xlu0 %v1903, 40
    %v1908 = vpop.permute.xlu0 %1907
    %1909 = vrot.lane.b32.xlu0 %v1904, 40
    %v1910 = vpop.permute.xlu0 %1909
    %vm1913 = vcmask 1015104
    %1914 = vst.msk [vmem:[#allocation5 + $0x8] sm:$0xff] %vm1913, %v1908
    %vm1915 = vcmask 1008960
    %1916 = vst.msk [vmem:[#allocation5 + $0x28] sm:$0x3] %vm1915, %v1910
    %v1917 = vld [vmem:[#allocation4 + $0x3] sm:$0xff]
    %v1918 = vld [vmem:[#allocation4 + $0xb] sm:$0x3]
    %1921 = vrot.lane.b32.xlu0 %v1917, 124
    %v1922 = vpop.permute.xlu0 %1921
    %1923 = vrot.lane.b32.xlu0 %v1918, 124
    %v1924 = vpop.permute.xlu0 %1923
    %vm1927 = vcmask 1048544
    %1928 = vst.msk [vmem:[#allocation5 + $0x8] sm:$0xff] %vm1927, %v1922
    %vm1929 = vcmask 654336
    %1930 = vst.msk [vmem:[#allocation5 + $0x10] sm:$0xff] %vm1929, %v1922
    %vm1931 = vcmask 1042400
    %1932 = vst.msk [vmem:[#allocation5 + $0x28] sm:$0x3] %vm1931, %v1924
    %vm1933 = vcmask 648192
    %1934 = vst.msk [vmem:[#allocation5 + $0x30] sm:$0x3] %vm1933, %v1924
    %v1935 = vld [vmem:[#allocation4 + $0x4] sm:$0xff]
    %v1936 = vld [vmem:[#allocation4 + $0xc] sm:$0x3]
    %1939 = vrot.lane.b32.xlu0 %v1935, 80
    %v1940 = vpop.permute.xlu0 %1939
    %1941 = vrot.lane.b32.xlu0 %v1936, 80
    %v1942 = vpop.permute.xlu0 %1941
    %vm1945 = vcmask 1048192
    %1946 = vst.msk [vmem:[#allocation5 + $0x10] sm:$0xff] %vm1945, %v1940
    %vm1947 = vcmask 293888
    %1948 = vst.msk [vmem:[#allocation5 + $0x18] sm:$0xff] %vm1947, %v1940
    %vm1949 = vcmask 1042048
    %1950 = vst.msk [vmem:[#allocation5 + $0x30] sm:$0x3] %vm1949, %v1942
    %vm1951 = vcmask 287744
    %1952 = vst.msk [vmem:[#allocation5 + $0x38] sm:$0x3] %vm1951, %v1942
    %v1953 = vld [vmem:[#allocation4 + $0xe] sm:$0xff]
    %v1954 = vld [vmem:[#allocation4 + $0x16] sm:$0x3]
    %vm1957 = vcmask 1041408
    %v1958 = vrot.slane %v1953, 6
    %v1959 = vrot.slane %v1954, 6
    %v1960 = vsel %vm1957, %v1958, %v1959
    %vm1963 = vcmask 687106
    %1964 = vst.msk [vmem:[#allocation5 + $0x20] sm:$0xfc] %vm1963, %v1958
    %vm1965 = vcmask 683008
    %1966 = vst.msk [vmem:[#allocation5 + $0x40] sm:$0xf] %vm1965, %v1960
    %v1967 = vld [vmem:[#allocation4 + $0xf] sm:$0xff]
    %v1968 = vld [vmem:[#allocation4 + $0x17] sm:$0x3]
    %v1971 = vrot.slane %v1967, 6
    %v1972 = vrot.slane %v1968, 6
    %v1973 = vsel %vm1957, %v1971, %v1972
    %1974 = vrot.lane.b32.xlu0 %v1971, 84
    %v1975 = vpop.permute.xlu0 %1974
    %1976 = vrot.lane.b32.xlu0 %v1973, 84
    %v1977 = vpop.permute.xlu0 %1976
    %vm1980 = vcmask 1048226
    %1981 = vst.msk [vmem:[#allocation5 + $0x20] sm:$0xfc] %vm1980, %v1975
    %vm1982 = vcmask 326658
    %1983 = vst.msk [vmem:[#allocation5 + $0x28] sm:$0xfc] %vm1982, %v1975
    %vm1984 = vcmask 1044128
    %1985 = vst.msk [vmem:[#allocation5 + $0x40] sm:$0xf] %vm1984, %v1977
    %vm1986 = vcmask 322560
    %1987 = vst.msk [vmem:[#allocation5 + $0x48] sm:$0xf] %vm1986, %v1977
    %v1988 = vld [vmem:[#allocation4 + $0x10] sm:$0xff]
    %v1989 = vld [vmem:[#allocation4 + $0x18] sm:$0x3]
    %v1992 = vrot.slane %v1988, 6
    %v1993 = vrot.slane %v1989, 6
    %v1994 = vsel %vm1957, %v1992, %v1993
    %1995 = vrot.lane.b32.xlu0 %v1992, 40
    %v1996 = vpop.permute.xlu0 %1995
    %1997 = vrot.lane.b32.xlu0 %v1994, 40
    %v1998 = vpop.permute.xlu0 %1997
    %vm2001 = vcmask 1015106
    %2002 = vst.msk [vmem:[#allocation5 + $0x28] sm:$0xfc] %vm2001, %v1996
    %vm2003 = vcmask 1011008
    %2004 = vst.msk [vmem:[#allocation5 + $0x48] sm:$0xf] %vm2003, %v1998
    %v2005 = vld [vmem:[#allocation4 + $0x11] sm:$0xff]
    %v2006 = vld [vmem:[#allocation4 + $0x19] sm:$0x3]
    %v2009 = vrot.slane %v2005, 6
    %v2010 = vrot.slane %v2006, 6
    %v2011 = vsel %vm1957, %v2009, %v2010
    %2012 = vrot.lane.b32.xlu0 %v2009, 124
    %v2013 = vpop.permute.xlu0 %2012
    %2014 = vrot.lane.b32.xlu0 %v2011, 124
    %v2015 = vpop.permute.xlu0 %2014
    %vm2018 = vcmask 1048546
    %2019 = vst.msk [vmem:[#allocation5 + $0x28] sm:$0xfc] %vm2018, %v2013
    %vm2020 = vcmask 654338
    %2021 = vst.msk [vmem:[#allocation5 + $0x30] sm:$0xfc] %vm2020, %v2013
    %vm2022 = vcmask 1044448
    %2023 = vst.msk [vmem:[#allocation5 + $0x48] sm:$0xf] %vm2022, %v2015
    %vm2024 = vcmask 650240
    %2025 = vst.msk [vmem:[#allocation5 + $0x50] sm:$0xf] %vm2024, %v2015
    %v2026 = vld [vmem:[#allocation4 + $0x12] sm:$0xff]
    %v2027 = vld [vmem:[#allocation4 + $0x1a] sm:$0x3]
    %v2030 = vrot.slane %v2026, 6
    %v2031 = vrot.slane %v2027, 6
    %v2032 = vsel %vm1957, %v2030, %v2031
    %2033 = vrot.lane.b32.xlu0 %v2030, 80
    %v2034 = vpop.permute.xlu0 %2033
    %2035 = vrot.lane.b32.xlu0 %v2032, 80
    %v2036 = vpop.permute.xlu0 %2035
    %vm2039 = vcmask 1048194
    %2040 = vst.msk [vmem:[#allocation5 + $0x30] sm:$0xfc] %vm2039, %v2034
    %vm2041 = vcmask 293890
    %2042 = vst.msk [vmem:[#allocation5 + $0x38] sm:$0xfc] %vm2041, %v2034
    %vm2043 = vcmask 1044096
    %2044 = vst.msk [vmem:[#allocation5 + $0x50] sm:$0xf] %vm2043, %v2036
    %vm2045 = vcmask 289792
    %2046 = vst.msk [vmem:[#allocation5 + $0x58] sm:$0xf] %vm2045, %v2036
    %v2047 = vld [vmem:[#allocation5] sm:$0xff]
    %v2048 = vld [vmem:[#allocation5 + $0x8] sm:$0xff]
    %v2049 = vld [vmem:[#allocation5 + $0x10] sm:$0xff]
    %v2050 = vld [vmem:[#allocation5 + $0x18] sm:$0xff]
    %v2051 = vld [vmem:[#allocation5 + $0x20] sm:$0xff]
    %v2052 = vld [vmem:[#allocation5 + $0x28] sm:$0xff]
    %v2053 = vld [vmem:[#allocation5 + $0x30] sm:$0xff]
    %v2054 = vld [vmem:[#allocation5 + $0x38] sm:$0xff]
    %v2055 = vld [vmem:[#allocation5 + $0x40] sm:$0xf]
    %v2056 = vld [vmem:[#allocation5 + $0x48] sm:$0xf]
    %v2057 = vld [vmem:[#allocation5 + $0x50] sm:$0xf]
    %v2058 = vld [vmem:[#allocation5 + $0x58] sm:$0xf]
    %v2059 = vld [vmem:[%s3] sm:$0xff]
    %v2060 = vld [vmem:[%s3 + $0x8] sm:$0xff]
    %v2061 = vld [vmem:[%s3 + $0x10] sm:$0xff]
    %v2062 = vld [vmem:[%s3 + $0x18] sm:$0xff]
    %v2063 = vld [vmem:[%s3 + $0x20] sm:$0xff]
    %v2064 = vld [vmem:[%s3 + $0x28] sm:$0xff]
    %v2065 = vld [vmem:[%s3 + $0x30] sm:$0xff]
    %v2066 = vld [vmem:[%s3 + $0x38] sm:$0xff]
    %v2067 = vld [vmem:[%s3 + $0x40] sm:$0xff]
    %v2068 = vld [vmem:[%s3 + $0x48] sm:$0xff]
    %v2069 = vld [vmem:[%s3 + $0x50] sm:$0xff]
    %v2070 = vld [vmem:[%s3 + $0x58] sm:$0xff]
    %v2071 = vld [vmem:[%s3 + $0x60] sm:$0xff]
    %v2072 = vld [vmem:[%s3 + $0x68] sm:$0xff]
    %v2073 = vld [vmem:[%s3 + $0x70] sm:$0xff]
    %v2074 = vld [vmem:[%s3 + $0x78] sm:$0xff]
    %v2075 = vld [vmem:[%s3 + $0x80] sm:$0xff]
    %v2076 = vld [vmem:[%s3 + $0x88] sm:$0xff]
    %v2077 = vld [vmem:[%s3 + $0x90] sm:$0xff]
    %v2078 = vld [vmem:[%s3 + $0x98] sm:$0xff]
    %v2079 = vld [vmem:[%s3 + $0xa0] sm:$0xff]
    %v2080 = vld [vmem:[%s3 + $0xa8] sm:$0xff]
    %v2081 = vld [vmem:[%s3 + $0xb0] sm:$0xff]
    %v2082 = vld [vmem:[%s3 + $0xb8] sm:$0xff]
    %v2083 = vld [vmem:[%s3 + $0xc0] sm:$0xff]
    %v2084 = vld [vmem:[%s3 + $0xc8] sm:$0xff]
    %v2085 = vld [vmem:[%s3 + $0xd0] sm:$0xff]
    %v2086 = vld [vmem:[%s3 + $0xd8] sm:$0xff]
    %v2087 = vld [vmem:[%s3 + $0xe0] sm:$0xff]
    %v2088 = vld [vmem:[%s3 + $0xe8] sm:$0xff]
    %v2089 = vld [vmem:[%s3 + $0xf0] sm:$0xff]
    %v2090 = vld [vmem:[%s3 + $0xf8] sm:$0xff]
    %v2091 = vld [vmem:[%s3 + $0x100] sm:$0xff]
    %v2092 = vld [vmem:[%s3 + $0x108] sm:$0xff]
    %v2093 = vld [vmem:[%s3 + $0x110] sm:$0xff]
    %v2094 = vld [vmem:[%s3 + $0x118] sm:$0xff]
    %v2095 = vld [vmem:[%s3 + $0x120] sm:$0xff]
    %v2096 = vld [vmem:[%s3 + $0x128] sm:$0xff]
    %v2097 = vld [vmem:[%s3 + $0x130] sm:$0xff]
    %v2098 = vld [vmem:[%s3 + $0x138] sm:$0xff]
    %v2099 = vld [vmem:[%s3 + $0x140] sm:$0xff]
    %v2100 = vld [vmem:[%s3 + $0x148] sm:$0xff]
    %v2101 = vld [vmem:[%s3 + $0x150] sm:$0xff]
    %v2102 = vld [vmem:[%s3 + $0x158] sm:$0xff]
    %v2103 = vld [vmem:[%s3 + $0x160] sm:$0xff]
    %v2104 = vld [vmem:[%s3 + $0x168] sm:$0xff]
    %v2105 = vld [vmem:[%s3 + $0x170] sm:$0xff]
    %v2106 = vld [vmem:[%s3 + $0x178] sm:$0xff]
    %v2107 = vld [vmem:[%s3 + $0x180] sm:$0xff]
    %v2108 = vld [vmem:[%s3 + $0x188] sm:$0xff]
    %v2109 = vld [vmem:[%s3 + $0x190] sm:$0xff]
    %v2110 = vld [vmem:[%s3 + $0x198] sm:$0xff]
    %v2111 = vld [vmem:[%s3 + $0x1a0] sm:$0xff]
    %v2112 = vld [vmem:[%s3 + $0x1a8] sm:$0xff]
    %v2113 = vld [vmem:[%s3 + $0x1b0] sm:$0xff]
    %v2114 = vld [vmem:[%s3 + $0x1b8] sm:$0xff]
    %v2115 = vld [vmem:[%s3 + $0x1c0] sm:$0xff]
    %v2116 = vld [vmem:[%s3 + $0x1c8] sm:$0xff]
    %v2117 = vld [vmem:[%s3 + $0x1d0] sm:$0xff]
    %v2118 = vld [vmem:[%s3 + $0x1d8] sm:$0xff]
    %v2119 = vld [vmem:[%s3 + $0x1e0] sm:$0xff]
    %v2120 = vld [vmem:[%s3 + $0x1e8] sm:$0xff]
    %v2121 = vld [vmem:[%s3 + $0x1f0] sm:$0xff]
    %v2122 = vld [vmem:[%s3 + $0x1f8] sm:$0xff]
    %v2123 = vld [vmem:[%s3 + $0x200] sm:$0xff]
    %v2124 = vld [vmem:[%s3 + $0x208] sm:$0xff]
    %v2125 = vld [vmem:[%s3 + $0x210] sm:$0xff]
    %v2126 = vld [vmem:[%s3 + $0x218] sm:$0xff]
    %v2127 = vld [vmem:[%s3 + $0x220] sm:$0xff]
    %v2128 = vld [vmem:[%s3 + $0x228] sm:$0xff]
    %v2129 = vld [vmem:[%s3 + $0x230] sm:$0xff]
    %v2130 = vld [vmem:[%s3 + $0x238] sm:$0xff]
    %v2131 = vld [vmem:[%s3 + $0x240] sm:$0xff]
    %v2132 = vld [vmem:[%s3 + $0x248] sm:$0xff]
    %v2133 = vld [vmem:[%s3 + $0x250] sm:$0xff]
    %v2134 = vld [vmem:[%s3 + $0x258] sm:$0xff]
    %v2135 = vld [vmem:[%s3 + $0x260] sm:$0xff]
    %v2136 = vld [vmem:[%s3 + $0x268] sm:$0xff]
    %v2137 = vld [vmem:[%s3 + $0x270] sm:$0xff]
    %v2138 = vld [vmem:[%s3 + $0x278] sm:$0xff]
    %v2139 = vld [vmem:[%s3 + $0x280] sm:$0xff]
    %v2140 = vld [vmem:[%s3 + $0x288] sm:$0xff]
    %v2141 = vld [vmem:[%s3 + $0x290] sm:$0xff]
    %v2142 = vld [vmem:[%s3 + $0x298] sm:$0xff]
    %v2143 = vld [vmem:[%s3 + $0x2a0] sm:$0xff]
    %v2144 = vld [vmem:[%s3 + $0x2a8] sm:$0xff]
    %v2145 = vld [vmem:[%s3 + $0x2b0] sm:$0xff]
    %v2146 = vld [vmem:[%s3 + $0x2b8] sm:$0xff]
    %v2147 = vld [vmem:[%s3 + $0x2c0] sm:$0xff]
    %v2148 = vld [vmem:[%s3 + $0x2c8] sm:$0xff]
    %v2149 = vld [vmem:[%s3 + $0x2d0] sm:$0xff]
    %v2150 = vld [vmem:[%s3 + $0x2d8] sm:$0xff]
    %v2151 = vld [vmem:[%s3 + $0x2e0] sm:$0xff]
    %v2152 = vld [vmem:[%s3 + $0x2e8] sm:$0xff]
    %v2153 = vld [vmem:[%s3 + $0x2f0] sm:$0xff]
    %v2154 = vld [vmem:[%s3 + $0x2f8] sm:$0xff]
    %v2155 = vld [vmem:[%s3 + $0x300] sm:$0xff]
    %v2156 = vld [vmem:[%s3 + $0x308] sm:$0xff]
    %v2157 = vld [vmem:[%s3 + $0x310] sm:$0xff]
    %v2158 = vld [vmem:[%s3 + $0x318] sm:$0xff]
    %v2159 = vld [vmem:[%s3 + $0x320] sm:$0xff]
    %v2160 = vld [vmem:[%s3 + $0x328] sm:$0xff]
    %v2161 = vld [vmem:[%s3 + $0x330] sm:$0xff]
    %v2162 = vld [vmem:[%s3 + $0x338] sm:$0xff]
    %v2163 = vld [vmem:[%s3 + $0x340] sm:$0xf]
    %v2164 = vld [vmem:[%s3 + $0x348] sm:$0xf]
    %v2165 = vld [vmem:[%s4] sm:$0x3]
    %v2167 = vlaneseq
    %v2168 = vshrl.u32 %v2167, 7
    %v2169 = vsub.s32 0, %v2168
    %v2170 = vrot.slane %v2165, %v2169
    %v2171 = vlaneseq
    %v2172 = vshrl.u32 %v2171, 7
    %v2173 = vsub.s32 1, %v2172
    %v2174 = vrot.slane %v2165, %v2173
    %v2178 = vsel %vm1947, %v2050, 0
    %v2181 = vsel %vm1947, %v2054, 0
    %v2184 = vsel %vm1947, %v2058, 0
    %v2187 = vsel %vm351, %v2163, 0
    %v2190 = vsel %vm351, %v2164, 0
    %2192 = vmatprep.subr.mxu0 %v2060
    %2193 = vmatpush1.msra.mxu0 %v2059
    %2194 = vmatprep.subr.mxu0 %v2062
    %2195 = vmatpush1.msra.mxu0 %v2061
    %2196 = vmatprep.subr.mxu0 %v2064
    %2197 = vmatpush1.msra.mxu0 %v2063
    %2198 = vmatprep.subr.mxu0 %v2066
    %2199 = vmatpush1.msra.mxu0 %v2065
    %2200 = vmatprep.subr.mxu0 %v2068
    %2201 = vmatpush1.msra.mxu0 %v2067
    %2202 = vmatprep.subr.mxu0 %v2070
    %2203 = vmatpush1.msra.mxu0 %v2069
    %2204 = vmatprep.subr.mxu0 %v2072
    %2205 = vmatpush1.msra.mxu0 %v2071
    %2206 = vmatprep.subr.mxu0 %v2074
    %2207 = vmatpush1.msra.mxu0 %v2073
    %2208 = vmatprep.subr.mxu0 %v2076
    %2209 = vmatpush1.msra.mxu0 %v2075
    %2210 = vmatprep.subr.mxu0 %v2078
    %2211 = vmatpush1.msra.mxu0 %v2077
    %2212 = vmatprep.subr.mxu0 %v2080
    %2213 = vmatpush1.msra.mxu0 %v2079
    %2214 = vmatprep.subr.mxu0 %v2082
    %2215 = vmatpush1.msra.mxu0 %v2081
    %2216 = vmatprep.subr.mxu0 %v2084
    %2217 = vmatpush1.msra.mxu0 %v2083
    %2218 = vmatprep.subr.mxu0 %v2086
    %2219 = vmatpush1.msra.mxu0 %v2085
    %2220 = vmatprep.subr.mxu0 %v2088
    %2221 = vmatpush1.msra.mxu0 %v2087
    %2222 = vmatprep.subr.mxu0 %v2090
    %2223 = vmatpush1.msra.mxu0 %v2089
    %2224 = vmatprep.subr.mxu0 %v2092
    %2225 = vmatpush1.msra.mxu0 %v2091
    %2226 = vmatprep.subr.mxu0 %v2094
    %2227 = vmatpush1.msra.mxu0 %v2093
    %2228 = vmatprep.subr.mxu0 %v2096
    %2229 = vmatpush1.msra.mxu0 %v2095
    %2230 = vmatprep.subr.mxu0 %v2098
    %2231 = vmatpush1.msra.mxu0 %v2097
    %2232 = vmatprep.subr.mxu0 %v2100
    %2233 = vmatpush1.msra.mxu0 %v2099
    %2234 = vmatprep.subr.mxu0 %v2102
    %2235 = vmatpush1.msra.mxu0 %v2101
    %2236 = vmatprep.subr.mxu0 %v2104
    %2237 = vmatpush1.msra.mxu0 %v2103
    %2238 = vmatprep.subr.mxu0 %v2106
    %2239 = vmatpush1.msra.mxu0 %v2105
    %2240 = vmatprep.subr.mxu0 %v2108
    %2241 = vmatpush1.msra.mxu0 %v2107
    %2242 = vmatprep.subr.mxu0 %v2110
    %2243 = vmatpush1.msra.mxu0 %v2109
    %2244 = vmatprep.subr.mxu0 %v2112
    %2245 = vmatpush1.msra.mxu0 %v2111
    %2246 = vmatprep.subr.mxu0 %v2114
    %2247 = vmatpush1.msra.mxu0 %v2113
    %2248 = vmatprep.subr.mxu0 %v2116
    %2249 = vmatpush1.msra.mxu0 %v2115
    %2250 = vmatprep.subr.mxu0 %v2118
    %2251 = vmatpush1.msra.mxu0 %v2117
    %2252 = vmatprep.subr.mxu0 %v2120
    %2253 = vmatpush1.msra.mxu0 %v2119
    %2254 = vmatprep.subr.mxu0 %v2122
    %2255 = vmatpush1.msra.mxu0 %v2121
    %2256 = vmatprep.mubr.f32.mxu0 %v2048
    %2257 = vmatmul.mubr.f32.gmra.mrb[0].mxu0 %v2047
    %v2258 = vpop.f32.mrb[0].mxu0
    %v2259 = vadd.f32 %v2170, %v2258
    %v2260 = vpop.f32.mrb[0].mxu0
    %v2261 = vadd.f32 %v2174, %v2260
    %2262 = vmatprep.mubr.f32.mxu0 %v2052
    %2263 = vmatmul.mubr.f32.gmra.mrb[0].mxu0 %v2051
    %v2264 = vpop.f32.mrb[0].mxu0
    %v2265 = vadd.f32 %v2170, %v2264
    %v2266 = vpop.f32.mrb[0].mxu0
    %v2267 = vadd.f32 %v2174, %v2266
    %2268 = vmatprep.mubr.f32.mxu0 %v2056
    %2269 = vmatmul.mubr.f32.gmra.mrb[0].mxu0 %v2055
    %v2270 = vpop.f32.mrb[0].mxu0
    %v2271 = vadd.f32 %v2170, %v2270
    %v2272 = vpop.f32.mrb[0].mxu0
    %v2273 = vadd.f32 %v2174, %v2272
    %2274 = vdwg.mxu0
    %2275 = vmatprep.subr.mxu0 %v2124
    %2276 = vmatpush1.msra.mxu0 %v2123
    %2277 = vmatprep.subr.mxu0 %v2126
    %2278 = vmatpush1.msra.mxu0 %v2125
    %2279 = vmatprep.subr.mxu0 %v2128
    %2280 = vmatpush1.msra.mxu0 %v2127
    %2281 = vmatprep.subr.mxu0 %v2130
    %2282 = vmatpush1.msra.mxu0 %v2129
    %2283 = vmatprep.subr.mxu0 %v2132
    %2284 = vmatpush1.msra.mxu0 %v2131
    %2285 = vmatprep.subr.mxu0 %v2134
    %2286 = vmatpush1.msra.mxu0 %v2133
    %2287 = vmatprep.subr.mxu0 %v2136
    %2288 = vmatpush1.msra.mxu0 %v2135
    %2289 = vmatprep.subr.mxu0 %v2138
    %2290 = vmatpush1.msra.mxu0 %v2137
    %2291 = vmatprep.subr.mxu0 %v2140
    %2292 = vmatpush1.msra.mxu0 %v2139
    %2293 = vmatprep.subr.mxu0 %v2142
    %2294 = vmatpush1.msra.mxu0 %v2141
    %2295 = vmatprep.subr.mxu0 %v2144
    %2296 = vmatpush1.msra.mxu0 %v2143
    %2297 = vmatprep.subr.mxu0 %v2146
    %2298 = vmatpush1.msra.mxu0 %v2145
    %2299 = vmatprep.subr.mxu0 %v2148
    %2300 = vmatpush1.msra.mxu0 %v2147
    %2301 = vmatprep.subr.mxu0 %v2150
    %2302 = vmatpush1.msra.mxu0 %v2149
    %2303 = vmatprep.subr.mxu0 %v2152
    %2304 = vmatpush1.msra.mxu0 %v2151
    %2305 = vmatprep.subr.mxu0 %v2154
    %2306 = vmatpush1.msra.mxu0 %v2153
    %2307 = vmatprep.subr.mxu0 %v2156
    %2308 = vmatpush1.msra.mxu0 %v2155
    %2309 = vmatprep.subr.mxu0 %v2158
    %2310 = vmatpush1.msra.mxu0 %v2157
    %2311 = vmatprep.subr.mxu0 %v2160
    %2312 = vmatpush1.msra.mxu0 %v2159
    %2313 = vmatprep.subr.mxu0 %v2162
    %2314 = vmatpush1.msra.mxu0 %v2161
    %2315 = vmatprep.subr.mxu0 %v2190
    %2316 = vmatpush1.msra.mxu0 %v2187
    %2317 = vmatprep.subr.mxu0 0.0
    %2318 = vmatpush1.msra.mxu0 0.0
    %2319 = vmatprep.subr.mxu0 0.0
    %2320 = vmatpush1.msra.mxu0 0.0
    %2321 = vmatprep.subr.mxu0 0.0
    %2322 = vmatpush1.msra.mxu0 0.0
    %2323 = vmatprep.subr.mxu0 0.0
    %2324 = vmatpush1.msra.mxu0 0.0
    %2325 = vmatprep.subr.mxu0 0.0
    %2326 = vmatpush1.msra.mxu0 0.0
    %2327 = vmatprep.subr.mxu0 0.0
    %2328 = vmatpush1.msra.mxu0 0.0
    %2329 = vmatprep.subr.mxu0 0.0
    %2330 = vmatpush1.msra.mxu0 0.0
    %2331 = vmatprep.subr.mxu0 0.0
    %2332 = vmatpush1.msra.mxu0 0.0
    %2333 = vmatprep.subr.mxu0 0.0
    %2334 = vmatpush1.msra.mxu0 0.0
    %2335 = vmatprep.subr.mxu0 0.0
    %2336 = vmatpush1.msra.mxu0 0.0
    %2337 = vmatprep.subr.mxu0 0.0
    %2338 = vmatpush1.msra.mxu0 0.0
    %2339 = vmatprep.mubr.f32.mxu0 %v2178
    %2340 = vmatmul.mubr.f32.gmra.mrb[0].mxu0 %v2049
    %v2341 = vpop.f32.mrb[0].mxu0
    %v2342 = vadd.f32 %v2259, %v2341
    %v2343 = vpop.f32.mrb[0].mxu0
    %v2344 = vadd.f32 %v2261, %v2343
    %2345 = vmatprep.mubr.f32.mxu0 %v2181
    %2346 = vmatmul.mubr.f32.gmra.mrb[0].mxu0 %v2053
    %v2347 = vpop.f32.mrb[0].mxu0
    %v2348 = vadd.f32 %v2265, %v2347
    %v2349 = vpop.f32.mrb[0].mxu0
    %v2350 = vadd.f32 %v2267, %v2349
    %2351 = vmatprep.mubr.f32.mxu0 %v2184
    %2352 = vmatmul.mubr.f32.gmra.mrb[0].mxu0 %v2057
    %v2353 = vpop.f32.mrb[0].mxu0
    %v2354 = vadd.f32 %v2271, %v2353
    %v2355 = vpop.f32.mrb[0].mxu0
    %v2356 = vadd.f32 %v2273, %v2355
    %2357 = vdwg.mxu0
    %v2358 = vmax.f32 %v2342, 0.0
    %v2359 = vmax.f32 %v2344, 0.0
    %v2360 = vmax.f32 %v2348, 0.0
    %v2361 = vmax.f32 %v2350, 0.0
    %v2362 = vmax.f32 %v2354, 0.0
    %v2363 = vmax.f32 %v2356, 0.0
    %2364 = vst [vmem:[#allocation6] sm:$0xff] %v2358
    %2365 = vst.msk [vmem:[#allocation6 + $0x8] sm:$0xff] %vm43, %v2359
    %2366 = vst [vmem:[#allocation6 + $0x10] sm:$0xff] %v2360
    %2367 = vst.msk [vmem:[#allocation6 + $0x18] sm:$0xff] %vm43, %v2361
    %2368 = vst [vmem:[#allocation6 + $0x20] sm:$0xf] %v2362
    %2369 = vst.msk [vmem:[#allocation6 + $0x28] sm:$0xf] %vm47, %v2363
    %v2370 = vld [vmem:[#allocation6] ss:$0 sm:$0xff]
    %v2371 = vld [vmem:[#allocation6 + $0x8] ss:$0 sm:$0xff]
    %2374 = vrot.lane.b32.xlu0 %v2370, 48
    %v2375 = vpop.permute.xlu0 %2374
    %2376 = vrot.lane.b32.xlu0 %v2371, 48
    %v2377 = vpop.permute.xlu0 %2376
    %vm2378 = vcmask 392192
    %v2379 = vsel %vm2378, %v2375, %v2377
    %v2381 = vmax.f32 %v2370, %v2379
    %v2382 = vld [vmem:[#allocation6 + $0x1] ss:$0 sm:$0xff]
    %v2383 = vld [vmem:[#allocation6 + $0x9] ss:$0 sm:$0xff]
    %2386 = vrot.lane.b32.xlu0 %v2382, 48
    %v2387 = vpop.permute.xlu0 %2386
    %2388 = vrot.lane.b32.xlu0 %v2383, 48
    %v2389 = vpop.permute.xlu0 %2388
    %v2390 = vsel %vm2378, %v2387, %v2389
    %v2392 = vmax.f32 %v2382, %v2390
    %v2393 = vmax.f32 %v2381, %v2392
    %vm2394 = vcmask 647168
    %2395 = vst.msk [vmem:[#allocation7] sm:$0x1] %vm2394, %v2393
    %v2396 = vld [vmem:[#allocation6 + $0x2] ss:$0 sm:$0xff]
    %v2397 = vld [vmem:[#allocation6 + $0xa] ss:$0 sm:$0xff]
    %2400 = vrot.lane.b32.xlu0 %v2396, 48
    %v2401 = vpop.permute.xlu0 %2400
    %2402 = vrot.lane.b32.xlu0 %v2397, 48
    %v2403 = vpop.permute.xlu0 %2402
    %v2404 = vsel %vm2378, %v2401, %v2403
    %v2406 = vmax.f32 %v2396, %v2404
    %v2407 = vld [vmem:[#allocation6 + $0x3] ss:$0 sm:$0xff]
    %v2408 = vld [vmem:[#allocation6 + $0xb] ss:$0 sm:$0xff]
    %2411 = vrot.lane.b32.xlu0 %v2407, 48
    %v2412 = vpop.permute.xlu0 %2411
    %2413 = vrot.lane.b32.xlu0 %v2408, 48
    %v2414 = vpop.permute.xlu0 %2413
    %v2415 = vsel %vm2378, %v2412, %v2414
    %v2417 = vmax.f32 %v2407, %v2415
    %v2418 = vmax.f32 %v2406, %v2417
    %2419 = vst.msk [vmem:[#allocation7 + $0x1] sm:$0x1] %vm2394, %v2418
    %v2420 = vld [vmem:[#allocation6 + $0x4] ss:$0 sm:$0xff]
    %v2421 = vld [vmem:[#allocation6 + $0xc] ss:$0 sm:$0xff]
    %2424 = vrot.lane.b32.xlu0 %v2420, 48
    %v2425 = vpop.permute.xlu0 %2424
    %2426 = vrot.lane.b32.xlu0 %v2421, 48
    %v2427 = vpop.permute.xlu0 %2426
    %v2428 = vsel %vm2378, %v2425, %v2427
    %v2430 = vmax.f32 %v2420, %v2428
    %v2431 = vld [vmem:[#allocation6 + $0x5] ss:$0 sm:$0xff]
    %v2432 = vld [vmem:[#allocation6 + $0xd] ss:$0 sm:$0xff]
    %2435 = vrot.lane.b32.xlu0 %v2431, 48
    %v2436 = vpop.permute.xlu0 %2435
    %2437 = vrot.lane.b32.xlu0 %v2432, 48
    %v2438 = vpop.permute.xlu0 %2437
    %v2439 = vsel %vm2378, %v2436, %v2438
    %v2441 = vmax.f32 %v2431, %v2439
    %v2442 = vmax.f32 %v2430, %v2441
    %2443 = vst.msk [vmem:[#allocation7 + $0x2] sm:$0x1] %vm2394, %v2442
    %v2444 = vld [vmem:[#allocation6 + $0x6] ss:$0 sm:$0xff]
    %v2445 = vld [vmem:[#allocation6 + $0xe] ss:$0 sm:$0xff]
    %2448 = vrot.lane.b32.xlu0 %v2444, 48
    %v2449 = vpop.permute.xlu0 %2448
    %2450 = vrot.lane.b32.xlu0 %v2445, 48
    %v2451 = vpop.permute.xlu0 %2450
    %v2452 = vsel %vm2378, %v2449, %v2451
    %v2454 = vmax.f32 %v2444, %v2452
    %v2455 = vld [vmem:[#allocation6 + $0x7] ss:$0 sm:$0xff]
    %v2456 = vld [vmem:[#allocation6 + $0xf] ss:$0 sm:$0xff]
    %2459 = vrot.lane.b32.xlu0 %v2455, 48
    %v2460 = vpop.permute.xlu0 %2459
    %2461 = vrot.lane.b32.xlu0 %v2456, 48
    %v2462 = vpop.permute.xlu0 %2461
    %v2463 = vsel %vm2378, %v2460, %v2462
    %v2465 = vmax.f32 %v2455, %v2463
    %v2466 = vmax.f32 %v2454, %v2465
    %2467 = vst.msk [vmem:[#allocation7 + $0x3] sm:$0x1] %vm2394, %v2466
    %v2468 = vld [vmem:[#allocation6 + $0x10] ss:$0 sm:$0xff]
    %v2469 = vld [vmem:[#allocation6 + $0x18] ss:$0 sm:$0xff]
    %2472 = vrot.lane.b32.xlu0 %v2468, 48
    %v2473 = vpop.permute.xlu0 %2472
    %2474 = vrot.lane.b32.xlu0 %v2469, 48
    %v2475 = vpop.permute.xlu0 %2474
    %v2476 = vsel %vm2378, %v2473, %v2475
    %v2478 = vmax.f32 %v2468, %v2476
    %v2479 = vld [vmem:[#allocation6 + $0x11] ss:$0 sm:$0xff]
    %v2480 = vld [vmem:[#allocation6 + $0x19] ss:$0 sm:$0xff]
    %2483 = vrot.lane.b32.xlu0 %v2479, 48
    %v2484 = vpop.permute.xlu0 %2483
    %2485 = vrot.lane.b32.xlu0 %v2480, 48
    %v2486 = vpop.permute.xlu0 %2485
    %v2487 = vsel %vm2378, %v2484, %v2486
    %v2489 = vmax.f32 %v2479, %v2487
    %v2490 = vmax.f32 %v2478, %v2489
    %2491 = vst.msk [vmem:[#allocation7 + $0x4] sm:$0x1] %vm2394, %v2490
    %v2492 = vld [vmem:[#allocation6 + $0x12] ss:$0 sm:$0xff]
    %v2493 = vld [vmem:[#allocation6 + $0x1a] ss:$0 sm:$0xff]
    %2496 = vrot.lane.b32.xlu0 %v2492, 48
    %v2497 = vpop.permute.xlu0 %2496
    %2498 = vrot.lane.b32.xlu0 %v2493, 48
    %v2499 = vpop.permute.xlu0 %2498
    %v2500 = vsel %vm2378, %v2497, %v2499
    %v2502 = vmax.f32 %v2492, %v2500
    %v2503 = vld [vmem:[#allocation6 + $0x13] ss:$0 sm:$0xff]
    %v2504 = vld [vmem:[#allocation6 + $0x1b] ss:$0 sm:$0xff]
    %2507 = vrot.lane.b32.xlu0 %v2503, 48
    %v2508 = vpop.permute.xlu0 %2507
    %2509 = vrot.lane.b32.xlu0 %v2504, 48
    %v2510 = vpop.permute.xlu0 %2509
    %v2511 = vsel %vm2378, %v2508, %v2510
    %v2513 = vmax.f32 %v2503, %v2511
    %v2514 = vmax.f32 %v2502, %v2513
    %2515 = vst.msk [vmem:[#allocation7 + $0x5] sm:$0x1] %vm2394, %v2514
    %v2516 = vld [vmem:[#allocation6 + $0x14] ss:$0 sm:$0xff]
    %v2517 = vld [vmem:[#allocation6 + $0x1c] ss:$0 sm:$0xff]
    %2520 = vrot.lane.b32.xlu0 %v2516, 48
    %v2521 = vpop.permute.xlu0 %2520
    %2522 = vrot.lane.b32.xlu0 %v2517, 48
    %v2523 = vpop.permute.xlu0 %2522
    %v2524 = vsel %vm2378, %v2521, %v2523
    %v2526 = vmax.f32 %v2516, %v2524
    %v2527 = vld [vmem:[#allocation6 + $0x15] ss:$0 sm:$0xff]
    %v2528 = vld [vmem:[#allocation6 + $0x1d] ss:$0 sm:$0xff]
    %2531 = vrot.lane.b32.xlu0 %v2527, 48
    %v2532 = vpop.permute.xlu0 %2531
    %2533 = vrot.lane.b32.xlu0 %v2528, 48
    %v2534 = vpop.permute.xlu0 %2533
    %v2535 = vsel %vm2378, %v2532, %v2534
    %v2537 = vmax.f32 %v2527, %v2535
    %v2538 = vmax.f32 %v2526, %v2537
    %2539 = vst.msk [vmem:[#allocation7 + $0x6] sm:$0x1] %vm2394, %v2538
    %v2540 = vld [vmem:[#allocation6 + $0x16] ss:$0 sm:$0xff]
    %v2541 = vld [vmem:[#allocation6 + $0x1e] ss:$0 sm:$0xff]
    %2544 = vrot.lane.b32.xlu0 %v2540, 48
    %v2545 = vpop.permute.xlu0 %2544
    %2546 = vrot.lane.b32.xlu0 %v2541, 48
    %v2547 = vpop.permute.xlu0 %2546
    %v2548 = vsel %vm2378, %v2545, %v2547
    %v2550 = vmax.f32 %v2540, %v2548
    %v2551 = vld [vmem:[#allocation6 + $0x17] ss:$0 sm:$0xff]
    %v2552 = vld [vmem:[#allocation6 + $0x1f] ss:$0 sm:$0xff]
    %2555 = vrot.lane.b32.xlu0 %v2551, 48
    %v2556 = vpop.permute.xlu0 %2555
    %2557 = vrot.lane.b32.xlu0 %v2552, 48
    %v2558 = vpop.permute.xlu0 %2557
    %v2559 = vsel %vm2378, %v2556, %v2558
    %v2561 = vmax.f32 %v2551, %v2559
    %v2562 = vmax.f32 %v2550, %v2561
    %2563 = vst.msk [vmem:[#allocation7 + $0x7] sm:$0x1] %vm2394, %v2562
    %v2564 = vld [vmem:[#allocation6 + $0x20] ss:$0 sm:$0xff]
    %v2565 = vld [vmem:[#allocation6 + $0x28] ss:$0 sm:$0xff]
    %2568 = vrot.lane.b32.xlu0 %v2564, 48
    %v2569 = vpop.permute.xlu0 %2568
    %2570 = vrot.lane.b32.xlu0 %v2565, 48
    %v2571 = vpop.permute.xlu0 %2570
    %v2572 = vsel %vm2378, %v2569, %v2571
    %v2574 = vmax.f32 %v2564, %v2572
    %v2575 = vld [vmem:[#allocation6 + $0x21] ss:$0 sm:$0xff]
    %v2576 = vld [vmem:[#allocation6 + $0x29] ss:$0 sm:$0xff]
    %2579 = vrot.lane.b32.xlu0 %v2575, 48
    %v2580 = vpop.permute.xlu0 %2579
    %2581 = vrot.lane.b32.xlu0 %v2576, 48
    %v2582 = vpop.permute.xlu0 %2581
    %v2583 = vsel %vm2378, %v2580, %v2582
    %v2585 = vmax.f32 %v2575, %v2583
    %v2586 = vmax.f32 %v2574, %v2585
    %2587 = vst.msk [vmem:[#allocation7 + $0x8] sm:$0x1] %vm2394, %v2586
    %v2588 = vld [vmem:[#allocation6 + $0x22] ss:$0 sm:$0xff]
    %v2589 = vld [vmem:[#allocation6 + $0x2a] ss:$0 sm:$0xff]
    %2592 = vrot.lane.b32.xlu0 %v2588, 48
    %v2593 = vpop.permute.xlu0 %2592
    %2594 = vrot.lane.b32.xlu0 %v2589, 48
    %v2595 = vpop.permute.xlu0 %2594
    %v2596 = vsel %vm2378, %v2593, %v2595
    %v2598 = vmax.f32 %v2588, %v2596
    %v2599 = vld [vmem:[#allocation6 + $0x23] ss:$0 sm:$0xff]
    %v2600 = vld [vmem:[#allocation6 + $0x2b] ss:$0 sm:$0xff]
    %2603 = vrot.lane.b32.xlu0 %v2599, 48
    %v2604 = vpop.permute.xlu0 %2603
    %2605 = vrot.lane.b32.xlu0 %v2600, 48
    %v2606 = vpop.permute.xlu0 %2605
    %v2607 = vsel %vm2378, %v2604, %v2606
    %v2609 = vmax.f32 %v2599, %v2607
    %v2610 = vmax.f32 %v2598, %v2609
    %2611 = vst.msk [vmem:[#allocation7 + $0x9] sm:$0x1] %vm2394, %v2610
    %v2612 = vld [vmem:[#allocation7] sm:$0x1]
    %2613 = vst.msk [vmem:[#allocation8] sm:$0x1] %vm2394, %v2612
    %v2614 = vld [vmem:[#allocation7 + $0x1] sm:$0x1]
    %v2617 = vunpack.c.l.s4 1983009808
    %v2618 = vunpack.c.0.s8 %v2617
    %v2619 = vlaneseq
    %v2620 = vshrl.u32 %v2619, 7
    %v2621 = vsub.s32 %v2618, %v2620
    %v2622 = vrot.slane %v2614, %v2621
    %2623 = vrot.lane.b32.xlu0 %v2622, 80
    %v2624 = vpop.permute.xlu0 %2623
    %v2625 = vrot.slane %v2624, 6
    %v2626 = vsel %vm1929, %v2625, %v2624
    %vm2628 = vcmask 1041024
    %vm2629 = vcmask 256002
    %vm2630 = vmor %vm2629, %vm2628
    %2631 = vst.msk [vmem:[#allocation8] sm:$0x5] %vm2630, %v2626
    %v2632 = vld [vmem:[#allocation7 + $0x2] sm:$0x1]
    %v2635 = vunpack.c.l.s4 1983009808
    %v2636 = vunpack.c.0.s8 %v2635
    %v2637 = vlaneseq
    %v2638 = vshrl.u32 %v2637, 7
    %v2639 = vsub.s32 %v2636, %v2638
    %v2640 = vrot.slane %v2632, %v2639
    %2641 = vrot.lane.b32.xlu0 %v2640, 32
    %v2642 = vpop.permute.xlu0 %2641
    %vm2644 = vcmask 909568
    %2645 = vst.msk [vmem:[#allocation8 + $0x2] sm:$0x1] %vm2644, %v2642
    %v2646 = vld [vmem:[#allocation7 + $0x3] sm:$0x1]
    %v2649 = vunpack.c.l.s4 1983009808
    %v2650 = vunpack.c.0.s8 %v2649
    %v2651 = vlaneseq
    %v2652 = vshrl.u32 %v2651, 7
    %v2653 = vsub.s32 %v2650, %v2652
    %v2654 = vrot.slane %v2646, %v2653
    %2655 = vrot.lane.b32.xlu0 %v2654, 112
    %v2656 = vpop.permute.xlu0 %2655
    %v2657 = vrot.slane %v2656, 6
    %vm2658 = vcmask 916480
    %v2659 = vsel %vm2658, %v2657, %v2656
    %vm2661 = vcmask 1041280
    %vm2662 = vcmask 518146
    %vm2663 = vmor %vm2662, %vm2661
    %2664 = vst.msk [vmem:[#allocation8 + $0x2] sm:$0x5] %vm2663, %v2659
    %v2665 = vld [vmem:[#allocation7 + $0x4] sm:$0x1]
    %v2668 = vunpack.c.l.s4 1983009808
    %v2669 = vunpack.c.0.s8 %v2668
    %v2670 = vlaneseq
    %v2671 = vshrl.u32 %v2670, 7
    %v2672 = vsub.s32 %v2669, %v2671
    %v2673 = vrot.slane %v2665, %v2672
    %2674 = vrot.lane.b32.xlu0 %v2673, 64
    %v2675 = vpop.permute.xlu0 %2674
    %v2676 = vrot.slane %v2675, 6
    %vm2677 = vcmask 523264
    %v2678 = vsel %vm2677, %v2676, %v2675
    %vm2680 = vcmask 1040896
    %vm2681 = vcmask 124930
    %vm2682 = vmor %vm2681, %vm2680
    %2683 = vst.msk [vmem:[#allocation8 + $0x4] sm:$0x5] %vm2682, %v2678
    %v2684 = vld [vmem:[#allocation7 + $0x5] sm:$0x1]
    %2685 = vst.msk [vmem:[#allocation8 + $0x1] sm:$0x1] %vm2394, %v2684
    %v2686 = vld [vmem:[#allocation7 + $0x6] sm:$0x1]
    %v2689 = vunpack.c.l.s4 1983009808
    %v2690 = vunpack.c.0.s8 %v2689
    %v2691 = vlaneseq
    %v2692 = vshrl.u32 %v2691, 7
    %v2693 = vsub.s32 %v2690, %v2692
    %v2694 = vrot.slane %v2686, %v2693
    %2695 = vrot.lane.b32.xlu0 %v2694, 80
    %v2696 = vpop.permute.xlu0 %2695
    %v2697 = vrot.slane %v2696, 6
    %v2698 = vsel %vm1929, %v2697, %v2696
    %2700 = vst.msk [vmem:[#allocation8 + $0x1] sm:$0x5] %vm2630, %v2698
    %v2701 = vld [vmem:[#allocation7 + $0x7] sm:$0x1]
    %v2704 = vunpack.c.l.s4 1983009808
    %v2705 = vunpack.c.0.s8 %v2704
    %v2706 = vlaneseq
    %v2707 = vshrl.u32 %v2706, 7
    %v2708 = vsub.s32 %v2705, %v2707
    %v2709 = vrot.slane %v2701, %v2708
    %2710 = vrot.lane.b32.xlu0 %v2709, 32
    %v2711 = vpop.permute.xlu0 %2710
    %2713 = vst.msk [vmem:[#allocation8 + $0x3] sm:$0x1] %vm2644, %v2711
    %v2714 = vld [vmem:[#allocation7 + $0x8] sm:$0x1]
    %v2717 = vunpack.c.l.s4 1983009808
    %v2718 = vunpack.c.0.s8 %v2717
    %v2719 = vlaneseq
    %v2720 = vshrl.u32 %v2719, 7
    %v2721 = vsub.s32 %v2718, %v2720
    %v2722 = vrot.slane %v2714, %v2721
    %2723 = vrot.lane.b32.xlu0 %v2722, 112
    %v2724 = vpop.permute.xlu0 %2723
    %v2725 = vrot.slane %v2724, 6
    %v2726 = vsel %vm2658, %v2725, %v2724
    %2728 = vst.msk [vmem:[#allocation8 + $0x3] sm:$0x5] %vm2663, %v2726
    %v2729 = vld [vmem:[#allocation7 + $0x9] sm:$0x1]
    %v2732 = vunpack.c.l.s4 1983009808
    %v2733 = vunpack.c.0.s8 %v2732
    %v2734 = vlaneseq
    %v2735 = vshrl.u32 %v2734, 7
    %v2736 = vsub.s32 %v2733, %v2735
    %v2737 = vrot.slane %v2729, %v2736
    %2738 = vrot.lane.b32.xlu0 %v2737, 64
    %v2739 = vpop.permute.xlu0 %2738
    %v2740 = vrot.slane %v2739, 6
    %v2741 = vsel %vm2677, %v2740, %v2739
    %2743 = vst.msk [vmem:[#allocation8 + $0x5] sm:$0x5] %vm2682, %v2741
    %v2744 = vld [vmem:[#allocation8] sm:$0xff]
    %v2745 = vld [vmem:[%s5] sm:$0xff]
    %v2746 = vld [vmem:[%s5 + $0x8] sm:$0xff]
    %v2747 = vld [vmem:[%s5 + $0x10] sm:$0xff]
    %v2748 = vld [vmem:[%s5 + $0x18] sm:$0xff]
    %v2749 = vld [vmem:[%s5 + $0x20] sm:$0xff]
    %v2750 = vld [vmem:[%s5 + $0x28] sm:$0xff]
    %v2751 = vld [vmem:[%s5 + $0x30] sm:$0xff]
    %v2752 = vld [vmem:[%s5 + $0x38] sm:$0xff]
    %v2753 = vld [vmem:[%s5 + $0x40] sm:$0xff]
    %v2754 = vld [vmem:[%s5 + $0x48] sm:$0xff]
    %v2755 = vld [vmem:[%s5 + $0x50] sm:$0xff]
    %v2756 = vld [vmem:[%s5 + $0x58] sm:$0xff]
    %v2757 = vld [vmem:[%s5 + $0x60] sm:$0xff]
    %v2758 = vld [vmem:[%s5 + $0x68] sm:$0xff]
    %v2759 = vld [vmem:[%s5 + $0x70] sm:$0xff]
    %v2760 = vld [vmem:[%s5 + $0x78] sm:$0xff]
    %v2761 = vld [vmem:[%s5 + $0x80] sm:$0xff]
    %v2762 = vld [vmem:[%s5 + $0x88] sm:$0xff]
    %v2763 = vld [vmem:[%s5 + $0x90] sm:$0xff]
    %v2764 = vld [vmem:[%s5 + $0x98] sm:$0xff]
    %v2765 = vld [vmem:[%s5 + $0xa0] sm:$0xff]
    %v2766 = vld [vmem:[%s5 + $0xa8] sm:$0xff]
    %v2767 = vld [vmem:[%s5 + $0xb0] sm:$0xff]
    %v2768 = vld [vmem:[%s5 + $0xb8] sm:$0xff]
    %v2769 = vld [vmem:[%s5 + $0xc0] sm:$0xff]
    %v2770 = vld [vmem:[%s5 + $0xc8] sm:$0xff]
    %v2771 = vld [vmem:[%s5 + $0xd0] sm:$0xff]
    %v2772 = vld [vmem:[%s5 + $0xd8] sm:$0xff]
    %v2773 = vld [vmem:[%s5 + $0xe0] sm:$0xff]
    %v2774 = vld [vmem:[%s5 + $0xe8] sm:$0xff]
    %v2775 = vld [vmem:[%s5 + $0xf0] sm:$0xff]
    %v2776 = vld [vmem:[%s5 + $0xf8] sm:$0xff]
    %v2777 = vld [vmem:[%s5 + $0x100] sm:$0xff]
    %v2778 = vld [vmem:[%s5 + $0x108] sm:$0xff]
    %v2779 = vld [vmem:[%s5 + $0x110] sm:$0xff]
    %v2780 = vld [vmem:[%s5 + $0x118] sm:$0xff]
    %v2781 = vld [vmem:[%s5 + $0x120] sm:$0xff]
    %v2782 = vld [vmem:[%s5 + $0x128] sm:$0xff]
    %v2783 = vld [vmem:[%s5 + $0x130] sm:$0xff]
    %v2784 = vld [vmem:[%s5 + $0x138] sm:$0xff]
    %v2785 = vld [vmem:[%s5 + $0x140] sm:$0xff]
    %v2786 = vld [vmem:[%s5 + $0x148] sm:$0xff]
    %v2787 = vld [vmem:[%s5 + $0x150] sm:$0xff]
    %v2788 = vld [vmem:[%s5 + $0x158] sm:$0xff]
    %v2789 = vld [vmem:[%s5 + $0x160] sm:$0xff]
    %v2790 = vld [vmem:[%s5 + $0x168] sm:$0xff]
    %v2791 = vld [vmem:[%s5 + $0x170] sm:$0xff]
    %v2792 = vld [vmem:[%s5 + $0x178] sm:$0xff]
    %v2793 = vld [vmem:[%s5 + $0x180] sm:$0xff]
    %v2794 = vld [vmem:[%s5 + $0x188] sm:$0xff]
    %v2795 = vld [vmem:[%s6] sm:$0x1]
    %v2797 = vlaneseq
    %v2798 = vshrl.u32 %v2797, 7
    %v2799 = vsub.s32 0, %v2798
    %v2800 = vrot.slane %v2795, %v2799
    %v2803 = vcombine.high %v2744, %v2744
    %v2805 = vunpack.c.l.s4 1983009808
    %v2806 = vunpack.c.0.s8 %v2805
    %v2807 = vlaneseq
    %v2808 = vshrl.u32 %v2807, 7
    %v2809 = vsub.s32 %v2806, %v2808
    %v2810 = vrot.slane %v2744, %v2809
    %v2812 = vunpack.c.l.s4 1983009808
    %v2813 = vunpack.c.0.s8 %v2812
    %v2814 = vlaneseq
    %v2815 = vshrl.u32 %v2814, 7
    %v2816 = vsub.s32 %v2813, %v2815
    %v2817 = vrot.slane %v2803, %v2816
    %v2818 = vcombine.high %v2810, %v2810
    %v2819 = vcombine.high %v2817, %v2817
    %vm2823 = vcmask 130048
    %v2824 = vsel %vm2823, %v2819, 0
    %2826 = vmatprep.subr.mxu0 0.0
    %2827 = vmatpush1.msra.mxu0 %v2745
    %2828 = vmatprep.subr.mxu0 0.0
    %2829 = vmatpush1.msra.mxu0 %v2746
    %2830 = vmatprep.subr.mxu0 0.0
    %2831 = vmatpush1.msra.mxu0 %v2747
    %2832 = vmatprep.subr.mxu0 0.0
    %2833 = vmatpush1.msra.mxu0 %v2748
    %2834 = vmatprep.subr.mxu0 0.0
    %2835 = vmatpush1.msra.mxu0 %v2749
    %2836 = vmatprep.subr.mxu0 0.0
    %2837 = vmatpush1.msra.mxu0 %v2750
    %2838 = vmatprep.subr.mxu0 0.0
    %2839 = vmatpush1.msra.mxu0 %v2751
    %2840 = vmatprep.subr.mxu0 0.0
    %2841 = vmatpush1.msra.mxu0 %v2752
    %2842 = vmatprep.subr.mxu0 0.0
    %2843 = vmatpush1.msra.mxu0 %v2753
    %2844 = vmatprep.subr.mxu0 0.0
    %2845 = vmatpush1.msra.mxu0 %v2754
    %2846 = vmatprep.subr.mxu0 0.0
    %2847 = vmatpush1.msra.mxu0 %v2755
    %2848 = vmatprep.subr.mxu0 0.0
    %2849 = vmatpush1.msra.mxu0 %v2756
    %2850 = vmatprep.subr.mxu0 0.0
    %2851 = vmatpush1.msra.mxu0 %v2757
    %2852 = vmatprep.subr.mxu0 0.0
    %2853 = vmatpush1.msra.mxu0 %v2758
    %2854 = vmatprep.subr.mxu0 0.0
    %2855 = vmatpush1.msra.mxu0 %v2759
    %2856 = vmatprep.subr.mxu0 0.0
    %2857 = vmatpush1.msra.mxu0 %v2760
    %2858 = vmatprep.subr.mxu0 0.0
    %2859 = vmatpush1.msra.mxu0 %v2761
    %2860 = vmatprep.subr.mxu0 0.0
    %2861 = vmatpush1.msra.mxu0 %v2762
    %2862 = vmatprep.subr.mxu0 0.0
    %2863 = vmatpush1.msra.mxu0 %v2763
    %2864 = vmatprep.subr.mxu0 0.0
    %2865 = vmatpush1.msra.mxu0 %v2764
    %2866 = vmatprep.subr.mxu0 0.0
    %2867 = vmatpush1.msra.mxu0 %v2765
    %2868 = vmatprep.subr.mxu0 0.0
    %2869 = vmatpush1.msra.mxu0 %v2766
    %2870 = vmatprep.subr.mxu0 0.0
    %2871 = vmatpush1.msra.mxu0 %v2767
    %2872 = vmatprep.subr.mxu0 0.0
    %2873 = vmatpush1.msra.mxu0 %v2768
    %2874 = vmatprep.subr.mxu0 0.0
    %2875 = vmatpush1.msra.mxu0 %v2769
    %2876 = vmatprep.subr.mxu0 0.0
    %2877 = vmatpush1.msra.mxu0 %v2770
    %2878 = vmatprep.subr.mxu0 0.0
    %2879 = vmatpush1.msra.mxu0 %v2771
    %2880 = vmatprep.subr.mxu0 0.0
    %2881 = vmatpush1.msra.mxu0 %v2772
    %2882 = vmatprep.subr.mxu0 0.0
    %2883 = vmatpush1.msra.mxu0 %v2773
    %2884 = vmatprep.subr.mxu0 0.0
    %2885 = vmatpush1.msra.mxu0 %v2774
    %2886 = vmatprep.subr.mxu0 0.0
    %2887 = vmatpush1.msra.mxu0 %v2775
    %2888 = vmatprep.subr.mxu0 0.0
    %2889 = vmatpush1.msra.mxu0 %v2776
    %2890 = vmatprep.mubr.f32.mxu0 %v2818
    %2891 = vmatmul.mubr.f32.gmra.mrb[0].mxu0 %v2810
    %v2892 = vpop.f32.mrb[0].mxu0
    %v2893 = vadd.f32 %v2800, %v2892
    %v2894 = vpop.f32.mrb[0].mxu0
    %2895 = vdwg.mxu0
    %2896 = vmatprep.subr.mxu0 0.0
    %2897 = vmatpush1.msra.mxu0 %v2777
    %2898 = vmatprep.subr.mxu0 0.0
    %2899 = vmatpush1.msra.mxu0 %v2778
    %2900 = vmatprep.subr.mxu0 0.0
    %2901 = vmatpush1.msra.mxu0 %v2779
    %2902 = vmatprep.subr.mxu0 0.0
    %2903 = vmatpush1.msra.mxu0 %v2780
    %2904 = vmatprep.subr.mxu0 0.0
    %2905 = vmatpush1.msra.mxu0 %v2781
    %2906 = vmatprep.subr.mxu0 0.0
    %2907 = vmatpush1.msra.mxu0 %v2782
    %2908 = vmatprep.subr.mxu0 0.0
    %2909 = vmatpush1.msra.mxu0 %v2783
    %2910 = vmatprep.subr.mxu0 0.0
    %2911 = vmatpush1.msra.mxu0 %v2784
    %2912 = vmatprep.subr.mxu0 0.0
    %2913 = vmatpush1.msra.mxu0 %v2785
    %2914 = vmatprep.subr.mxu0 0.0
    %2915 = vmatpush1.msra.mxu0 %v2786
    %2916 = vmatprep.subr.mxu0 0.0
    %2917 = vmatpush1.msra.mxu0 %v2787
    %2918 = vmatprep.subr.mxu0 0.0
    %2919 = vmatpush1.msra.mxu0 %v2788
    %2920 = vmatprep.subr.mxu0 0.0
    %2921 = vmatpush1.msra.mxu0 %v2789
    %2922 = vmatprep.subr.mxu0 0.0
    %2923 = vmatpush1.msra.mxu0 %v2790
    %2924 = vmatprep.subr.mxu0 0.0
    %2925 = vmatpush1.msra.mxu0 %v2791
    %2926 = vmatprep.subr.mxu0 0.0
    %2927 = vmatpush1.msra.mxu0 %v2792
    %2928 = vmatprep.subr.mxu0 0.0
    %2929 = vmatpush1.msra.mxu0 %v2793
    %2930 = vmatprep.subr.mxu0 0.0
    %2931 = vmatpush1.msra.mxu0 %v2794
    %2932 = vmatprep.subr.mxu0 0.0
    %2933 = vmatpush1.msra.mxu0 0.0
    %2934 = vmatprep.subr.mxu0 0.0
    %2935 = vmatpush1.msra.mxu0 0.0
    %2936 = vmatprep.subr.mxu0 0.0
    %2937 = vmatpush1.msra.mxu0 0.0
    %2938 = vmatprep.subr.mxu0 0.0
    %2939 = vmatpush1.msra.mxu0 0.0
    %2940 = vmatprep.subr.mxu0 0.0
    %2941 = vmatpush1.msra.mxu0 0.0
    %2942 = vmatprep.subr.mxu0 0.0
    %2943 = vmatpush1.msra.mxu0 0.0
    %2944 = vmatprep.subr.mxu0 0.0
    %2945 = vmatpush1.msra.mxu0 0.0
    %2946 = vmatprep.subr.mxu0 0.0
    %2947 = vmatpush1.msra.mxu0 0.0
    %2948 = vmatprep.subr.mxu0 0.0
    %2949 = vmatpush1.msra.mxu0 0.0
    %2950 = vmatprep.subr.mxu0 0.0
    %2951 = vmatpush1.msra.mxu0 0.0
    %2952 = vmatprep.subr.mxu0 0.0
    %2953 = vmatpush1.msra.mxu0 0.0
    %2954 = vmatprep.subr.mxu0 0.0
    %2955 = vmatpush1.msra.mxu0 0.0
    %2956 = vmatprep.subr.mxu0 0.0
    %2957 = vmatpush1.msra.mxu0 0.0
    %2958 = vmatprep.subr.mxu0 0.0
    %2959 = vmatpush1.msra.mxu0 0.0
    %2960 = vmatprep.mubr.f32.mxu0 %v2824
    %2961 = vmatmul.mubr.f32.gmra.mrb[0].mxu0 %v2817
    %v2962 = vpop.f32.mrb[0].mxu0
    %v2963 = vadd.f32 %v2893, %v2962
    %v2964 = vpop.f32.mrb[0].mxu0
    %2965 = vdwg.mxu0
    %v2966 = vmax.f32 %v2963, 0.0
    %v2967 = vld [vmem:[%s7] sm:$0xff]
    %v2968 = vld [vmem:[%s7 + $0x8] sm:$0xff]
    %v2969 = vld [vmem:[%s7 + $0x10] sm:$0xff]
    %v2970 = vld [vmem:[%s7 + $0x18] sm:$0xff]
    %v2971 = vld [vmem:[%s7 + $0x20] sm:$0xff]
    %v2972 = vld [vmem:[%s7 + $0x28] sm:$0xff]
    %v2973 = vld [vmem:[%s7 + $0x30] sm:$0xff]
    %v2974 = vld [vmem:[%s7 + $0x38] sm:$0xff]
    %v2975 = vld [vmem:[%s7 + $0x40] sm:$0xff]
    %v2976 = vld [vmem:[%s7 + $0x48] sm:$0xff]
    %v2977 = vld [vmem:[%s7 + $0x50] sm:$0xff]
    %v2978 = vld [vmem:[%s7 + $0x58] sm:$0xff]
    %v2979 = vld [vmem:[%s7 + $0x60] sm:$0xff]
    %v2980 = vld [vmem:[%s7 + $0x68] sm:$0xff]
    %v2981 = vld [vmem:[%s7 + $0x70] sm:$0xff]
    %v2982 = vld [vmem:[%s7 + $0x78] sm:$0xff]
    %v2983 = vld [vmem:[%s8] sm:$0x1]
    %v2985 = vlaneseq
    %v2986 = vshrl.u32 %v2985, 7
    %v2987 = vsub.s32 0, %v2986
    %v2988 = vrot.slane %v2983, %v2987
    %2990 = vmatprep.subr.mxu0 0.0
    %2991 = vmatpush1.msra.mxu0 %v2967
    %2992 = vmatprep.subr.mxu0 0.0
    %2993 = vmatpush1.msra.mxu0 %v2968
    %2994 = vmatprep.subr.mxu0 0.0
    %2995 = vmatpush1.msra.mxu0 %v2969
    %2996 = vmatprep.subr.mxu0 0.0
    %2997 = vmatpush1.msra.mxu0 %v2970
    %2998 = vmatprep.subr.mxu0 0.0
    %2999 = vmatpush1.msra.mxu0 %v2971
    %3000 = vmatprep.subr.mxu0 0.0
    %3001 = vmatpush1.msra.mxu0 %v2972
    %3002 = vmatprep.subr.mxu0 0.0
    %3003 = vmatpush1.msra.mxu0 %v2973
    %3004 = vmatprep.subr.mxu0 0.0
    %3005 = vmatpush1.msra.mxu0 %v2974
    %3006 = vmatprep.subr.mxu0 0.0
    %3007 = vmatpush1.msra.mxu0 %v2975
    %3008 = vmatprep.subr.mxu0 0.0
    %3009 = vmatpush1.msra.mxu0 %v2976
    %3010 = vmatprep.subr.mxu0 0.0
    %3011 = vmatpush1.msra.mxu0 %v2977
    %3012 = vmatprep.subr.mxu0 0.0
    %3013 = vmatpush1.msra.mxu0 %v2978
    %3014 = vmatprep.subr.mxu0 0.0
    %3015 = vmatpush1.msra.mxu0 %v2979
    %3016 = vmatprep.subr.mxu0 0.0
    %3017 = vmatpush1.msra.mxu0 %v2980
    %3018 = vmatprep.subr.mxu0 0.0
    %3019 = vmatpush1.msra.mxu0 %v2981
    %3020 = vmatprep.subr.mxu0 0.0
    %3021 = vmatpush1.msra.mxu0 %v2982
    %3022 = vmatprep.subr.mxu0 0.0
    %3023 = vmatpush1.msra.mxu0 0.0
    %3024 = vmatprep.subr.mxu0 0.0
    %3025 = vmatpush1.msra.mxu0 0.0
    %3026 = vmatprep.subr.mxu0 0.0
    %3027 = vmatpush1.msra.mxu0 0.0
    %3028 = vmatprep.subr.mxu0 0.0
    %3029 = vmatpush1.msra.mxu0 0.0
    %3030 = vmatprep.subr.mxu0 0.0
    %3031 = vmatpush1.msra.mxu0 0.0
    %3032 = vmatprep.subr.mxu0 0.0
    %3033 = vmatpush1.msra.mxu0 0.0
    %3034 = vmatprep.subr.mxu0 0.0
    %3035 = vmatpush1.msra.mxu0 0.0
    %3036 = vmatprep.subr.mxu0 0.0
    %3037 = vmatpush1.msra.mxu0 0.0
    %3038 = vmatprep.subr.mxu0 0.0
    %3039 = vmatpush1.msra.mxu0 0.0
    %3040 = vmatprep.subr.mxu0 0.0
    %3041 = vmatpush1.msra.mxu0 0.0
    %3042 = vmatprep.subr.mxu0 0.0
    %3043 = vmatpush1.msra.mxu0 0.0
    %3044 = vmatprep.subr.mxu0 0.0
    %3045 = vmatpush1.msra.mxu0 0.0
    %3046 = vmatprep.subr.mxu0 0.0
    %3047 = vmatpush1.msra.mxu0 0.0
    %3048 = vmatprep.subr.mxu0 0.0
    %3049 = vmatpush1.msra.mxu0 0.0
    %3050 = vmatprep.subr.mxu0 0.0
    %3051 = vmatpush1.msra.mxu0 0.0
    %3052 = vmatprep.subr.mxu0 0.0
    %3053 = vmatpush1.msra.mxu0 0.0
    %3054 = vmatprep.mubr.f32.mxu0 0.0
    %3055 = vmatmul.mubr.f32.gmra.mrb[0].mxu0 %v2966
    %v3056 = vpop.f32.mrb[0].mxu0
    %v3057 = vadd.f32 %v2988, %v3056
    %v3058 = vpop.f32.mrb[0].mxu0
    %3059 = vdwg.mxu0
    %v3060 = vmax.f32 %v3057, 0.0
    %v3061 = vld [vmem:[%s9] sm:$0xff]
    %v3062 = vld [vmem:[%s9 + $0x8] sm:$0xff]
    %v3063 = vld [vmem:[%s9 + $0x10] sm:$0xff]
    %v3064 = vld [vmem:[%s9 + $0x18] sm:$0xff]
    %v3065 = vld [vmem:[%s9 + $0x20] sm:$0xff]
    %v3066 = vld [vmem:[%s9 + $0x28] sm:$0xff]
    %v3067 = vld [vmem:[%s9 + $0x30] sm:$0xff]
    %v3068 = vld [vmem:[%s9 + $0x38] sm:$0xff]
    %v3069 = vld [vmem:[%s9 + $0x40] sm:$0xff]
    %v3070 = vld [vmem:[%s9 + $0x48] sm:$0xff]
    %v3071 = vld [vmem:[%s9 + $0x50] sm:$0xff]
    %v3072 = vld [vmem:[%s9 + $0x58] sm:$0xff]
    %v3073 = vld [vmem:[%s9 + $0x60] sm:$0xff]
    %v3074 = vld [vmem:[%s9 + $0x68] sm:$0xff]
    %v3075 = vld [vmem:[%s9 + $0x70] sm:$0xff]
    %v3076 = vld [vmem:[%s9 + $0x78] sm:$0xff]
    %v3077 = vld [vmem:[%s10] sm:$0x1]
    %v3079 = vlaneseq
    %v3080 = vshrl.u32 %v3079, 7
    %v3081 = vsub.s32 0, %v3080
    %v3082 = vrot.slane %v3077, %v3081
    %3084 = vmatprep.subr.mxu0 0.0
    %3085 = vmatpush1.msra.mxu0 %v3061
    %3086 = vmatprep.subr.mxu0 0.0
    %3087 = vmatpush1.msra.mxu0 %v3062
    %3088 = vmatprep.subr.mxu0 0.0
    %3089 = vmatpush1.msra.mxu0 %v3063
    %3090 = vmatprep.subr.mxu0 0.0
    %3091 = vmatpush1.msra.mxu0 %v3064
    %3092 = vmatprep.subr.mxu0 0.0
    %3093 = vmatpush1.msra.mxu0 %v3065
    %3094 = vmatprep.subr.mxu0 0.0
    %3095 = vmatpush1.msra.mxu0 %v3066
    %3096 = vmatprep.subr.mxu0 0.0
    %3097 = vmatpush1.msra.mxu0 %v3067
    %3098 = vmatprep.subr.mxu0 0.0
    %3099 = vmatpush1.msra.mxu0 %v3068
    %3100 = vmatprep.subr.mxu0 0.0
    %3101 = vmatpush1.msra.mxu0 %v3069
    %3102 = vmatprep.subr.mxu0 0.0
    %3103 = vmatpush1.msra.mxu0 %v3070
    %3104 = vmatprep.subr.mxu0 0.0
    %3105 = vmatpush1.msra.mxu0 %v3071
    %3106 = vmatprep.subr.mxu0 0.0
    %3107 = vmatpush1.msra.mxu0 %v3072
    %3108 = vmatprep.subr.mxu0 0.0
    %3109 = vmatpush1.msra.mxu0 %v3073
    %3110 = vmatprep.subr.mxu0 0.0
    %3111 = vmatpush1.msra.mxu0 %v3074
    %3112 = vmatprep.subr.mxu0 0.0
    %3113 = vmatpush1.msra.mxu0 %v3075
    %3114 = vmatprep.subr.mxu0 0.0
    %3115 = vmatpush1.msra.mxu0 %v3076
    %3116 = vmatprep.subr.mxu0 0.0
    %3117 = vmatpush1.msra.mxu0 0.0
    %3118 = vmatprep.subr.mxu0 0.0
    %3119 = vmatpush1.msra.mxu0 0.0
    %3120 = vmatprep.subr.mxu0 0.0
    %3121 = vmatpush1.msra.mxu0 0.0
    %3122 = vmatprep.subr.mxu0 0.0
    %3123 = vmatpush1.msra.mxu0 0.0
    %3124 = vmatprep.subr.mxu0 0.0
    %3125 = vmatpush1.msra.mxu0 0.0
    %3126 = vmatprep.subr.mxu0 0.0
    %3127 = vmatpush1.msra.mxu0 0.0
    %3128 = vmatprep.subr.mxu0 0.0
    %3129 = vmatpush1.msra.mxu0 0.0
    %3130 = vmatprep.subr.mxu0 0.0
    %3131 = vmatpush1.msra.mxu0 0.0
    %3132 = vmatprep.subr.mxu0 0.0
    %3133 = vmatpush1.msra.mxu0 0.0
    %3134 = vmatprep.subr.mxu0 0.0
    %3135 = vmatpush1.msra.mxu0 0.0
    %3136 = vmatprep.subr.mxu0 0.0
    %3137 = vmatpush1.msra.mxu0 0.0
    %3138 = vmatprep.subr.mxu0 0.0
    %3139 = vmatpush1.msra.mxu0 0.0
    %3140 = vmatprep.subr.mxu0 0.0
    %3141 = vmatpush1.msra.mxu0 0.0
    %3142 = vmatprep.subr.mxu0 0.0
    %3143 = vmatpush1.msra.mxu0 0.0
    %3144 = vmatprep.subr.mxu0 0.0
    %3145 = vmatpush1.msra.mxu0 0.0
    %3146 = vmatprep.subr.mxu0 0.0
    %3147 = vmatpush1.msra.mxu0 0.0
    %3148 = vmatprep.mubr.f32.mxu0 0.0
    %3149 = vmatmul.mubr.f32.gmra.mrb[0].mxu0 %v3060
    %v3150 = vpop.f32.mrb[0].mxu0
    %v3151 = vadd.f32 %v3082, %v3150
    %v3152 = vpop.f32.mrb[0].mxu0
    %3153 = vdwg.mxu0
    %3154 = vst [vmem:[#allocation9] sm:$0x3] %v3151
    // Predicated region
    $region46: #{lenet_forward.1} parent=1 // pred_check
      _
    $region47: #{lenet_forward.1} parent=1 // pred_check_branch
      %3156 = sbr.rel (0) target = $region49
    $region48: #{lenet_forward.1} parent=1 // pred_region
      %s3158 = ssub.s32 32, 32
      %3159 = vsyncadd [#allocation10], %s3158
      %s3161 = sshll.u32 [#allocation9], 4
      %s3162 = int_to_ptr.vmem [resolvable:$true] %s3161
      %3164 = dma.vmem_to_hbm [thread:$0]  %s3162, 32, %s11, [#allocation10]
    $region49: #{lenet_forward.1} parent=1 // pred_fallthru
      _
    // Predicated region
    $region50: #{lenet_forward.1} parent=1 // pred_check
      _
    $region51: #{lenet_forward.1} parent=1 // pred_check_branch
      %3166 = sbr.rel (0) target = $region53
    $region52: #{lenet_forward.1} parent=1 // pred_region
      %3167 = dma.done [#allocation10], 32
    $region53: #{lenet_forward.1} parent=1 // pred_fallthru
      _
    %3168 = vsyncpa [#allocation10], 1

</llo_original>
